<compile_context>
chip_gen: v5e
topology: v5e:2x2
jax: 0.10.0
libtpu: 0.0.40
codegen_flags: <defaults>
</compile_context>

<pallas_src>
import jax
import jax.numpy as jnp
from jax.experimental import pallas as pl
from jax.experimental.pallas import tpu as pltpu

# ---------------------------------------------------------------------------
# Model hyper-parameters (consistent with the module's __init__)
# ---------------------------------------------------------------------------
NUM_CLASSES = 3
FEAT_C, FEAT_H, FEAT_W = 1792, 7, 7          # LayerNorm([1792, 7, 7])
HW = FEAT_H * FEAT_W                         # 49
RADIOMIC_DIMS = [16, 64, 128]                # radiomic_dims
OUT_CHANNELS = [256, 64]                     # out_channels for classification head
LEAKY_SLOPE = 0.01                           # nn.LeakyReLU default
LN_EPS = 1e-5


def _leaky_relu(x):
    return jnp.where(x > 0, x, LEAKY_SLOPE * x)


# ---------------------------------------------------------------------------
# Single fused kernel: LN+pool+concat+head1 (folded) -> radiomic MLP -> head -> logits
# ---------------------------------------------------------------------------
def fused_kernel(x_ref, rad_ref,
                 ln_ws_ref, gmw_ref,
                 w_r1_ref, b_r1_ref, w_r2_ref, b_r2_ref,
                 w_h1f_ref, w_h1r_ref, b_h1_ref,
                 w_h2_ref, b_h2_ref,
                 w_f_ref, b_f_ref,
                 o_ref):
    # ---- per-sample LayerNorm statistics over (C,H,W), single pass over x ----
    x = x_ref[...].astype(jnp.float32)                           # (Bt, HW, C)
    inv_n = 1.0 / float(HW * FEAT_C)
    row_sum = jnp.sum(x, axis=1)                                 # (Bt, C)  sublane reduce
    row_sq = jnp.sum(x * x, axis=1)                              # (Bt, C)
    mu = jnp.sum(row_sum, axis=1, keepdims=True) * inv_n         # (Bt, 1)
    ex2 = jnp.sum(row_sq, axis=1, keepdims=True) * inv_n         # (Bt, 1)
    var = jnp.maximum(ex2 - mu * mu, 0.0)                        # biased var (PyTorch LN)
    r = jax.lax.rsqrt(var + LN_EPS)                              # (Bt, 1)

    # gamma-weighted HW mean; 1/HW is pre-folded into ln_ws so this is a plain sum
    xg = jnp.sum(x * ln_ws_ref[...], axis=1)                     # (Bt, C) == mean_hw(x*gamma)

    # ---- RadiomicMLP: (Linear + LeakyReLU) x 2  (dropout -> identity, eval) ----
    h = rad_ref[...].astype(jnp.float32)                         # (Bt, 16)
    h = _leaky_relu(jnp.dot(h, w_r1_ref[...], preferred_element_type=jnp.float32)
                    + b_r1_ref[...])                             # (Bt, 64)
    h = _leaky_relu(jnp.dot(h, w_r2_ref[...], preferred_element_type=jnp.float32)
                    + b_r2_ref[...])                             # (Bt, 128)

    # ---- head layer 1 with LN-scale, avg-pool and concat folded in ----
    y = (r * (jnp.dot(xg, w_h1f_ref[...], preferred_element_type=jnp.float32)
              - mu * gmw_ref[...])
         + jnp.dot(h, w_h1r_ref[...], preferred_element_type=jnp.float32)
         + b_h1_ref[...])                                        # (Bt, 256)
    y = jnp.maximum(y, 0.0)                                      # ReLU; dropout -> identity
    y = jnp.dot(y, w_h2_ref[...], preferred_element_type=jnp.float32) + b_h2_ref[...]
    y = jnp.maximum(y, 0.0)
    out = jnp.dot(y, w_f_ref[...], preferred_element_type=jnp.float32) + b_f_ref[...]
    o_ref[...] = out.astype(o_ref.dtype)                         # (Bt, NUM_CLASSES)


def forward(params, feat_nhwc, data_radiomic, *, batch_tile=16):
    """feat_nhwc: [B, 7, 7, 1792] backbone feature map (channels-last);
       data_radiomic: [B, radiomic_dims[0]].  Returns logits [B, NUM_CLASSES]."""
    B = feat_nhwc.shape[0]
    x = feat_nhwc.reshape(B, HW, FEAT_C)                         # contiguous reshape, free
    rad = data_radiomic.astype(jnp.float32)

    bt = min(batch_tile, B)
    grid = (pl.cdiv(B, bt),)

    def resident(a, b):
        # full-array weight block, constant index_map -> fetched once, VMEM-resident
        return pl.BlockSpec((a, b), lambda i: (0, 0))

    in_specs = [
        pl.BlockSpec((bt, HW, FEAT_C), lambda i: (i, 0, 0)),     # feature map tile
        pl.BlockSpec((bt, RADIOMIC_DIMS[0]), lambda i: (i, 0)),  # radiomic tile
        resident(HW, FEAT_C),                                    # gamma / HW   [HW, C]
        resident(1, OUT_CHANNELS[0]),                            # mean_hw(gamma) @ Wf
        resident(RADIOMIC_DIMS[0], RADIOMIC_DIMS[1]),            # radiomic W1
        resident(1, RADIOMIC_DIMS[1]),
        resident(RADIOMIC_DIMS[1], RADIOMIC_DIMS[2]),            # radiomic W2
        resident(1, RADIOMIC_DIMS[2]),
        resident(FEAT_C, OUT_CHANNELS[0]),                       # head1 W (feature part)
        resident(RADIOMIC_DIMS[2], OUT_CHANNELS[0]),             # head1 W (radiomic part)
        resident(1, OUT_CHANNELS[0]),                            # folded head1 bias
        resident(OUT_CHANNELS[0], OUT_CHANNELS[1]),              # head2 W
        resident(1, OUT_CHANNELS[1]),
        resident(OUT_CHANNELS[1], NUM_CLASSES),                  # final W
        resident(1, NUM_CLASSES),
    ]
    return pl.pallas_call(
        fused_kernel,
        out_shape=jax.ShapeDtypeStruct((B, NUM_CLASSES), jnp.float32),
        grid=grid,
        in_specs=in_specs,
        out_specs=pl.BlockSpec((bt, NUM_CLASSES), lambda i: (i, 0)),
        compiler_params=pltpu.CompilerParams(
            dimension_semantics=("parallel",),
            vmem_limit_bytes=48 * 1024 * 1024),
    )(x, rad,
      params["ln_w_scaled"], params["gamma_mean_w"],
      params["rad_w1"], params["rad_b1"], params["rad_w2"], params["rad_b2"],
      params["head1_w_feat"], params["head1_w_rad"], params["head1_b_fold"],
      params["head2_w"], params["head2_b"],
      params["final_w"], params["final_b"])


# ---------------------------------------------------------------------------
# Parameter construction (deterministic, synthetic) + pure-JAX reference params
# ---------------------------------------------------------------------------
def init_params(key):
    k = iter(jax.random.split(key, 8))

    # LayerNorm([1792, 7, 7]) — PyTorch layout [C, H, W]
    ln_w_chw = 1.0 + 0.1 * jax.random.normal(next(k), (FEAT_C, FEAT_H, FEAT_W), jnp.float32)
    ln_b_chw = 0.1 * jax.random.normal(next(k), (FEAT_C, FEAT_H, FEAT_W), jnp.float32)
    ln_w = jnp.transpose(ln_w_chw, (1, 2, 0)).reshape(HW, FEAT_C)   # kernel layout [HW, C]
    ln_b = jnp.transpose(ln_b_chw, (1, 2, 0)).reshape(HW, FEAT_C)

    def make_linear(kk, din, dout):
        kw, kb = jax.random.split(kk)
        w = 0.02 * jax.random.normal(kw, (dout, din), jnp.float32)  # PyTorch [out, in]
        b = 0.02 * jax.random.normal(kb, (dout,), jnp.float32)
        return w.T, b.reshape(1, dout)                              # store [in, out], [1, out]

    rad_w1, rad_b1 = make_linear(next(k), RADIOMIC_DIMS[0], RADIOMIC_DIMS[1])
    rad_w2, rad_b2 = make_linear(next(k), RADIOMIC_DIMS[1], RADIOMIC_DIMS[2])

    cl_in = FEAT_C + RADIOMIC_DIMS[-1]                              # 1792 + 128 = 1920
    head1_w, head1_b = make_linear(next(k), cl_in, OUT_CHANNELS[0])
    head2_w, head2_b = make_linear(next(k), OUT_CHANNELS[0], OUT_CHANNELS[1])
    final_w, final_b = make_linear(next(k), OUT_CHANNELS[1], NUM_CLASSES)

    head1_w_feat = head1_w[:FEAT_C]                                 # concat -> split weight
    head1_w_rad = head1_w[FEAT_C:]

    ln_w_mean = jnp.mean(ln_w, axis=0, keepdims=True)               # (1, C)
    ln_b_mean = jnp.mean(ln_b, axis=0, keepdims=True)               # (1, C)
    # Fold pooled-LN affine terms through head layer 1 (precomputed, high precision):
    gamma_mean_w = jnp.dot(ln_w_mean, head1_w_feat, precision="highest")    # (1, 256)
    head1_b_fold = head1_b + jnp.dot(ln_b_mean, head1_w_feat, precision="highest")

    params = dict(
        ln_w_scaled=ln_w / float(HW),        # gamma / HW so the kernel uses a plain sum
        gamma_mean_w=gamma_mean_w,
        rad_w1=rad_w1, rad_b1=rad_b1, rad_w2=rad_w2, rad_b2=rad_b2,
        head1_w_feat=head1_w_feat,
        head1_w_rad=head1_w_rad,
        head1_b_fold=head1_b_fold,
        head2_w=head2_w, head2_b=head2_b,
        final_w=final_w, final_b=final_b,
    )
    ref = dict(
        ln_w_chw=ln_w_chw, ln_b_chw=ln_b_chw,
        radiomic=[(rad_w1, rad_b1), (rad_w2, rad_b2)],
        head=[(head1_w, head1_b), (head2_w, head2_b)],
        final=(final_w, final_b),
    )
    return params, ref


# ---------------------------------------------------------------------------
# Pure-JAX reference mirroring the PyTorch forward (eval mode), from NCHW features
# ---------------------------------------------------------------------------
def reference_forward(ref, feat_nchw, data_radiomic):
    B = feat_nchw.shape[0]
    xf = feat_nchw.reshape(B, -1).astype(jnp.float32)
    mu = jnp.mean(xf, axis=1, keepdims=True)
    var = jnp.mean((xf - mu) ** 2, axis=1, keepdims=True)          # biased, as nn.LayerNorm
    xhat = ((xf - mu) / jnp.sqrt(var + LN_EPS)).reshape(B, FEAT_C, FEAT_H, FEAT_W)
    y = xhat * ref["ln_w_chw"][None] + ref["ln_b_chw"][None]
    dl = jnp.mean(y, axis=(2, 3))                                  # AdaptiveAvgPool2d((1,1))
    h = data_radiomic.astype(jnp.float32)
    for w, b in ref["radiomic"]:
        h = jnp.dot(h, w, precision="highest") + b
        h = jnp.where(h > 0, h, LEAKY_SLOPE * h)
    z = jnp.concatenate([dl, h], axis=1)
    for w, b in ref["head"]:
        z = jnp.maximum(jnp.dot(z, w, precision="highest") + b, 0.0)
    wf, bf = ref["final"]
    return jnp.dot(z, wf, precision="highest") + bf


if __name__ == "__main__":
    key = jax.random.PRNGKey(0)
    k_param, k_img, k_rad = jax.random.split(key, 3)

    params, ref = init_params(k_param)

    B = 2
    # Backbone output (external pretrained model, not translated). PyTorch emits NCHW; a JAX
    # backbone emits channels-last natively, which is the kernel's interface, so the layout
    # conversion below is a one-time step at the backbone boundary, not part of forward().
    dl_feat_nchw = jax.random.normal(k_img, (B, FEAT_C, FEAT_H, FEAT_W), jnp.float32)
    feat_nhwc = jnp.transpose(dl_feat_nchw, (0, 2, 3, 1))
    data_radiomic = jax.random.normal(k_rad, (B, RADIOMIC_DIMS[0]), jnp.float32)

    out = jax.block_until_ready(forward(params, feat_nhwc, data_radiomic))
    assert out.shape == (B, NUM_CLASSES), out.shape
    assert bool(jnp.all(jnp.isfinite(out)))

    expected = jax.block_until_ready(reference_forward(ref, dl_feat_nchw, data_radiomic))
    max_err = float(jnp.max(jnp.abs(out - expected)))
    assert jnp.allclose(out, expected, rtol=5e-3, atol=5e-3), max_err

    print("KERNEL_OK")
</pallas_src>

<mosaic_0001>
module attributes {stable_mosaic.version = 11 : i64} {
  func.func @fused_kernel(%arg0: i32, %arg1: memref<2x49x1792xf32, #tpu.memory_space<vmem>>, %arg2: memref<2x16xf32, #tpu.memory_space<vmem>>, %arg3: memref<49x1792xf32, #tpu.memory_space<vmem>>, %arg4: memref<1x256xf32, #tpu.memory_space<vmem>>, %arg5: memref<16x64xf32, #tpu.memory_space<vmem>>, %arg6: memref<1x64xf32, #tpu.memory_space<vmem>>, %arg7: memref<64x128xf32, #tpu.memory_space<vmem>>, %arg8: memref<1x128xf32, #tpu.memory_space<vmem>>, %arg9: memref<1792x256xf32, #tpu.memory_space<vmem>>, %arg10: memref<128x256xf32, #tpu.memory_space<vmem>>, %arg11: memref<1x256xf32, #tpu.memory_space<vmem>>, %arg12: memref<256x64xf32, #tpu.memory_space<vmem>>, %arg13: memref<1x64xf32, #tpu.memory_space<vmem>>, %arg14: memref<64x3xf32, #tpu.memory_space<vmem>>, %arg15: memref<1x3xf32, #tpu.memory_space<vmem>>, %arg16: memref<2x3xf32, #tpu.memory_space<vmem>>) attributes {dimension_semantics = [#tpu.dimension_semantics<parallel>], iteration_bounds = array<i64: 1>, scalar_prefetch = 0 : i64, scratch_operands = 0 : i64, tpu.core_type = #tpu.core_type<tc>, window_params = [{transform_indices = @transform_0, window_bounds = array<i64: 2, 49, 1792>}, {transform_indices = @transform_1, window_bounds = array<i64: 2, 16>}, {pipeline_mode = #tpu.pipeline_mode<synchronous>, transform_indices = @transform_2, window_bounds = array<i64: 49, 1792>}, {pipeline_mode = #tpu.pipeline_mode<synchronous>, transform_indices = @transform_3, window_bounds = array<i64: 1, 256>}, {pipeline_mode = #tpu.pipeline_mode<synchronous>, transform_indices = @transform_4, window_bounds = array<i64: 16, 64>}, {pipeline_mode = #tpu.pipeline_mode<synchronous>, transform_indices = @transform_5, window_bounds = array<i64: 1, 64>}, {pipeline_mode = #tpu.pipeline_mode<synchronous>, transform_indices = @transform_6, window_bounds = array<i64: 64, 128>}, {pipeline_mode = #tpu.pipeline_mode<synchronous>, transform_indices = @transform_7, window_bounds = array<i64: 1, 128>}, {pipeline_mode = #tpu.pipeline_mode<synchronous>, transform_indices = @transform_8, window_bounds = array<i64: 1792, 256>}, {pipeline_mode = #tpu.pipeline_mode<synchronous>, transform_indices = @transform_9, window_bounds = array<i64: 128, 256>}, {pipeline_mode = #tpu.pipeline_mode<synchronous>, transform_indices = @transform_10, window_bounds = array<i64: 1, 256>}, {pipeline_mode = #tpu.pipeline_mode<synchronous>, transform_indices = @transform_11, window_bounds = array<i64: 256, 64>}, {pipeline_mode = #tpu.pipeline_mode<synchronous>, transform_indices = @transform_12, window_bounds = array<i64: 1, 64>}, {pipeline_mode = #tpu.pipeline_mode<synchronous>, transform_indices = @transform_13, window_bounds = array<i64: 64, 3>}, {pipeline_mode = #tpu.pipeline_mode<synchronous>, transform_indices = @transform_14, window_bounds = array<i64: 1, 3>}, {transform_indices = @transform_15, window_bounds = array<i64: 2, 3>}]} {
    %c0 = arith.constant 0 : index
    %c0_0 = arith.constant 0 : index
    %c0_1 = arith.constant 0 : index
    %0 = vector.load %arg1[%c0, %c0_0, %c0_1] : memref<2x49x1792xf32, #tpu.memory_space<vmem>>, vector<2x49x1792xf32>
    %cst = arith.constant dense<0.000000e+00> : vector<2x1792xf32>
    %1 = vector.multi_reduction <add>, %0, %cst [1] : vector<2x49x1792xf32> to vector<2x1792xf32>
    %2 = arith.mulf %0, %0 : vector<2x49x1792xf32>
    %cst_2 = arith.constant dense<0.000000e+00> : vector<2x1792xf32>
    %3 = vector.multi_reduction <add>, %2, %cst_2 [1] : vector<2x49x1792xf32> to vector<2x1792xf32>
    %cst_3 = arith.constant dense<0.000000e+00> : vector<2xf32>
    %4 = vector.multi_reduction <add>, %1, %cst_3 [1] : vector<2x1792xf32> to vector<2xf32>
    %5 = vector.shape_cast %4 : vector<2xf32> to vector<2x1xf32>
    %cst_4 = arith.constant 1.13884844E-5 : f32
    %6 = vector.broadcast %cst_4 : f32 to vector<2x1xf32>
    %7 = arith.mulf %5, %6 : vector<2x1xf32>
    %cst_5 = arith.constant dense<0.000000e+00> : vector<2xf32>
    %8 = vector.multi_reduction <add>, %3, %cst_5 [1] : vector<2x1792xf32> to vector<2xf32>
    %9 = vector.shape_cast %8 : vector<2xf32> to vector<2x1xf32>
    %cst_6 = arith.constant 1.13884844E-5 : f32
    %10 = vector.broadcast %cst_6 : f32 to vector<2x1xf32>
    %11 = arith.mulf %9, %10 : vector<2x1xf32>
    %12 = arith.mulf %7, %7 : vector<2x1xf32>
    %13 = arith.subf %11, %12 : vector<2x1xf32>
    %cst_7 = arith.constant 0.000000e+00 : f32
    %14 = vector.broadcast %cst_7 : f32 to vector<2x1xf32>
    %15 = arith.maximumf %13, %14 : vector<2x1xf32>
    %cst_8 = arith.constant 9.99999974E-6 : f32
    %16 = vector.broadcast %cst_8 : f32 to vector<2x1xf32>
    %17 = arith.addf %15, %16 : vector<2x1xf32>
    %18 = math.rsqrt %17 : vector<2x1xf32>
    %c0_9 = arith.constant 0 : index
    %c0_10 = arith.constant 0 : index
    %19 = vector.load %arg3[%c0_9, %c0_10] : memref<49x1792xf32, #tpu.memory_space<vmem>>, vector<49x1792xf32>
    %20 = vector.shape_cast %19 : vector<49x1792xf32> to vector<1x49x1792xf32>
    %21 = vector.broadcast %20 : vector<1x49x1792xf32> to vector<2x49x1792xf32>
    %22 = arith.mulf %0, %21 : vector<2x49x1792xf32>
    %cst_11 = arith.constant dense<0.000000e+00> : vector<2x1792xf32>
    %23 = vector.multi_reduction <add>, %22, %cst_11 [1] : vector<2x49x1792xf32> to vector<2x1792xf32>
    %c0_12 = arith.constant 0 : index
    %c0_13 = arith.constant 0 : index
    %24 = vector.load %arg2[%c0_12, %c0_13] : memref<2x16xf32, #tpu.memory_space<vmem>>, vector<2x16xf32>
    %c0_14 = arith.constant 0 : index
    %c0_15 = arith.constant 0 : index
    %25 = vector.load %arg5[%c0_14, %c0_15] : memref<16x64xf32, #tpu.memory_space<vmem>>, vector<16x64xf32>
    %cst_16 = arith.constant dense<0.000000e+00> : vector<2x64xf32>
    %26 = tpu.matmul %24, %25, %cst_16 {dimension_numbers = #tpu.dot_dimension_numbers<[1], [0], [0], [1], [0, 0, 1, 1], [], []>} : vector<2x16xf32>, vector<16x64xf32>, vector<2x64xf32> -> vector<2x64xf32>
    %c0_17 = arith.constant 0 : index
    %c0_18 = arith.constant 0 : index
    %27 = vector.load %arg6[%c0_17, %c0_18] : memref<1x64xf32, #tpu.memory_space<vmem>>, vector<1x64xf32>
    %28 = vector.broadcast %27 : vector<1x64xf32> to vector<2x64xf32>
    %29 = arith.addf %26, %28 : vector<2x64xf32>
    %cst_19 = arith.constant 0.000000e+00 : f32
    %30 = vector.broadcast %cst_19 : f32 to vector<2x64xf32>
    %31 = arith.cmpf ogt, %29, %30 : vector<2x64xf32>
    %cst_20 = arith.constant 0.00999999977 : f32
    %32 = vector.broadcast %cst_20 : f32 to vector<2x64xf32>
    %33 = arith.mulf %32, %29 : vector<2x64xf32>
    %34 = arith.select %31, %29, %33 : vector<2x64xi1>, vector<2x64xf32>
    %c0_21 = arith.constant 0 : index
    %c0_22 = arith.constant 0 : index
    %35 = vector.load %arg7[%c0_21, %c0_22] : memref<64x128xf32, #tpu.memory_space<vmem>>, vector<64x128xf32>
    %cst_23 = arith.constant dense<0.000000e+00> : vector<2x128xf32>
    %36 = tpu.matmul %34, %35, %cst_23 {dimension_numbers = #tpu.dot_dimension_numbers<[1], [0], [0], [1], [0, 0, 1, 1], [], []>} : vector<2x64xf32>, vector<64x128xf32>, vector<2x128xf32> -> vector<2x128xf32>
    %c0_24 = arith.constant 0 : index
    %c0_25 = arith.constant 0 : index
    %37 = vector.load %arg8[%c0_24, %c0_25] : memref<1x128xf32, #tpu.memory_space<vmem>>, vector<1x128xf32>
    %38 = vector.broadcast %37 : vector<1x128xf32> to vector<2x128xf32>
    %39 = arith.addf %36, %38 : vector<2x128xf32>
    %cst_26 = arith.constant 0.000000e+00 : f32
    %40 = vector.broadcast %cst_26 : f32 to vector<2x128xf32>
    %41 = arith.cmpf ogt, %39, %40 : vector<2x128xf32>
    %cst_27 = arith.constant 0.00999999977 : f32
    %42 = vector.broadcast %cst_27 : f32 to vector<2x128xf32>
    %43 = arith.mulf %42, %39 : vector<2x128xf32>
    %44 = arith.select %41, %39, %43 : vector<2x128xi1>, vector<2x128xf32>
    %c0_28 = arith.constant 0 : index
    %c0_29 = arith.constant 0 : index
    %45 = vector.load %arg9[%c0_28, %c0_29] : memref<1792x256xf32, #tpu.memory_space<vmem>>, vector<1792x256xf32>
    %cst_30 = arith.constant dense<0.000000e+00> : vector<2x256xf32>
    %46 = tpu.matmul %23, %45, %cst_30 {dimension_numbers = #tpu.dot_dimension_numbers<[1], [0], [0], [1], [0, 0, 1, 1], [], []>} : vector<2x1792xf32>, vector<1792x256xf32>, vector<2x256xf32> -> vector<2x256xf32>
    %c0_31 = arith.constant 0 : index
    %c0_32 = arith.constant 0 : index
    %47 = vector.load %arg4[%c0_31, %c0_32] : memref<1x256xf32, #tpu.memory_space<vmem>>, vector<1x256xf32>
    %48 = vector.broadcast %7 : vector<2x1xf32> to vector<2x256xf32>
    %49 = vector.broadcast %47 : vector<1x256xf32> to vector<2x256xf32>
    %50 = arith.mulf %48, %49 : vector<2x256xf32>
    %51 = arith.subf %46, %50 : vector<2x256xf32>
    %52 = vector.broadcast %18 : vector<2x1xf32> to vector<2x256xf32>
    %53 = arith.mulf %52, %51 : vector<2x256xf32>
    %c0_33 = arith.constant 0 : index
    %c0_34 = arith.constant 0 : index
    %54 = vector.load %arg10[%c0_33, %c0_34] : memref<128x256xf32, #tpu.memory_space<vmem>>, vector<128x256xf32>
    %cst_35 = arith.constant dense<0.000000e+00> : vector<2x256xf32>
    %55 = tpu.matmul %44, %54, %cst_35 {dimension_numbers = #tpu.dot_dimension_numbers<[1], [0], [0], [1], [0, 0, 1, 1], [], []>} : vector<2x128xf32>, vector<128x256xf32>, vector<2x256xf32> -> vector<2x256xf32>
    %56 = arith.addf %53, %55 : vector<2x256xf32>
    %c0_36 = arith.constant 0 : index
    %c0_37 = arith.constant 0 : index
    %57 = vector.load %arg11[%c0_36, %c0_37] : memref<1x256xf32, #tpu.memory_space<vmem>>, vector<1x256xf32>
    %58 = vector.broadcast %57 : vector<1x256xf32> to vector<2x256xf32>
    %59 = arith.addf %56, %58 : vector<2x256xf32>
    %cst_38 = arith.constant 0.000000e+00 : f32
    %60 = vector.broadcast %cst_38 : f32 to vector<2x256xf32>
    %61 = arith.maximumf %59, %60 : vector<2x256xf32>
    %c0_39 = arith.constant 0 : index
    %c0_40 = arith.constant 0 : index
    %62 = vector.load %arg12[%c0_39, %c0_40] : memref<256x64xf32, #tpu.memory_space<vmem>>, vector<256x64xf32>
    %cst_41 = arith.constant dense<0.000000e+00> : vector<2x64xf32>
    %63 = tpu.matmul %61, %62, %cst_41 {dimension_numbers = #tpu.dot_dimension_numbers<[1], [0], [0], [1], [0, 0, 1, 1], [], []>} : vector<2x256xf32>, vector<256x64xf32>, vector<2x64xf32> -> vector<2x64xf32>
    %c0_42 = arith.constant 0 : index
    %c0_43 = arith.constant 0 : index
    %64 = vector.load %arg13[%c0_42, %c0_43] : memref<1x64xf32, #tpu.memory_space<vmem>>, vector<1x64xf32>
    %65 = vector.broadcast %64 : vector<1x64xf32> to vector<2x64xf32>
    %66 = arith.addf %63, %65 : vector<2x64xf32>
    %cst_44 = arith.constant 0.000000e+00 : f32
    %67 = vector.broadcast %cst_44 : f32 to vector<2x64xf32>
    %68 = arith.maximumf %66, %67 : vector<2x64xf32>
    %c0_45 = arith.constant 0 : index
    %c0_46 = arith.constant 0 : index
    %69 = vector.load %arg14[%c0_45, %c0_46] : memref<64x3xf32, #tpu.memory_space<vmem>>, vector<64x3xf32>
    %cst_47 = arith.constant dense<0.000000e+00> : vector<2x3xf32>
    %70 = tpu.matmul %68, %69, %cst_47 {dimension_numbers = #tpu.dot_dimension_numbers<[1], [0], [0], [1], [0, 0, 1, 1], [], []>} : vector<2x64xf32>, vector<64x3xf32>, vector<2x3xf32> -> vector<2x3xf32>
    %c0_48 = arith.constant 0 : index
    %c0_49 = arith.constant 0 : index
    %71 = vector.load %arg15[%c0_48, %c0_49] : memref<1x3xf32, #tpu.memory_space<vmem>>, vector<1x3xf32>
    %72 = vector.broadcast %71 : vector<1x3xf32> to vector<2x3xf32>
    %73 = arith.addf %70, %72 : vector<2x3xf32>
    %c0_50 = arith.constant 0 : index
    %c0_51 = arith.constant 0 : index
    %74 = vector.load %arg16[%c0_50, %c0_51] : memref<2x3xf32, #tpu.memory_space<vmem>>, vector<2x3xf32>
    tpu.vector_store %arg16[%c0_50, %c0_51], %73 {strides = array<i32>} : memref<2x3xf32, #tpu.memory_space<vmem>>, vector<2x3xf32>,
    return
  }
  func.func @transform_0(%arg0: i32) -> (i32, i32, i32) {
    %c0_i32 = arith.constant 0 : i32
    %c0_i32_0 = arith.constant 0 : i32
    %c0_i32_1 = arith.constant 0 : i32
    return %arg0, %c0_i32, %c0_i32_0 : i32, i32, i32
  }
  func.func @transform_1(%arg0: i32) -> (i32, i32) {
    %c0_i32 = arith.constant 0 : i32
    %c0_i32_0 = arith.constant 0 : i32
    return %arg0, %c0_i32 : i32, i32
  }
  func.func @transform_2(%arg0: i32) -> (i32, i32) {
    %c0_i32 = arith.constant 0 : i32
    %c0_i32_0 = arith.constant 0 : i32
    %c0_i32_1 = arith.constant 0 : i32
    return %c0_i32, %c0_i32_0 : i32, i32
  }
  func.func @transform_3(%arg0: i32) -> (i32, i32) {
    %c0_i32 = arith.constant 0 : i32
    %c0_i32_0 = arith.constant 0 : i32
    %c0_i32_1 = arith.constant 0 : i32
    return %c0_i32, %c0_i32_0 : i32, i32
  }
  func.func @transform_4(%arg0: i32) -> (i32, i32) {
    %c0_i32 = arith.constant 0 : i32
    %c0_i32_0 = arith.constant 0 : i32
    %c0_i32_1 = arith.constant 0 : i32
    return %c0_i32, %c0_i32_0 : i32, i32
  }
  func.func @transform_5(%arg0: i32) -> (i32, i32) {
    %c0_i32 = arith.constant 0 : i32
    %c0_i32_0 = arith.constant 0 : i32
    %c0_i32_1 = arith.constant 0 : i32
    return %c0_i32, %c0_i32_0 : i32, i32
  }
  func.func @transform_6(%arg0: i32) -> (i32, i32) {
    %c0_i32 = arith.constant 0 : i32
    %c0_i32_0 = arith.constant 0 : i32
    %c0_i32_1 = arith.constant 0 : i32
    return %c0_i32, %c0_i32_0 : i32, i32
  }
  func.func @transform_7(%arg0: i32) -> (i32, i32) {
    %c0_i32 = arith.constant 0 : i32
    %c0_i32_0 = arith.constant 0 : i32
    %c0_i32_1 = arith.constant 0 : i32
    return %c0_i32, %c0_i32_0 : i32, i32
  }
  func.func @transform_8(%arg0: i32) -> (i32, i32) {
    %c0_i32 = arith.constant 0 : i32
    %c0_i32_0 = arith.constant 0 : i32
    %c0_i32_1 = arith.constant 0 : i32
    return %c0_i32, %c0_i32_0 : i32, i32
  }
  func.func @transform_9(%arg0: i32) -> (i32, i32) {
    %c0_i32 = arith.constant 0 : i32
    %c0_i32_0 = arith.constant 0 : i32
    %c0_i32_1 = arith.constant 0 : i32
    return %c0_i32, %c0_i32_0 : i32, i32
  }
  func.func @transform_10(%arg0: i32) -> (i32, i32) {
    %c0_i32 = arith.constant 0 : i32
    %c0_i32_0 = arith.constant 0 : i32
    %c0_i32_1 = arith.constant 0 : i32
    return %c0_i32, %c0_i32_0 : i32, i32
  }
  func.func @transform_11(%arg0: i32) -> (i32, i32) {
    %c0_i32 = arith.constant 0 : i32
    %c0_i32_0 = arith.constant 0 : i32
    %c0_i32_1 = arith.constant 0 : i32
    return %c0_i32, %c0_i32_0 : i32, i32
  }
  func.func @transform_12(%arg0: i32) -> (i32, i32) {
    %c0_i32 = arith.constant 0 : i32
    %c0_i32_0 = arith.constant 0 : i32
    %c0_i32_1 = arith.constant 0 : i32
    return %c0_i32, %c0_i32_0 : i32, i32
  }
  func.func @transform_13(%arg0: i32) -> (i32, i32) {
    %c0_i32 = arith.constant 0 : i32
    %c0_i32_0 = arith.constant 0 : i32
    %c0_i32_1 = arith.constant 0 : i32
    return %c0_i32, %c0_i32_0 : i32, i32
  }
  func.func @transform_14(%arg0: i32) -> (i32, i32) {
    %c0_i32 = arith.constant 0 : i32
    %c0_i32_0 = arith.constant 0 : i32
    %c0_i32_1 = arith.constant 0 : i32
    return %c0_i32, %c0_i32_0 : i32, i32
  }
  func.func @transform_15(%arg0: i32) -> (i32, i32) {
    %c0_i32 = arith.constant 0 : i32
    %c0_i32_0 = arith.constant 0 : i32
    return %arg0, %c0_i32 : i32, i32
  }
}

</mosaic_0001>

<llo_original>
// kernel: tpu_custom_call.1
$region0: #{tpu_custom_call.1}
  #allocation0 [shape = 'u32[]', space=smem, size = 0x4, offset = 0x4, fixed_abs, tag = 'smem constant byte address 0x4 - core index']
  #allocation1 [shape = 'u32[72,128]{1,0:T(1,128)}', space=vmem, size = 0x9000, scoped, tag = 'internal scratch']
  %s0 = inlined_call_operand.vmem [shape: f32[2,49,1792], index: 0, kind: input, shape index: {}]
  %s1 = inlined_call_operand.hbm [shape: f32[2,16], index: 1, kind: input, shape index: {}]
  %s2 = inlined_call_operand.hbm [shape: f32[49,1792], index: 2, kind: input, shape index: {}]
  %s3 = inlined_call_operand.hbm [shape: f32[1,256], index: 3, kind: input, shape index: {}]
  %s4 = inlined_call_operand.hbm [shape: f32[16,64], index: 4, kind: input, shape index: {}]
  %s5 = inlined_call_operand.hbm [shape: f32[1,64], index: 5, kind: input, shape index: {}]
  %s6 = inlined_call_operand.hbm [shape: f32[64,128], index: 6, kind: input, shape index: {}]
  %s7 = inlined_call_operand.hbm [shape: f32[1,128], index: 7, kind: input, shape index: {}]
  %s8 = inlined_call_operand.hbm [shape: f32[1792,256], index: 8, kind: input, shape index: {}]
  %s9 = inlined_call_operand.hbm [shape: f32[128,256], index: 9, kind: input, shape index: {}]
  %s10 = inlined_call_operand.hbm [shape: f32[1,256], index: 10, kind: input, shape index: {}]
  %s11 = inlined_call_operand.vmem [shape: f32[256,64], index: 11, kind: input, shape index: {}]
  %s12 = inlined_call_operand.hbm [shape: f32[1,64], index: 12, kind: input, shape index: {}]
  %s13 = inlined_call_operand.vmem [shape: f32[64,3], index: 13, kind: input, shape index: {}]
  %s14 = inlined_call_operand.hbm [shape: f32[1,3], index: 14, kind: input, shape index: {}]
  %s15 = inlined_call_operand.hbm [shape: f32[2,3], index: 15, kind: output, shape index: {}]
  %s16 = sld [smem:[#allocation0]]
  $region118: #{tpu_custom_call.1} parent=0
    _
  %s18 = ssub.s32 1, %s16
  %s19 = scalar_select 0, %s18, %s16
  $region1: #{tpu_custom_call.1} parent=0
    #allocation2 [shape = 'u8[1024]{0}', space=vmem, size = 0x400, scoped, tag = 'input window, operand 1, single buffered']
    #allocation3 [shape = 's32[1]{0}', space=sflag, size = 0x4, scoped, tag = 'scoped memory for tpu_custom_call.1']
    #allocation4 [shape = 's32[1]{0}', space=sflag, size = 0x4, scoped, tag = 'scoped memory for tpu_custom_call.1']
    #allocation5 [shape = 'u8[401408]{0}', space=vmem, size = 0x62000, scoped, tag = 'input window, operand 2, single buffered']
    #allocation6 [shape = 's32[1]{0}', space=sflag, size = 0x4, scoped, tag = 'scoped memory for tpu_custom_call.1']
    #allocation7 [shape = 'u8[1024]{0}', space=vmem, size = 0x400, scoped, tag = 'input window, operand 3, single buffered']
    #allocation8 [shape = 'u8[8192]{0}', space=vmem, size = 0x2000, scoped, tag = 'input window, operand 4, single buffered']
    #allocation9 [shape = 's32[1]{0}', space=sflag, size = 0x4, scoped, tag = 'scoped memory for tpu_custom_call.1']
    #allocation10 [shape = 'u8[512]{0}', space=vmem, size = 0x400, scoped, tag = 'input window, operand 5, single buffered']
    #allocation11 [shape = 'u8[32768]{0}', space=vmem, size = 0x8000, scoped, tag = 'input window, operand 6, single buffered']
    #allocation12 [shape = 's32[1]{0}', space=sflag, size = 0x4, scoped, tag = 'scoped memory for tpu_custom_call.1']
    #allocation13 [shape = 'u8[512]{0}', space=vmem, size = 0x400, scoped, tag = 'input window, operand 7, single buffered']
    #allocation14 [shape = 'u8[1835008]{0}', space=vmem, size = 0x1c0000, scoped, tag = 'input window, operand 8, single buffered']
    #allocation15 [shape = 's32[1]{0}', space=sflag, size = 0x4, scoped, tag = 'scoped memory for tpu_custom_call.1']
    #allocation16 [shape = 'u8[131072]{0}', space=vmem, size = 0x20000, scoped, tag = 'input window, operand 9, single buffered']
    #allocation17 [shape = 'u8[1024]{0}', space=vmem, size = 0x400, scoped, tag = 'input window, operand 10, single buffered']
    #allocation18 [shape = 's32[1]{0}', space=sflag, size = 0x4, scoped, tag = 'scoped memory for tpu_custom_call.1']
    #allocation19 [shape = 'u8[512]{0}', space=vmem, size = 0x400, scoped, tag = 'input window, operand 12, single buffered']
    #allocation20 [shape = 'u8[512]{0}', space=vmem, size = 0x400, scoped, tag = 'input window, operand 14, single buffered']
    #allocation21 [shape = 's32[1]{0}', space=sflag, size = 0x4, scoped, tag = 'scoped memory for tpu_custom_call.1']
    #allocation22 [shape = 'u8[1024]{0}', space=vmem, size = 0x400, scoped, tag = 'output window, operand 0, single buffered']
    %20 = vsyncpa [#allocation3], 0
    %21 = vsyncpa [#allocation6], 0
    %22 = vsyncpa [#allocation9], 0
    %23 = vsyncpa [#allocation12], 0
    %24 = vsyncpa [#allocation15], 0
    %25 = vsyncpa [#allocation18], 0
    %26 = vsyncpa [#allocation21], 0
    %27 = vsyncpa [#allocation4], 0
    // Predicated region
    $region2: #{tpu_custom_call.1} parent=1 // pred_check
      _
    $region3: #{tpu_custom_call.1} parent=1 // pred_check_branch
      %29 = sbr.rel (0) target = $region5
    $region4: #{tpu_custom_call.1} parent=1 // pred_region
      _
    $region5: #{tpu_custom_call.1} parent=1 // pred_fallthru
      _
    // Predicated region
    $region6: #{tpu_custom_call.1} parent=1 // pred_check
      _
    $region7: #{tpu_custom_call.1} parent=1 // pred_check_branch
      %31 = sbr.rel (0) target = $region9
    $region8: #{tpu_custom_call.1} parent=1 // pred_region
      %33 = vsyncadd [#allocation3], 0
      %s35 = sshll.u32 %s1, 4
      %s36 = int_to_ptr.hbm [resolvable:$true] %s35
      %s37 = sshll.u32 [#allocation2], 4
      %s38 = int_to_ptr.vmem [resolvable:$true] %s37
      %40 = dma.hbm_to_vmem [thread:$0]  %s36, 32, %s38, [#allocation3]
    $region9: #{tpu_custom_call.1} parent=1 // pred_fallthru
      _
    // Predicated region
    $region10: #{tpu_custom_call.1} parent=1 // pred_check
      _
    $region11: #{tpu_custom_call.1} parent=1 // pred_check_branch
      %42 = sbr.rel (0) target = $region13
    $region12: #{tpu_custom_call.1} parent=1 // pred_region
      %44 = vsyncadd [#allocation6], 0
      %s45 = sshll.u32 %s2, 4
      %s46 = int_to_ptr.hbm [resolvable:$true] %s45
      %s47 = sshll.u32 [#allocation5], 4
      %s48 = int_to_ptr.vmem [resolvable:$true] %s47
      %53 = dma.hbm_to_vmem [thread:$0]  %s46, 12544, %s48, [#allocation6], 1792, 1792, 112
    $region13: #{tpu_custom_call.1} parent=1 // pred_fallthru
      _
    // Predicated region
    $region14: #{tpu_custom_call.1} parent=1 // pred_check
      _
    $region15: #{tpu_custom_call.1} parent=1 // pred_check_branch
      %55 = sbr.rel (0) target = $region17
    $region16: #{tpu_custom_call.1} parent=1 // pred_region
      %57 = vsyncadd [#allocation6], 0
      %s59 = sshll.u32 %s3, 4
      %s60 = int_to_ptr.hbm [resolvable:$true] %s59
      %s61 = sshll.u32 [#allocation7], 4
      %s62 = int_to_ptr.vmem [resolvable:$true] %s61
      %64 = dma.hbm_to_vmem [thread:$0]  %s60, 32, %s62, [#allocation6]
    $region17: #{tpu_custom_call.1} parent=1 // pred_fallthru
      _
    // Predicated region
    $region18: #{tpu_custom_call.1} parent=1 // pred_check
      _
    $region19: #{tpu_custom_call.1} parent=1 // pred_check_branch
      %66 = sbr.rel (0) target = $region21
    $region20: #{tpu_custom_call.1} parent=1 // pred_region
      %68 = vsyncadd [#allocation9], 0
      %s69 = sshll.u32 %s4, 4
      %s70 = int_to_ptr.hbm [resolvable:$true] %s69
      %s71 = sshll.u32 [#allocation8], 4
      %s72 = int_to_ptr.vmem [resolvable:$true] %s71
      %77 = dma.hbm_to_vmem [thread:$0]  %s70, 256, %s72, [#allocation9], 128, 128, 8
    $region21: #{tpu_custom_call.1} parent=1 // pred_fallthru
      _
    // Predicated region
    $region22: #{tpu_custom_call.1} parent=1 // pred_check
      _
    $region23: #{tpu_custom_call.1} parent=1 // pred_check_branch
      %79 = sbr.rel (0) target = $region25
    $region24: #{tpu_custom_call.1} parent=1 // pred_region
      %81 = vsyncadd [#allocation9], 0
      %s83 = sshll.u32 %s5, 4
      %s84 = int_to_ptr.hbm [resolvable:$true] %s83
      %s85 = sshll.u32 [#allocation10], 4
      %s86 = int_to_ptr.vmem [resolvable:$true] %s85
      %88 = dma.hbm_to_vmem [thread:$0]  %s84, 16, %s86, [#allocation9]
    $region25: #{tpu_custom_call.1} parent=1 // pred_fallthru
      _
    // Predicated region
    $region26: #{tpu_custom_call.1} parent=1 // pred_check
      _
    $region27: #{tpu_custom_call.1} parent=1 // pred_check_branch
      %90 = sbr.rel (0) target = $region29
    $region28: #{tpu_custom_call.1} parent=1 // pred_region
      %92 = vsyncadd [#allocation12], 0
      %s93 = sshll.u32 %s6, 4
      %s94 = int_to_ptr.hbm [resolvable:$true] %s93
      %s95 = sshll.u32 [#allocation11], 4
      %s96 = int_to_ptr.vmem [resolvable:$true] %s95
      %101 = dma.hbm_to_vmem [thread:$0]  %s94, 1024, %s96, [#allocation12], 128, 128, 8
    $region29: #{tpu_custom_call.1} parent=1 // pred_fallthru
      _
    // Predicated region
    $region30: #{tpu_custom_call.1} parent=1 // pred_check
      _
    $region31: #{tpu_custom_call.1} parent=1 // pred_check_branch
      %103 = sbr.rel (0) target = $region33
    $region32: #{tpu_custom_call.1} parent=1 // pred_region
      %105 = vsyncadd [#allocation12], 0
      %s107 = sshll.u32 %s7, 4
      %s108 = int_to_ptr.hbm [resolvable:$true] %s107
      %s109 = sshll.u32 [#allocation13], 4
      %s110 = int_to_ptr.vmem [resolvable:$true] %s109
      %112 = dma.hbm_to_vmem [thread:$0]  %s108, 16, %s110, [#allocation12]
    $region33: #{tpu_custom_call.1} parent=1 // pred_fallthru
      _
    // Predicated region
    $region34: #{tpu_custom_call.1} parent=1 // pred_check
      _
    $region35: #{tpu_custom_call.1} parent=1 // pred_check_branch
      %114 = sbr.rel (0) target = $region37
    $region36: #{tpu_custom_call.1} parent=1 // pred_region
      %116 = vsyncadd [#allocation15], 0
      %s117 = sshll.u32 %s8, 4
      %s118 = int_to_ptr.hbm [resolvable:$true] %s117
      %s119 = sshll.u32 [#allocation14], 4
      %s120 = int_to_ptr.vmem [resolvable:$true] %s119
      %125 = dma.hbm_to_vmem [thread:$0]  %s118, 57344, %s120, [#allocation15], 256, 256, 16
    $region37: #{tpu_custom_call.1} parent=1 // pred_fallthru
      _
    // Predicated region
    $region38: #{tpu_custom_call.1} parent=1 // pred_check
      _
    $region39: #{tpu_custom_call.1} parent=1 // pred_check_branch
      %127 = sbr.rel (0) target = $region41
    $region40: #{tpu_custom_call.1} parent=1 // pred_region
      %129 = vsyncadd [#allocation15], 0
      %s130 = sshll.u32 %s9, 4
      %s131 = int_to_ptr.hbm [resolvable:$true] %s130
      %s132 = sshll.u32 [#allocation16], 4
      %s133 = int_to_ptr.vmem [resolvable:$true] %s132
      %138 = dma.hbm_to_vmem [thread:$0]  %s131, 4096, %s133, [#allocation15], 256, 256, 16
    $region41: #{tpu_custom_call.1} parent=1 // pred_fallthru
      _
    // Predicated region
    $region42: #{tpu_custom_call.1} parent=1 // pred_check
      _
    $region43: #{tpu_custom_call.1} parent=1 // pred_check_branch
      %140 = sbr.rel (0) target = $region45
    $region44: #{tpu_custom_call.1} parent=1 // pred_region
      %142 = vsyncadd [#allocation18], 0
      %s144 = sshll.u32 %s10, 4
      %s145 = int_to_ptr.hbm [resolvable:$true] %s144
      %s146 = sshll.u32 [#allocation17], 4
      %s147 = int_to_ptr.vmem [resolvable:$true] %s146
      %149 = dma.hbm_to_vmem [thread:$0]  %s145, 32, %s147, [#allocation18]
    $region45: #{tpu_custom_call.1} parent=1 // pred_fallthru
      _
    // Predicated region
    $region46: #{tpu_custom_call.1} parent=1 // pred_check
      _
    $region47: #{tpu_custom_call.1} parent=1 // pred_check_branch
      %151 = sbr.rel (0) target = $region49
    $region48: #{tpu_custom_call.1} parent=1 // pred_region
      _
    $region49: #{tpu_custom_call.1} parent=1 // pred_fallthru
      _
    // Predicated region
    $region50: #{tpu_custom_call.1} parent=1 // pred_check
      _
    $region51: #{tpu_custom_call.1} parent=1 // pred_check_branch
      %153 = sbr.rel (0) target = $region53
    $region52: #{tpu_custom_call.1} parent=1 // pred_region
      %155 = vsyncadd [#allocation18], 0
      %s157 = sshll.u32 %s12, 4
      %s158 = int_to_ptr.hbm [resolvable:$true] %s157
      %s159 = sshll.u32 [#allocation19], 4
      %s160 = int_to_ptr.vmem [resolvable:$true] %s159
      %162 = dma.hbm_to_vmem [thread:$0]  %s158, 16, %s160, [#allocation18]
    $region53: #{tpu_custom_call.1} parent=1 // pred_fallthru
      _
    // Predicated region
    $region54: #{tpu_custom_call.1} parent=1 // pred_check
      _
    $region55: #{tpu_custom_call.1} parent=1 // pred_check_branch
      %164 = sbr.rel (0) target = $region57
    $region56: #{tpu_custom_call.1} parent=1 // pred_region
      _
    $region57: #{tpu_custom_call.1} parent=1 // pred_fallthru
      _
    // Predicated region
    $region58: #{tpu_custom_call.1} parent=1 // pred_check
      _
    $region59: #{tpu_custom_call.1} parent=1 // pred_check_branch
      %166 = sbr.rel (0) target = $region61
    $region60: #{tpu_custom_call.1} parent=1 // pred_region
      %168 = vsyncadd [#allocation21], 0
      %s170 = sshll.u32 %s14, 4
      %s171 = int_to_ptr.hbm [resolvable:$true] %s170
      %s172 = sshll.u32 [#allocation20], 4
      %s173 = int_to_ptr.vmem [resolvable:$true] %s172
      %175 = dma.hbm_to_vmem [thread:$0]  %s171, 16, %s173, [#allocation21]
    $region61: #{tpu_custom_call.1} parent=1 // pred_fallthru
      _
    // Predicated region
    $region62: #{tpu_custom_call.1} parent=1 // pred_check
      _
    $region63: #{tpu_custom_call.1} parent=1 // pred_check_branch
      %177 = sbr.rel (0) target = $region65
    $region64: #{tpu_custom_call.1} parent=1 // pred_region
      %179 = dma.done [#allocation3], 32
    $region65: #{tpu_custom_call.1} parent=1 // pred_fallthru
      _
    // Predicated region
    $region66: #{tpu_custom_call.1} parent=1 // pred_check
      _
    $region67: #{tpu_custom_call.1} parent=1 // pred_check_branch
      %181 = sbr.rel (0) target = $region69
    $region68: #{tpu_custom_call.1} parent=1 // pred_region
      %183 = dma.done [#allocation6], 12544
    $region69: #{tpu_custom_call.1} parent=1 // pred_fallthru
      _
    // Predicated region
    $region70: #{tpu_custom_call.1} parent=1 // pred_check
      _
    $region71: #{tpu_custom_call.1} parent=1 // pred_check_branch
      %185 = sbr.rel (0) target = $region73
    $region72: #{tpu_custom_call.1} parent=1 // pred_region
      %187 = dma.done [#allocation6], 32
    $region73: #{tpu_custom_call.1} parent=1 // pred_fallthru
      _
    // Predicated region
    $region74: #{tpu_custom_call.1} parent=1 // pred_check
      _
    $region75: #{tpu_custom_call.1} parent=1 // pred_check_branch
      %189 = sbr.rel (0) target = $region77
    $region76: #{tpu_custom_call.1} parent=1 // pred_region
      %191 = dma.done [#allocation9], 256
    $region77: #{tpu_custom_call.1} parent=1 // pred_fallthru
      _
    // Predicated region
    $region78: #{tpu_custom_call.1} parent=1 // pred_check
      _
    $region79: #{tpu_custom_call.1} parent=1 // pred_check_branch
      %193 = sbr.rel (0) target = $region81
    $region80: #{tpu_custom_call.1} parent=1 // pred_region
      %195 = dma.done [#allocation9], 16
    $region81: #{tpu_custom_call.1} parent=1 // pred_fallthru
      _
    // Predicated region
    $region82: #{tpu_custom_call.1} parent=1 // pred_check
      _
    $region83: #{tpu_custom_call.1} parent=1 // pred_check_branch
      %197 = sbr.rel (0) target = $region85
    $region84: #{tpu_custom_call.1} parent=1 // pred_region
      %199 = dma.done [#allocation12], 1024
    $region85: #{tpu_custom_call.1} parent=1 // pred_fallthru
      _
    // Predicated region
    $region86: #{tpu_custom_call.1} parent=1 // pred_check
      _
    $region87: #{tpu_custom_call.1} parent=1 // pred_check_branch
      %201 = sbr.rel (0) target = $region89
    $region88: #{tpu_custom_call.1} parent=1 // pred_region
      %203 = dma.done [#allocation12], 16
    $region89: #{tpu_custom_call.1} parent=1 // pred_fallthru
      _
    // Predicated region
    $region90: #{tpu_custom_call.1} parent=1 // pred_check
      _
    $region91: #{tpu_custom_call.1} parent=1 // pred_check_branch
      %205 = sbr.rel (0) target = $region93
    $region92: #{tpu_custom_call.1} parent=1 // pred_region
      %207 = dma.done [#allocation15], 57344
    $region93: #{tpu_custom_call.1} parent=1 // pred_fallthru
      _
    // Predicated region
    $region94: #{tpu_custom_call.1} parent=1 // pred_check
      _
    $region95: #{tpu_custom_call.1} parent=1 // pred_check_branch
      %209 = sbr.rel (0) target = $region97
    $region96: #{tpu_custom_call.1} parent=1 // pred_region
      %211 = dma.done [#allocation15], 4096
    $region97: #{tpu_custom_call.1} parent=1 // pred_fallthru
      _
    // Predicated region
    $region98: #{tpu_custom_call.1} parent=1 // pred_check
      _
    $region99: #{tpu_custom_call.1} parent=1 // pred_check_branch
      %213 = sbr.rel (0) target = $region101
    $region100: #{tpu_custom_call.1} parent=1 // pred_region
      %215 = dma.done [#allocation18], 32
    $region101: #{tpu_custom_call.1} parent=1 // pred_fallthru
      _
    // Predicated region
    $region102: #{tpu_custom_call.1} parent=1 // pred_check
      _
    $region103: #{tpu_custom_call.1} parent=1 // pred_check_branch
      %217 = sbr.rel (0) target = $region105
    $region104: #{tpu_custom_call.1} parent=1 // pred_region
      %219 = dma.done [#allocation18], 16
    $region105: #{tpu_custom_call.1} parent=1 // pred_fallthru
      _
    // Predicated region
    $region106: #{tpu_custom_call.1} parent=1 // pred_check
      _
    $region107: #{tpu_custom_call.1} parent=1 // pred_check_branch
      %221 = sbr.rel (0) target = $region109
    $region108: #{tpu_custom_call.1} parent=1 // pred_region
      %223 = dma.done [#allocation21], 16
    $region109: #{tpu_custom_call.1} parent=1 // pred_fallthru
      _
    %v224 = vld [vmem:[%s0] sm:$0xff]
    %v225 = vld [vmem:[%s0 + $0x8] sm:$0xff]
    %v226 = vld [vmem:[%s0 + $0x10] sm:$0xff]
    %v227 = vld [vmem:[%s0 + $0x18] sm:$0xff]
    %v228 = vld [vmem:[%s0 + $0x20] sm:$0xff]
    %v229 = vld [vmem:[%s0 + $0x28] sm:$0xff]
    %v230 = vld [vmem:[%s0 + $0x30] sm:$0xff]
    %v231 = vld [vmem:[%s0 + $0x38] sm:$0xff]
    %v232 = vld [vmem:[%s0 + $0x40] sm:$0xff]
    %v233 = vld [vmem:[%s0 + $0x48] sm:$0xff]
    %v234 = vld [vmem:[%s0 + $0x50] sm:$0xff]
    %v235 = vld [vmem:[%s0 + $0x58] sm:$0xff]
    %v236 = vld [vmem:[%s0 + $0x60] sm:$0xff]
    %v237 = vld [vmem:[%s0 + $0x68] sm:$0xff]
    %v238 = vld [vmem:[%s0 + $0x70] sm:$0xff]
    %v239 = vld [vmem:[%s0 + $0x78] sm:$0xff]
    %v240 = vld [vmem:[%s0 + $0x80] sm:$0xff]
    %v241 = vld [vmem:[%s0 + $0x88] sm:$0xff]
    %v242 = vld [vmem:[%s0 + $0x90] sm:$0xff]
    %v243 = vld [vmem:[%s0 + $0x98] sm:$0xff]
    %v244 = vld [vmem:[%s0 + $0xa0] sm:$0xff]
    %v245 = vld [vmem:[%s0 + $0xa8] sm:$0xff]
    %v246 = vld [vmem:[%s0 + $0xb0] sm:$0xff]
    %v247 = vld [vmem:[%s0 + $0xb8] sm:$0xff]
    %v248 = vld [vmem:[%s0 + $0xc0] sm:$0xff]
    %v249 = vld [vmem:[%s0 + $0xc8] sm:$0xff]
    %v250 = vld [vmem:[%s0 + $0xd0] sm:$0xff]
    %v251 = vld [vmem:[%s0 + $0xd8] sm:$0xff]
    %v252 = vld [vmem:[%s0 + $0xe0] sm:$0xff]
    %v253 = vld [vmem:[%s0 + $0xe8] sm:$0xff]
    %v254 = vld [vmem:[%s0 + $0xf0] sm:$0xff]
    %v255 = vld [vmem:[%s0 + $0xf8] sm:$0xff]
    %v256 = vld [vmem:[%s0 + $0x100] sm:$0xff]
    %v257 = vld [vmem:[%s0 + $0x108] sm:$0xff]
    %v258 = vld [vmem:[%s0 + $0x110] sm:$0xff]
    %v259 = vld [vmem:[%s0 + $0x118] sm:$0xff]
    %v260 = vld [vmem:[%s0 + $0x120] sm:$0xff]
    %v261 = vld [vmem:[%s0 + $0x128] sm:$0xff]
    %v262 = vld [vmem:[%s0 + $0x130] sm:$0xff]
    %v263 = vld [vmem:[%s0 + $0x138] sm:$0xff]
    %v264 = vld [vmem:[%s0 + $0x140] sm:$0xff]
    %v265 = vld [vmem:[%s0 + $0x148] sm:$0xff]
    %v266 = vld [vmem:[%s0 + $0x150] sm:$0xff]
    %v267 = vld [vmem:[%s0 + $0x158] sm:$0xff]
    %v268 = vld [vmem:[%s0 + $0x160] sm:$0xff]
    %v269 = vld [vmem:[%s0 + $0x168] sm:$0xff]
    %v270 = vld [vmem:[%s0 + $0x170] sm:$0xff]
    %v271 = vld [vmem:[%s0 + $0x178] sm:$0xff]
    %v272 = vld [vmem:[%s0 + $0x180] sm:$0xff]
    %v273 = vld [vmem:[%s0 + $0x188] sm:$0xff]
    %v274 = vld [vmem:[%s0 + $0x190] sm:$0xff]
    %v275 = vld [vmem:[%s0 + $0x198] sm:$0xff]
    %v276 = vld [vmem:[%s0 + $0x1a0] sm:$0xff]
    %v277 = vld [vmem:[%s0 + $0x1a8] sm:$0xff]
    %v278 = vld [vmem:[%s0 + $0x1b0] sm:$0xff]
    %v279 = vld [vmem:[%s0 + $0x1b8] sm:$0xff]
    %v280 = vld [vmem:[%s0 + $0x1c0] sm:$0xff]
    %v281 = vld [vmem:[%s0 + $0x1c8] sm:$0xff]
    %v282 = vld [vmem:[%s0 + $0x1d0] sm:$0xff]
    %v283 = vld [vmem:[%s0 + $0x1d8] sm:$0xff]
    %v284 = vld [vmem:[%s0 + $0x1e0] sm:$0xff]
    %v285 = vld [vmem:[%s0 + $0x1e8] sm:$0xff]
    %v286 = vld [vmem:[%s0 + $0x1f0] sm:$0xff]
    %v287 = vld [vmem:[%s0 + $0x1f8] sm:$0xff]
    %v288 = vld [vmem:[%s0 + $0x200] sm:$0xff]
    %v289 = vld [vmem:[%s0 + $0x208] sm:$0xff]
    %v290 = vld [vmem:[%s0 + $0x210] sm:$0xff]
    %v291 = vld [vmem:[%s0 + $0x218] sm:$0xff]
    %v292 = vld [vmem:[%s0 + $0x220] sm:$0xff]
    %v293 = vld [vmem:[%s0 + $0x228] sm:$0xff]
    %v294 = vld [vmem:[%s0 + $0x230] sm:$0xff]
    %v295 = vld [vmem:[%s0 + $0x238] sm:$0xff]
    %v296 = vld [vmem:[%s0 + $0x240] sm:$0xff]
    %v297 = vld [vmem:[%s0 + $0x248] sm:$0xff]
    %v298 = vld [vmem:[%s0 + $0x250] sm:$0xff]
    %v299 = vld [vmem:[%s0 + $0x258] sm:$0xff]
    %v300 = vld [vmem:[%s0 + $0x260] sm:$0xff]
    %v301 = vld [vmem:[%s0 + $0x268] sm:$0xff]
    %v302 = vld [vmem:[%s0 + $0x270] sm:$0xff]
    %v303 = vld [vmem:[%s0 + $0x278] sm:$0xff]
    %v304 = vld [vmem:[%s0 + $0x280] sm:$0xff]
    %v305 = vld [vmem:[%s0 + $0x288] sm:$0xff]
    %v306 = vld [vmem:[%s0 + $0x290] sm:$0xff]
    %v307 = vld [vmem:[%s0 + $0x298] sm:$0xff]
    %v308 = vld [vmem:[%s0 + $0x2a0] sm:$0x1]
    %v309 = vld [vmem:[%s0 + $0x2a8] sm:$0x1]
    %v310 = vld [vmem:[%s0 + $0x2b0] sm:$0x1]
    %v311 = vld [vmem:[%s0 + $0x2b8] sm:$0x1]
    %v312 = vld [vmem:[%s0 + $0x2c0] sm:$0x1]
    %v313 = vld [vmem:[%s0 + $0x2c8] sm:$0x1]
    %v314 = vld [vmem:[%s0 + $0x2d0] sm:$0x1]
    %v315 = vld [vmem:[%s0 + $0x2d8] sm:$0x1]
    %v316 = vld [vmem:[%s0 + $0x2e0] sm:$0x1]
    %v317 = vld [vmem:[%s0 + $0x2e8] sm:$0x1]
    %v318 = vld [vmem:[%s0 + $0x2f0] sm:$0x1]
    %v319 = vld [vmem:[%s0 + $0x2f8] sm:$0x1]
    %v320 = vld [vmem:[%s0 + $0x300] sm:$0x1]
    %v321 = vld [vmem:[%s0 + $0x308] sm:$0x1]
    %v322 = vld [vmem:[%s0 + $0x310] sm:$0xff]
    %v323 = vld [vmem:[%s0 + $0x318] sm:$0xff]
    %v324 = vld [vmem:[%s0 + $0x320] sm:$0xff]
    %v325 = vld [vmem:[%s0 + $0x328] sm:$0xff]
    %v326 = vld [vmem:[%s0 + $0x330] sm:$0xff]
    %v327 = vld [vmem:[%s0 + $0x338] sm:$0xff]
    %v328 = vld [vmem:[%s0 + $0x340] sm:$0xff]
    %v329 = vld [vmem:[%s0 + $0x348] sm:$0xff]
    %v330 = vld [vmem:[%s0 + $0x350] sm:$0xff]
    %v331 = vld [vmem:[%s0 + $0x358] sm:$0xff]
    %v332 = vld [vmem:[%s0 + $0x360] sm:$0xff]
    %v333 = vld [vmem:[%s0 + $0x368] sm:$0xff]
    %v334 = vld [vmem:[%s0 + $0x370] sm:$0xff]
    %v335 = vld [vmem:[%s0 + $0x378] sm:$0xff]
    %v336 = vld [vmem:[%s0 + $0x380] sm:$0xff]
    %v337 = vld [vmem:[%s0 + $0x388] sm:$0xff]
    %v338 = vld [vmem:[%s0 + $0x390] sm:$0xff]
    %v339 = vld [vmem:[%s0 + $0x398] sm:$0xff]
    %v340 = vld [vmem:[%s0 + $0x3a0] sm:$0xff]
    %v341 = vld [vmem:[%s0 + $0x3a8] sm:$0xff]
    %v342 = vld [vmem:[%s0 + $0x3b0] sm:$0xff]
    %v343 = vld [vmem:[%s0 + $0x3b8] sm:$0xff]
    %v344 = vld [vmem:[%s0 + $0x3c0] sm:$0xff]
    %v345 = vld [vmem:[%s0 + $0x3c8] sm:$0xff]
    %v346 = vld [vmem:[%s0 + $0x3d0] sm:$0xff]
    %v347 = vld [vmem:[%s0 + $0x3d8] sm:$0xff]
    %v348 = vld [vmem:[%s0 + $0x3e0] sm:$0xff]
    %v349 = vld [vmem:[%s0 + $0x3e8] sm:$0xff]
    %v350 = vld [vmem:[%s0 + $0x3f0] sm:$0xff]
    %v351 = vld [vmem:[%s0 + $0x3f8] sm:$0xff]
    %v352 = vld [vmem:[%s0 + $0x400] sm:$0xff]
    %v353 = vld [vmem:[%s0 + $0x408] sm:$0xff]
    %v354 = vld [vmem:[%s0 + $0x410] sm:$0xff]
    %v355 = vld [vmem:[%s0 + $0x418] sm:$0xff]
    %v356 = vld [vmem:[%s0 + $0x420] sm:$0xff]
    %v357 = vld [vmem:[%s0 + $0x428] sm:$0xff]
    %v358 = vld [vmem:[%s0 + $0x430] sm:$0xff]
    %v359 = vld [vmem:[%s0 + $0x438] sm:$0xff]
    %v360 = vld [vmem:[%s0 + $0x440] sm:$0xff]
    %v361 = vld [vmem:[%s0 + $0x448] sm:$0xff]
    %v362 = vld [vmem:[%s0 + $0x450] sm:$0xff]
    %v363 = vld [vmem:[%s0 + $0x458] sm:$0xff]
    %v364 = vld [vmem:[%s0 + $0x460] sm:$0xff]
    %v365 = vld [vmem:[%s0 + $0x468] sm:$0xff]
    %v366 = vld [vmem:[%s0 + $0x470] sm:$0xff]
    %v367 = vld [vmem:[%s0 + $0x478] sm:$0xff]
    %v368 = vld [vmem:[%s0 + $0x480] sm:$0xff]
    %v369 = vld [vmem:[%s0 + $0x488] sm:$0xff]
    %v370 = vld [vmem:[%s0 + $0x490] sm:$0xff]
    %v371 = vld [vmem:[%s0 + $0x498] sm:$0xff]
    %v372 = vld [vmem:[%s0 + $0x4a0] sm:$0xff]
    %v373 = vld [vmem:[%s0 + $0x4a8] sm:$0xff]
    %v374 = vld [vmem:[%s0 + $0x4b0] sm:$0xff]
    %v375 = vld [vmem:[%s0 + $0x4b8] sm:$0xff]
    %v376 = vld [vmem:[%s0 + $0x4c0] sm:$0xff]
    %v377 = vld [vmem:[%s0 + $0x4c8] sm:$0xff]
    %v378 = vld [vmem:[%s0 + $0x4d0] sm:$0xff]
    %v379 = vld [vmem:[%s0 + $0x4d8] sm:$0xff]
    %v380 = vld [vmem:[%s0 + $0x4e0] sm:$0xff]
    %v381 = vld [vmem:[%s0 + $0x4e8] sm:$0xff]
    %v382 = vld [vmem:[%s0 + $0x4f0] sm:$0xff]
    %v383 = vld [vmem:[%s0 + $0x4f8] sm:$0xff]
    %v384 = vld [vmem:[%s0 + $0x500] sm:$0xff]
    %v385 = vld [vmem:[%s0 + $0x508] sm:$0xff]
    %v386 = vld [vmem:[%s0 + $0x510] sm:$0xff]
    %v387 = vld [vmem:[%s0 + $0x518] sm:$0xff]
    %v388 = vld [vmem:[%s0 + $0x520] sm:$0xff]
    %v389 = vld [vmem:[%s0 + $0x528] sm:$0xff]
    %v390 = vld [vmem:[%s0 + $0x530] sm:$0xff]
    %v391 = vld [vmem:[%s0 + $0x538] sm:$0xff]
    %v392 = vld [vmem:[%s0 + $0x540] sm:$0xff]
    %v393 = vld [vmem:[%s0 + $0x548] sm:$0xff]
    %v394 = vld [vmem:[%s0 + $0x550] sm:$0xff]
    %v395 = vld [vmem:[%s0 + $0x558] sm:$0xff]
    %v396 = vld [vmem:[%s0 + $0x560] sm:$0xff]
    %v397 = vld [vmem:[%s0 + $0x568] sm:$0xff]
    %v398 = vld [vmem:[%s0 + $0x570] sm:$0xff]
    %v399 = vld [vmem:[%s0 + $0x578] sm:$0xff]
    %v400 = vld [vmem:[%s0 + $0x580] sm:$0xff]
    %v401 = vld [vmem:[%s0 + $0x588] sm:$0xff]
    %v402 = vld [vmem:[%s0 + $0x590] sm:$0xff]
    %v403 = vld [vmem:[%s0 + $0x598] sm:$0xff]
    %v404 = vld [vmem:[%s0 + $0x5a0] sm:$0xff]
    %v405 = vld [vmem:[%s0 + $0x5a8] sm:$0xff]
    %v406 = vld [vmem:[%s0 + $0x5b0] sm:$0x1]
    %v407 = vld [vmem:[%s0 + $0x5b8] sm:$0x1]
    %v408 = vld [vmem:[%s0 + $0x5c0] sm:$0x1]
    %v409 = vld [vmem:[%s0 + $0x5c8] sm:$0x1]
    %v410 = vld [vmem:[%s0 + $0x5d0] sm:$0x1]
    %v411 = vld [vmem:[%s0 + $0x5d8] sm:$0x1]
    %v412 = vld [vmem:[%s0 + $0x5e0] sm:$0x1]
    %v413 = vld [vmem:[%s0 + $0x5e8] sm:$0x1]
    %v414 = vld [vmem:[%s0 + $0x5f0] sm:$0x1]
    %v415 = vld [vmem:[%s0 + $0x5f8] sm:$0x1]
    %v416 = vld [vmem:[%s0 + $0x600] sm:$0x1]
    %v417 = vld [vmem:[%s0 + $0x608] sm:$0x1]
    %v418 = vld [vmem:[%s0 + $0x610] sm:$0x1]
    %v419 = vld [vmem:[%s0 + $0x618] sm:$0x1]
    %v420 = vadd.f32 %v224, %v238
    %v421 = vadd.f32 %v420, %v252
    %v422 = vadd.f32 %v421, %v266
    %v423 = vadd.f32 %v422, %v280
    %v424 = vadd.f32 %v423, %v294
    %vm425 = vcmask 1040384
    %v426 = vsel %vm425, %v308, 0.0
    %v427 = vadd.f32 %v424, %v426
    %v428 = vrot.slane %v427, 4
    %v429 = vadd.f32 %v427, %v428
    %v430 = vrot.slane %v429, 2
    %v431 = vadd.f32 %v429, %v430
    %v432 = vrot.slane %v431, 1
    %v433 = vadd.f32 %v431, %v432
    %v434 = vadd.f32 %v225, %v239
    %v435 = vadd.f32 %v434, %v253
    %v436 = vadd.f32 %v435, %v267
    %v437 = vadd.f32 %v436, %v281
    %v438 = vadd.f32 %v437, %v295
    %v439 = vsel %vm425, %v309, 0.0
    %v440 = vadd.f32 %v438, %v439
    %v441 = vrot.slane %v440, 4
    %v442 = vadd.f32 %v440, %v441
    %v443 = vrot.slane %v442, 2
    %v444 = vadd.f32 %v442, %v443
    %v445 = vrot.slane %v444, 1
    %v446 = vadd.f32 %v444, %v445
    %v447 = vadd.f32 %v226, %v240
    %v448 = vadd.f32 %v447, %v254
    %v449 = vadd.f32 %v448, %v268
    %v450 = vadd.f32 %v449, %v282
    %v451 = vadd.f32 %v450, %v296
    %v452 = vsel %vm425, %v310, 0.0
    %v453 = vadd.f32 %v451, %v452
    %v454 = vrot.slane %v453, 4
    %v455 = vadd.f32 %v453, %v454
    %v456 = vrot.slane %v455, 2
    %v457 = vadd.f32 %v455, %v456
    %v458 = vrot.slane %v457, 1
    %v459 = vadd.f32 %v457, %v458
    %v460 = vadd.f32 %v227, %v241
    %v461 = vadd.f32 %v460, %v255
    %v462 = vadd.f32 %v461, %v269
    %v463 = vadd.f32 %v462, %v283
    %v464 = vadd.f32 %v463, %v297
    %v465 = vsel %vm425, %v311, 0.0
    %v466 = vadd.f32 %v464, %v465
    %v467 = vrot.slane %v466, 4
    %v468 = vadd.f32 %v466, %v467
    %v469 = vrot.slane %v468, 2
    %v470 = vadd.f32 %v468, %v469
    %v471 = vrot.slane %v470, 1
    %v472 = vadd.f32 %v470, %v471
    %v473 = vadd.f32 %v228, %v242
    %v474 = vadd.f32 %v473, %v256
    %v475 = vadd.f32 %v474, %v270
    %v476 = vadd.f32 %v475, %v284
    %v477 = vadd.f32 %v476, %v298
    %v478 = vsel %vm425, %v312, 0.0
    %v479 = vadd.f32 %v477, %v478
    %v480 = vrot.slane %v479, 4
    %v481 = vadd.f32 %v479, %v480
    %v482 = vrot.slane %v481, 2
    %v483 = vadd.f32 %v481, %v482
    %v484 = vrot.slane %v483, 1
    %v485 = vadd.f32 %v483, %v484
    %v486 = vadd.f32 %v229, %v243
    %v487 = vadd.f32 %v486, %v257
    %v488 = vadd.f32 %v487, %v271
    %v489 = vadd.f32 %v488, %v285
    %v490 = vadd.f32 %v489, %v299
    %v491 = vsel %vm425, %v313, 0.0
    %v492 = vadd.f32 %v490, %v491
    %v493 = vrot.slane %v492, 4
    %v494 = vadd.f32 %v492, %v493
    %v495 = vrot.slane %v494, 2
    %v496 = vadd.f32 %v494, %v495
    %v497 = vrot.slane %v496, 1
    %v498 = vadd.f32 %v496, %v497
    %v499 = vadd.f32 %v230, %v244
    %v500 = vadd.f32 %v499, %v258
    %v501 = vadd.f32 %v500, %v272
    %v502 = vadd.f32 %v501, %v286
    %v503 = vadd.f32 %v502, %v300
    %v504 = vsel %vm425, %v314, 0.0
    %v505 = vadd.f32 %v503, %v504
    %v506 = vrot.slane %v505, 4
    %v507 = vadd.f32 %v505, %v506
    %v508 = vrot.slane %v507, 2
    %v509 = vadd.f32 %v507, %v508
    %v510 = vrot.slane %v509, 1
    %v511 = vadd.f32 %v509, %v510
    %v512 = vadd.f32 %v231, %v245
    %v513 = vadd.f32 %v512, %v259
    %v514 = vadd.f32 %v513, %v273
    %v515 = vadd.f32 %v514, %v287
    %v516 = vadd.f32 %v515, %v301
    %v517 = vsel %vm425, %v315, 0.0
    %v518 = vadd.f32 %v516, %v517
    %v519 = vrot.slane %v518, 4
    %v520 = vadd.f32 %v518, %v519
    %v521 = vrot.slane %v520, 2
    %v522 = vadd.f32 %v520, %v521
    %v523 = vrot.slane %v522, 1
    %v524 = vadd.f32 %v522, %v523
    %v525 = vadd.f32 %v232, %v246
    %v526 = vadd.f32 %v525, %v260
    %v527 = vadd.f32 %v526, %v274
    %v528 = vadd.f32 %v527, %v288
    %v529 = vadd.f32 %v528, %v302
    %v530 = vsel %vm425, %v316, 0.0
    %v531 = vadd.f32 %v529, %v530
    %v532 = vrot.slane %v531, 4
    %v533 = vadd.f32 %v531, %v532
    %v534 = vrot.slane %v533, 2
    %v535 = vadd.f32 %v533, %v534
    %v536 = vrot.slane %v535, 1
    %v537 = vadd.f32 %v535, %v536
    %v538 = vadd.f32 %v233, %v247
    %v539 = vadd.f32 %v538, %v261
    %v540 = vadd.f32 %v539, %v275
    %v541 = vadd.f32 %v540, %v289
    %v542 = vadd.f32 %v541, %v303
    %v543 = vsel %vm425, %v317, 0.0
    %v544 = vadd.f32 %v542, %v543
    %v545 = vrot.slane %v544, 4
    %v546 = vadd.f32 %v544, %v545
    %v547 = vrot.slane %v546, 2
    %v548 = vadd.f32 %v546, %v547
    %v549 = vrot.slane %v548, 1
    %v550 = vadd.f32 %v548, %v549
    %v551 = vadd.f32 %v234, %v248
    %v552 = vadd.f32 %v551, %v262
    %v553 = vadd.f32 %v552, %v276
    %v554 = vadd.f32 %v553, %v290
    %v555 = vadd.f32 %v554, %v304
    %v556 = vsel %vm425, %v318, 0.0
    %v557 = vadd.f32 %v555, %v556
    %v558 = vrot.slane %v557, 4
    %v559 = vadd.f32 %v557, %v558
    %v560 = vrot.slane %v559, 2
    %v561 = vadd.f32 %v559, %v560
    %v562 = vrot.slane %v561, 1
    %v563 = vadd.f32 %v561, %v562
    %v564 = vadd.f32 %v235, %v249
    %v565 = vadd.f32 %v564, %v263
    %v566 = vadd.f32 %v565, %v277
    %v567 = vadd.f32 %v566, %v291
    %v568 = vadd.f32 %v567, %v305
    %v569 = vsel %vm425, %v319, 0.0
    %v570 = vadd.f32 %v568, %v569
    %v571 = vrot.slane %v570, 4
    %v572 = vadd.f32 %v570, %v571
    %v573 = vrot.slane %v572, 2
    %v574 = vadd.f32 %v572, %v573
    %v575 = vrot.slane %v574, 1
    %v576 = vadd.f32 %v574, %v575
    %v577 = vadd.f32 %v236, %v250
    %v578 = vadd.f32 %v577, %v264
    %v579 = vadd.f32 %v578, %v278
    %v580 = vadd.f32 %v579, %v292
    %v581 = vadd.f32 %v580, %v306
    %v582 = vsel %vm425, %v320, 0.0
    %v583 = vadd.f32 %v581, %v582
    %v584 = vrot.slane %v583, 4
    %v585 = vadd.f32 %v583, %v584
    %v586 = vrot.slane %v585, 2
    %v587 = vadd.f32 %v585, %v586
    %v588 = vrot.slane %v587, 1
    %v589 = vadd.f32 %v587, %v588
    %v590 = vadd.f32 %v237, %v251
    %v591 = vadd.f32 %v590, %v265
    %v592 = vadd.f32 %v591, %v279
    %v593 = vadd.f32 %v592, %v293
    %v594 = vadd.f32 %v593, %v307
    %v595 = vsel %vm425, %v321, 0.0
    %v596 = vadd.f32 %v594, %v595
    %v597 = vrot.slane %v596, 4
    %v598 = vadd.f32 %v596, %v597
    %v599 = vrot.slane %v598, 2
    %v600 = vadd.f32 %v598, %v599
    %v601 = vrot.slane %v600, 1
    %v602 = vadd.f32 %v600, %v601
    %v603 = vadd.f32 %v322, %v336
    %v604 = vadd.f32 %v603, %v350
    %v605 = vadd.f32 %v604, %v364
    %v606 = vadd.f32 %v605, %v378
    %v607 = vadd.f32 %v606, %v392
    %v608 = vsel %vm425, %v406, 0.0
    %v609 = vadd.f32 %v607, %v608
    %v610 = vrot.slane %v609, 4
    %v611 = vadd.f32 %v609, %v610
    %v612 = vrot.slane %v611, 2
    %v613 = vadd.f32 %v611, %v612
    %v614 = vrot.slane %v613, 1
    %v615 = vadd.f32 %v613, %v614
    %v616 = vadd.f32 %v323, %v337
    %v617 = vadd.f32 %v616, %v351
    %v618 = vadd.f32 %v617, %v365
    %v619 = vadd.f32 %v618, %v379
    %v620 = vadd.f32 %v619, %v393
    %v621 = vsel %vm425, %v407, 0.0
    %v622 = vadd.f32 %v620, %v621
    %v623 = vrot.slane %v622, 4
    %v624 = vadd.f32 %v622, %v623
    %v625 = vrot.slane %v624, 2
    %v626 = vadd.f32 %v624, %v625
    %v627 = vrot.slane %v626, 1
    %v628 = vadd.f32 %v626, %v627
    %v629 = vadd.f32 %v324, %v338
    %v630 = vadd.f32 %v629, %v352
    %v631 = vadd.f32 %v630, %v366
    %v632 = vadd.f32 %v631, %v380
    %v633 = vadd.f32 %v632, %v394
    %v634 = vsel %vm425, %v408, 0.0
    %v635 = vadd.f32 %v633, %v634
    %v636 = vrot.slane %v635, 4
    %v637 = vadd.f32 %v635, %v636
    %v638 = vrot.slane %v637, 2
    %v639 = vadd.f32 %v637, %v638
    %v640 = vrot.slane %v639, 1
    %v641 = vadd.f32 %v639, %v640
    %v642 = vadd.f32 %v325, %v339
    %v643 = vadd.f32 %v642, %v353
    %v644 = vadd.f32 %v643, %v367
    %v645 = vadd.f32 %v644, %v381
    %v646 = vadd.f32 %v645, %v395
    %v647 = vsel %vm425, %v409, 0.0
    %v648 = vadd.f32 %v646, %v647
    %v649 = vrot.slane %v648, 4
    %v650 = vadd.f32 %v648, %v649
    %v651 = vrot.slane %v650, 2
    %v652 = vadd.f32 %v650, %v651
    %v653 = vrot.slane %v652, 1
    %v654 = vadd.f32 %v652, %v653
    %v655 = vadd.f32 %v326, %v340
    %v656 = vadd.f32 %v655, %v354
    %v657 = vadd.f32 %v656, %v368
    %v658 = vadd.f32 %v657, %v382
    %v659 = vadd.f32 %v658, %v396
    %v660 = vsel %vm425, %v410, 0.0
    %v661 = vadd.f32 %v659, %v660
    %v662 = vrot.slane %v661, 4
    %v663 = vadd.f32 %v661, %v662
    %v664 = vrot.slane %v663, 2
    %v665 = vadd.f32 %v663, %v664
    %v666 = vrot.slane %v665, 1
    %v667 = vadd.f32 %v665, %v666
    %v668 = vadd.f32 %v327, %v341
    %v669 = vadd.f32 %v668, %v355
    %v670 = vadd.f32 %v669, %v369
    %v671 = vadd.f32 %v670, %v383
    %v672 = vadd.f32 %v671, %v397
    %v673 = vsel %vm425, %v411, 0.0
    %v674 = vadd.f32 %v672, %v673
    %v675 = vrot.slane %v674, 4
    %v676 = vadd.f32 %v674, %v675
    %v677 = vrot.slane %v676, 2
    %v678 = vadd.f32 %v676, %v677
    %v679 = vrot.slane %v678, 1
    %v680 = vadd.f32 %v678, %v679
    %v681 = vadd.f32 %v328, %v342
    %v682 = vadd.f32 %v681, %v356
    %v683 = vadd.f32 %v682, %v370
    %v684 = vadd.f32 %v683, %v384
    %v685 = vadd.f32 %v684, %v398
    %v686 = vsel %vm425, %v412, 0.0
    %v687 = vadd.f32 %v685, %v686
    %v688 = vrot.slane %v687, 4
    %v689 = vadd.f32 %v687, %v688
    %v690 = vrot.slane %v689, 2
    %v691 = vadd.f32 %v689, %v690
    %v692 = vrot.slane %v691, 1
    %v693 = vadd.f32 %v691, %v692
    %v694 = vadd.f32 %v329, %v343
    %v695 = vadd.f32 %v694, %v357
    %v696 = vadd.f32 %v695, %v371
    %v697 = vadd.f32 %v696, %v385
    %v698 = vadd.f32 %v697, %v399
    %v699 = vsel %vm425, %v413, 0.0
    %v700 = vadd.f32 %v698, %v699
    %v701 = vrot.slane %v700, 4
    %v702 = vadd.f32 %v700, %v701
    %v703 = vrot.slane %v702, 2
    %v704 = vadd.f32 %v702, %v703
    %v705 = vrot.slane %v704, 1
    %v706 = vadd.f32 %v704, %v705
    %v707 = vadd.f32 %v330, %v344
    %v708 = vadd.f32 %v707, %v358
    %v709 = vadd.f32 %v708, %v372
    %v710 = vadd.f32 %v709, %v386
    %v711 = vadd.f32 %v710, %v400
    %v712 = vsel %vm425, %v414, 0.0
    %v713 = vadd.f32 %v711, %v712
    %v714 = vrot.slane %v713, 4
    %v715 = vadd.f32 %v713, %v714
    %v716 = vrot.slane %v715, 2
    %v717 = vadd.f32 %v715, %v716
    %v718 = vrot.slane %v717, 1
    %v719 = vadd.f32 %v717, %v718
    %v720 = vadd.f32 %v331, %v345
    %v721 = vadd.f32 %v720, %v359
    %v722 = vadd.f32 %v721, %v373
    %v723 = vadd.f32 %v722, %v387
    %v724 = vadd.f32 %v723, %v401
    %v725 = vsel %vm425, %v415, 0.0
    %v726 = vadd.f32 %v724, %v725
    %v727 = vrot.slane %v726, 4
    %v728 = vadd.f32 %v726, %v727
    %v729 = vrot.slane %v728, 2
    %v730 = vadd.f32 %v728, %v729
    %v731 = vrot.slane %v730, 1
    %v732 = vadd.f32 %v730, %v731
    %v733 = vadd.f32 %v332, %v346
    %v734 = vadd.f32 %v733, %v360
    %v735 = vadd.f32 %v734, %v374
    %v736 = vadd.f32 %v735, %v388
    %v737 = vadd.f32 %v736, %v402
    %v738 = vsel %vm425, %v416, 0.0
    %v739 = vadd.f32 %v737, %v738
    %v740 = vrot.slane %v739, 4
    %v741 = vadd.f32 %v739, %v740
    %v742 = vrot.slane %v741, 2
    %v743 = vadd.f32 %v741, %v742
    %v744 = vrot.slane %v743, 1
    %v745 = vadd.f32 %v743, %v744
    %v746 = vadd.f32 %v333, %v347
    %v747 = vadd.f32 %v746, %v361
    %v748 = vadd.f32 %v747, %v375
    %v749 = vadd.f32 %v748, %v389
    %v750 = vadd.f32 %v749, %v403
    %v751 = vsel %vm425, %v417, 0.0
    %v752 = vadd.f32 %v750, %v751
    %v753 = vrot.slane %v752, 4
    %v754 = vadd.f32 %v752, %v753
    %v755 = vrot.slane %v754, 2
    %v756 = vadd.f32 %v754, %v755
    %v757 = vrot.slane %v756, 1
    %v758 = vadd.f32 %v756, %v757
    %v759 = vadd.f32 %v334, %v348
    %v760 = vadd.f32 %v759, %v362
    %v761 = vadd.f32 %v760, %v376
    %v762 = vadd.f32 %v761, %v390
    %v763 = vadd.f32 %v762, %v404
    %v764 = vsel %vm425, %v418, 0.0
    %v765 = vadd.f32 %v763, %v764
    %v766 = vrot.slane %v765, 4
    %v767 = vadd.f32 %v765, %v766
    %v768 = vrot.slane %v767, 2
    %v769 = vadd.f32 %v767, %v768
    %v770 = vrot.slane %v769, 1
    %v771 = vadd.f32 %v769, %v770
    %v772 = vadd.f32 %v335, %v349
    %v773 = vadd.f32 %v772, %v363
    %v774 = vadd.f32 %v773, %v377
    %v775 = vadd.f32 %v774, %v391
    %v776 = vadd.f32 %v775, %v405
    %v777 = vsel %vm425, %v419, 0.0
    %v778 = vadd.f32 %v776, %v777
    %v779 = vrot.slane %v778, 4
    %v780 = vadd.f32 %v778, %v779
    %v781 = vrot.slane %v780, 2
    %v782 = vadd.f32 %v780, %v781
    %v783 = vrot.slane %v782, 1
    %v784 = vadd.f32 %v782, %v783
    %v785 = vmul.f32 %v224, %v224
    %v786 = vmul.f32 %v225, %v225
    %v787 = vmul.f32 %v226, %v226
    %v788 = vmul.f32 %v227, %v227
    %v789 = vmul.f32 %v228, %v228
    %v790 = vmul.f32 %v229, %v229
    %v791 = vmul.f32 %v230, %v230
    %v792 = vmul.f32 %v231, %v231
    %v793 = vmul.f32 %v232, %v232
    %v794 = vmul.f32 %v233, %v233
    %v795 = vmul.f32 %v234, %v234
    %v796 = vmul.f32 %v235, %v235
    %v797 = vmul.f32 %v236, %v236
    %v798 = vmul.f32 %v237, %v237
    %v799 = vmul.f32 %v238, %v238
    %v800 = vmul.f32 %v239, %v239
    %v801 = vmul.f32 %v240, %v240
    %v802 = vmul.f32 %v241, %v241
    %v803 = vmul.f32 %v242, %v242
    %v804 = vmul.f32 %v243, %v243
    %v805 = vmul.f32 %v244, %v244
    %v806 = vmul.f32 %v245, %v245
    %v807 = vmul.f32 %v246, %v246
    %v808 = vmul.f32 %v247, %v247
    %v809 = vmul.f32 %v248, %v248
    %v810 = vmul.f32 %v249, %v249
    %v811 = vmul.f32 %v250, %v250
    %v812 = vmul.f32 %v251, %v251
    %v813 = vmul.f32 %v252, %v252
    %v814 = vmul.f32 %v253, %v253
    %v815 = vmul.f32 %v254, %v254
    %v816 = vmul.f32 %v255, %v255
    %v817 = vmul.f32 %v256, %v256
    %v818 = vmul.f32 %v257, %v257
    %v819 = vmul.f32 %v258, %v258
    %v820 = vmul.f32 %v259, %v259
    %v821 = vmul.f32 %v260, %v260
    %v822 = vmul.f32 %v261, %v261
    %v823 = vmul.f32 %v262, %v262
    %v824 = vmul.f32 %v263, %v263
    %v825 = vmul.f32 %v264, %v264
    %v826 = vmul.f32 %v265, %v265
    %v827 = vmul.f32 %v266, %v266
    %v828 = vmul.f32 %v267, %v267
    %v829 = vmul.f32 %v268, %v268
    %v830 = vmul.f32 %v269, %v269
    %v831 = vmul.f32 %v270, %v270
    %v832 = vmul.f32 %v271, %v271
    %v833 = vmul.f32 %v272, %v272
    %v834 = vmul.f32 %v273, %v273
    %v835 = vmul.f32 %v274, %v274
    %v836 = vmul.f32 %v275, %v275
    %v837 = vmul.f32 %v276, %v276
    %v838 = vmul.f32 %v277, %v277
    %v839 = vmul.f32 %v278, %v278
    %v840 = vmul.f32 %v279, %v279
    %v841 = vmul.f32 %v280, %v280
    %v842 = vmul.f32 %v281, %v281
    %v843 = vmul.f32 %v282, %v282
    %v844 = vmul.f32 %v283, %v283
    %v845 = vmul.f32 %v284, %v284
    %v846 = vmul.f32 %v285, %v285
    %v847 = vmul.f32 %v286, %v286
    %v848 = vmul.f32 %v287, %v287
    %v849 = vmul.f32 %v288, %v288
    %v850 = vmul.f32 %v289, %v289
    %v851 = vmul.f32 %v290, %v290
    %v852 = vmul.f32 %v291, %v291
    %v853 = vmul.f32 %v292, %v292
    %v854 = vmul.f32 %v293, %v293
    %v855 = vmul.f32 %v294, %v294
    %v856 = vmul.f32 %v295, %v295
    %v857 = vmul.f32 %v296, %v296
    %v858 = vmul.f32 %v297, %v297
    %v859 = vmul.f32 %v298, %v298
    %v860 = vmul.f32 %v299, %v299
    %v861 = vmul.f32 %v300, %v300
    %v862 = vmul.f32 %v301, %v301
    %v863 = vmul.f32 %v302, %v302
    %v864 = vmul.f32 %v303, %v303
    %v865 = vmul.f32 %v304, %v304
    %v866 = vmul.f32 %v305, %v305
    %v867 = vmul.f32 %v306, %v306
    %v868 = vmul.f32 %v307, %v307
    %v869 = vmul.f32 %v308, %v308
    %v870 = vmul.f32 %v309, %v309
    %v871 = vmul.f32 %v310, %v310
    %v872 = vmul.f32 %v311, %v311
    %v873 = vmul.f32 %v312, %v312
    %v874 = vmul.f32 %v313, %v313
    %v875 = vmul.f32 %v314, %v314
    %v876 = vmul.f32 %v315, %v315
    %v877 = vmul.f32 %v316, %v316
    %v878 = vmul.f32 %v317, %v317
    %v879 = vmul.f32 %v318, %v318
    %v880 = vmul.f32 %v319, %v319
    %v881 = vmul.f32 %v320, %v320
    %v882 = vmul.f32 %v321, %v321
    %v883 = vmul.f32 %v322, %v322
    %v884 = vmul.f32 %v323, %v323
    %v885 = vmul.f32 %v324, %v324
    %v886 = vmul.f32 %v325, %v325
    %v887 = vmul.f32 %v326, %v326
    %v888 = vmul.f32 %v327, %v327
    %v889 = vmul.f32 %v328, %v328
    %v890 = vmul.f32 %v329, %v329
    %v891 = vmul.f32 %v330, %v330
    %v892 = vmul.f32 %v331, %v331
    %v893 = vmul.f32 %v332, %v332
    %v894 = vmul.f32 %v333, %v333
    %v895 = vmul.f32 %v334, %v334
    %v896 = vmul.f32 %v335, %v335
    %v897 = vmul.f32 %v336, %v336
    %v898 = vmul.f32 %v337, %v337
    %v899 = vmul.f32 %v338, %v338
    %v900 = vmul.f32 %v339, %v339
    %v901 = vmul.f32 %v340, %v340
    %v902 = vmul.f32 %v341, %v341
    %v903 = vmul.f32 %v342, %v342
    %v904 = vmul.f32 %v343, %v343
    %v905 = vmul.f32 %v344, %v344
    %v906 = vmul.f32 %v345, %v345
    %v907 = vmul.f32 %v346, %v346
    %v908 = vmul.f32 %v347, %v347
    %v909 = vmul.f32 %v348, %v348
    %v910 = vmul.f32 %v349, %v349
    %v911 = vmul.f32 %v350, %v350
    %v912 = vmul.f32 %v351, %v351
    %v913 = vmul.f32 %v352, %v352
    %v914 = vmul.f32 %v353, %v353
    %v915 = vmul.f32 %v354, %v354
    %v916 = vmul.f32 %v355, %v355
    %v917 = vmul.f32 %v356, %v356
    %v918 = vmul.f32 %v357, %v357
    %v919 = vmul.f32 %v358, %v358
    %v920 = vmul.f32 %v359, %v359
    %v921 = vmul.f32 %v360, %v360
    %v922 = vmul.f32 %v361, %v361
    %v923 = vmul.f32 %v362, %v362
    %v924 = vmul.f32 %v363, %v363
    %v925 = vmul.f32 %v364, %v364
    %v926 = vmul.f32 %v365, %v365
    %v927 = vmul.f32 %v366, %v366
    %v928 = vmul.f32 %v367, %v367
    %v929 = vmul.f32 %v368, %v368
    %v930 = vmul.f32 %v369, %v369
    %v931 = vmul.f32 %v370, %v370
    %v932 = vmul.f32 %v371, %v371
    %v933 = vmul.f32 %v372, %v372
    %v934 = vmul.f32 %v373, %v373
    %v935 = vmul.f32 %v374, %v374
    %v936 = vmul.f32 %v375, %v375
    %v937 = vmul.f32 %v376, %v376
    %v938 = vmul.f32 %v377, %v377
    %v939 = vmul.f32 %v378, %v378
    %v940 = vmul.f32 %v379, %v379
    %v941 = vmul.f32 %v380, %v380
    %v942 = vmul.f32 %v381, %v381
    %v943 = vmul.f32 %v382, %v382
    %v944 = vmul.f32 %v383, %v383
    %v945 = vmul.f32 %v384, %v384
    %v946 = vmul.f32 %v385, %v385
    %v947 = vmul.f32 %v386, %v386
    %v948 = vmul.f32 %v387, %v387
    %v949 = vmul.f32 %v388, %v388
    %v950 = vmul.f32 %v389, %v389
    %v951 = vmul.f32 %v390, %v390
    %v952 = vmul.f32 %v391, %v391
    %v953 = vmul.f32 %v392, %v392
    %v954 = vmul.f32 %v393, %v393
    %v955 = vmul.f32 %v394, %v394
    %v956 = vmul.f32 %v395, %v395
    %v957 = vmul.f32 %v396, %v396
    %v958 = vmul.f32 %v397, %v397
    %v959 = vmul.f32 %v398, %v398
    %v960 = vmul.f32 %v399, %v399
    %v961 = vmul.f32 %v400, %v400
    %v962 = vmul.f32 %v401, %v401
    %v963 = vmul.f32 %v402, %v402
    %v964 = vmul.f32 %v403, %v403
    %v965 = vmul.f32 %v404, %v404
    %v966 = vmul.f32 %v405, %v405
    %v967 = vmul.f32 %v406, %v406
    %v968 = vmul.f32 %v407, %v407
    %v969 = vmul.f32 %v408, %v408
    %v970 = vmul.f32 %v409, %v409
    %v971 = vmul.f32 %v410, %v410
    %v972 = vmul.f32 %v411, %v411
    %v973 = vmul.f32 %v412, %v412
    %v974 = vmul.f32 %v413, %v413
    %v975 = vmul.f32 %v414, %v414
    %v976 = vmul.f32 %v415, %v415
    %v977 = vmul.f32 %v416, %v416
    %v978 = vmul.f32 %v417, %v417
    %v979 = vmul.f32 %v418, %v418
    %v980 = vmul.f32 %v419, %v419
    %v981 = vadd.f32 %v785, %v799
    %v982 = vadd.f32 %v981, %v813
    %v983 = vadd.f32 %v982, %v827
    %v984 = vadd.f32 %v983, %v841
    %v985 = vadd.f32 %v984, %v855
    %v986 = vsel %vm425, %v869, 0.0
    %v987 = vadd.f32 %v985, %v986
    %v988 = vrot.slane %v987, 4
    %v989 = vadd.f32 %v987, %v988
    %v990 = vrot.slane %v989, 2
    %v991 = vadd.f32 %v989, %v990
    %v992 = vrot.slane %v991, 1
    %v993 = vadd.f32 %v991, %v992
    %v994 = vadd.f32 %v786, %v800
    %v995 = vadd.f32 %v994, %v814
    %v996 = vadd.f32 %v995, %v828
    %v997 = vadd.f32 %v996, %v842
    %v998 = vadd.f32 %v997, %v856
    %v999 = vsel %vm425, %v870, 0.0
    %v1000 = vadd.f32 %v998, %v999
    %v1001 = vrot.slane %v1000, 4
    %v1002 = vadd.f32 %v1000, %v1001
    %v1003 = vrot.slane %v1002, 2
    %v1004 = vadd.f32 %v1002, %v1003
    %v1005 = vrot.slane %v1004, 1
    %v1006 = vadd.f32 %v1004, %v1005
    %v1007 = vadd.f32 %v787, %v801
    %v1008 = vadd.f32 %v1007, %v815
    %v1009 = vadd.f32 %v1008, %v829
    %v1010 = vadd.f32 %v1009, %v843
    %v1011 = vadd.f32 %v1010, %v857
    %v1012 = vsel %vm425, %v871, 0.0
    %v1013 = vadd.f32 %v1011, %v1012
    %v1014 = vrot.slane %v1013, 4
    %v1015 = vadd.f32 %v1013, %v1014
    %v1016 = vrot.slane %v1015, 2
    %v1017 = vadd.f32 %v1015, %v1016
    %v1018 = vrot.slane %v1017, 1
    %v1019 = vadd.f32 %v1017, %v1018
    %v1020 = vadd.f32 %v788, %v802
    %v1021 = vadd.f32 %v1020, %v816
    %v1022 = vadd.f32 %v1021, %v830
    %v1023 = vadd.f32 %v1022, %v844
    %v1024 = vadd.f32 %v1023, %v858
    %v1025 = vsel %vm425, %v872, 0.0
    %v1026 = vadd.f32 %v1024, %v1025
    %v1027 = vrot.slane %v1026, 4
    %v1028 = vadd.f32 %v1026, %v1027
    %v1029 = vrot.slane %v1028, 2
    %v1030 = vadd.f32 %v1028, %v1029
    %v1031 = vrot.slane %v1030, 1
    %v1032 = vadd.f32 %v1030, %v1031
    %v1033 = vadd.f32 %v789, %v803
    %v1034 = vadd.f32 %v1033, %v817
    %v1035 = vadd.f32 %v1034, %v831
    %v1036 = vadd.f32 %v1035, %v845
    %v1037 = vadd.f32 %v1036, %v859
    %v1038 = vsel %vm425, %v873, 0.0
    %v1039 = vadd.f32 %v1037, %v1038
    %v1040 = vrot.slane %v1039, 4
    %v1041 = vadd.f32 %v1039, %v1040
    %v1042 = vrot.slane %v1041, 2
    %v1043 = vadd.f32 %v1041, %v1042
    %v1044 = vrot.slane %v1043, 1
    %v1045 = vadd.f32 %v1043, %v1044
    %v1046 = vadd.f32 %v790, %v804
    %v1047 = vadd.f32 %v1046, %v818
    %v1048 = vadd.f32 %v1047, %v832
    %v1049 = vadd.f32 %v1048, %v846
    %v1050 = vadd.f32 %v1049, %v860
    %v1051 = vsel %vm425, %v874, 0.0
    %v1052 = vadd.f32 %v1050, %v1051
    %v1053 = vrot.slane %v1052, 4
    %v1054 = vadd.f32 %v1052, %v1053
    %v1055 = vrot.slane %v1054, 2
    %v1056 = vadd.f32 %v1054, %v1055
    %v1057 = vrot.slane %v1056, 1
    %v1058 = vadd.f32 %v1056, %v1057
    %v1059 = vadd.f32 %v791, %v805
    %v1060 = vadd.f32 %v1059, %v819
    %v1061 = vadd.f32 %v1060, %v833
    %v1062 = vadd.f32 %v1061, %v847
    %v1063 = vadd.f32 %v1062, %v861
    %v1064 = vsel %vm425, %v875, 0.0
    %v1065 = vadd.f32 %v1063, %v1064
    %v1066 = vrot.slane %v1065, 4
    %v1067 = vadd.f32 %v1065, %v1066
    %v1068 = vrot.slane %v1067, 2
    %v1069 = vadd.f32 %v1067, %v1068
    %v1070 = vrot.slane %v1069, 1
    %v1071 = vadd.f32 %v1069, %v1070
    %v1072 = vadd.f32 %v792, %v806
    %v1073 = vadd.f32 %v1072, %v820
    %v1074 = vadd.f32 %v1073, %v834
    %v1075 = vadd.f32 %v1074, %v848
    %v1076 = vadd.f32 %v1075, %v862
    %v1077 = vsel %vm425, %v876, 0.0
    %v1078 = vadd.f32 %v1076, %v1077
    %v1079 = vrot.slane %v1078, 4
    %v1080 = vadd.f32 %v1078, %v1079
    %v1081 = vrot.slane %v1080, 2
    %v1082 = vadd.f32 %v1080, %v1081
    %v1083 = vrot.slane %v1082, 1
    %v1084 = vadd.f32 %v1082, %v1083
    %v1085 = vadd.f32 %v793, %v807
    %v1086 = vadd.f32 %v1085, %v821
    %v1087 = vadd.f32 %v1086, %v835
    %v1088 = vadd.f32 %v1087, %v849
    %v1089 = vadd.f32 %v1088, %v863
    %v1090 = vsel %vm425, %v877, 0.0
    %v1091 = vadd.f32 %v1089, %v1090
    %v1092 = vrot.slane %v1091, 4
    %v1093 = vadd.f32 %v1091, %v1092
    %v1094 = vrot.slane %v1093, 2
    %v1095 = vadd.f32 %v1093, %v1094
    %v1096 = vrot.slane %v1095, 1
    %v1097 = vadd.f32 %v1095, %v1096
    %v1098 = vadd.f32 %v794, %v808
    %v1099 = vadd.f32 %v1098, %v822
    %v1100 = vadd.f32 %v1099, %v836
    %v1101 = vadd.f32 %v1100, %v850
    %v1102 = vadd.f32 %v1101, %v864
    %v1103 = vsel %vm425, %v878, 0.0
    %v1104 = vadd.f32 %v1102, %v1103
    %v1105 = vrot.slane %v1104, 4
    %v1106 = vadd.f32 %v1104, %v1105
    %v1107 = vrot.slane %v1106, 2
    %v1108 = vadd.f32 %v1106, %v1107
    %v1109 = vrot.slane %v1108, 1
    %v1110 = vadd.f32 %v1108, %v1109
    %v1111 = vadd.f32 %v795, %v809
    %v1112 = vadd.f32 %v1111, %v823
    %v1113 = vadd.f32 %v1112, %v837
    %v1114 = vadd.f32 %v1113, %v851
    %v1115 = vadd.f32 %v1114, %v865
    %v1116 = vsel %vm425, %v879, 0.0
    %v1117 = vadd.f32 %v1115, %v1116
    %v1118 = vrot.slane %v1117, 4
    %v1119 = vadd.f32 %v1117, %v1118
    %v1120 = vrot.slane %v1119, 2
    %v1121 = vadd.f32 %v1119, %v1120
    %v1122 = vrot.slane %v1121, 1
    %v1123 = vadd.f32 %v1121, %v1122
    %v1124 = vadd.f32 %v796, %v810
    %v1125 = vadd.f32 %v1124, %v824
    %v1126 = vadd.f32 %v1125, %v838
    %v1127 = vadd.f32 %v1126, %v852
    %v1128 = vadd.f32 %v1127, %v866
    %v1129 = vsel %vm425, %v880, 0.0
    %v1130 = vadd.f32 %v1128, %v1129
    %v1131 = vrot.slane %v1130, 4
    %v1132 = vadd.f32 %v1130, %v1131
    %v1133 = vrot.slane %v1132, 2
    %v1134 = vadd.f32 %v1132, %v1133
    %v1135 = vrot.slane %v1134, 1
    %v1136 = vadd.f32 %v1134, %v1135
    %v1137 = vadd.f32 %v797, %v811
    %v1138 = vadd.f32 %v1137, %v825
    %v1139 = vadd.f32 %v1138, %v839
    %v1140 = vadd.f32 %v1139, %v853
    %v1141 = vadd.f32 %v1140, %v867
    %v1142 = vsel %vm425, %v881, 0.0
    %v1143 = vadd.f32 %v1141, %v1142
    %v1144 = vrot.slane %v1143, 4
    %v1145 = vadd.f32 %v1143, %v1144
    %v1146 = vrot.slane %v1145, 2
    %v1147 = vadd.f32 %v1145, %v1146
    %v1148 = vrot.slane %v1147, 1
    %v1149 = vadd.f32 %v1147, %v1148
    %v1150 = vadd.f32 %v798, %v812
    %v1151 = vadd.f32 %v1150, %v826
    %v1152 = vadd.f32 %v1151, %v840
    %v1153 = vadd.f32 %v1152, %v854
    %v1154 = vadd.f32 %v1153, %v868
    %v1155 = vsel %vm425, %v882, 0.0
    %v1156 = vadd.f32 %v1154, %v1155
    %v1157 = vrot.slane %v1156, 4
    %v1158 = vadd.f32 %v1156, %v1157
    %v1159 = vrot.slane %v1158, 2
    %v1160 = vadd.f32 %v1158, %v1159
    %v1161 = vrot.slane %v1160, 1
    %v1162 = vadd.f32 %v1160, %v1161
    %v1163 = vadd.f32 %v883, %v897
    %v1164 = vadd.f32 %v1163, %v911
    %v1165 = vadd.f32 %v1164, %v925
    %v1166 = vadd.f32 %v1165, %v939
    %v1167 = vadd.f32 %v1166, %v953
    %v1168 = vsel %vm425, %v967, 0.0
    %v1169 = vadd.f32 %v1167, %v1168
    %v1170 = vrot.slane %v1169, 4
    %v1171 = vadd.f32 %v1169, %v1170
    %v1172 = vrot.slane %v1171, 2
    %v1173 = vadd.f32 %v1171, %v1172
    %v1174 = vrot.slane %v1173, 1
    %v1175 = vadd.f32 %v1173, %v1174
    %v1176 = vadd.f32 %v884, %v898
    %v1177 = vadd.f32 %v1176, %v912
    %v1178 = vadd.f32 %v1177, %v926
    %v1179 = vadd.f32 %v1178, %v940
    %v1180 = vadd.f32 %v1179, %v954
    %v1181 = vsel %vm425, %v968, 0.0
    %v1182 = vadd.f32 %v1180, %v1181
    %v1183 = vrot.slane %v1182, 4
    %v1184 = vadd.f32 %v1182, %v1183
    %v1185 = vrot.slane %v1184, 2
    %v1186 = vadd.f32 %v1184, %v1185
    %v1187 = vrot.slane %v1186, 1
    %v1188 = vadd.f32 %v1186, %v1187
    %v1189 = vadd.f32 %v885, %v899
    %v1190 = vadd.f32 %v1189, %v913
    %v1191 = vadd.f32 %v1190, %v927
    %v1192 = vadd.f32 %v1191, %v941
    %v1193 = vadd.f32 %v1192, %v955
    %v1194 = vsel %vm425, %v969, 0.0
    %v1195 = vadd.f32 %v1193, %v1194
    %v1196 = vrot.slane %v1195, 4
    %v1197 = vadd.f32 %v1195, %v1196
    %v1198 = vrot.slane %v1197, 2
    %v1199 = vadd.f32 %v1197, %v1198
    %v1200 = vrot.slane %v1199, 1
    %v1201 = vadd.f32 %v1199, %v1200
    %v1202 = vadd.f32 %v886, %v900
    %v1203 = vadd.f32 %v1202, %v914
    %v1204 = vadd.f32 %v1203, %v928
    %v1205 = vadd.f32 %v1204, %v942
    %v1206 = vadd.f32 %v1205, %v956
    %v1207 = vsel %vm425, %v970, 0.0
    %v1208 = vadd.f32 %v1206, %v1207
    %v1209 = vrot.slane %v1208, 4
    %v1210 = vadd.f32 %v1208, %v1209
    %v1211 = vrot.slane %v1210, 2
    %v1212 = vadd.f32 %v1210, %v1211
    %v1213 = vrot.slane %v1212, 1
    %v1214 = vadd.f32 %v1212, %v1213
    %v1215 = vadd.f32 %v887, %v901
    %v1216 = vadd.f32 %v1215, %v915
    %v1217 = vadd.f32 %v1216, %v929
    %v1218 = vadd.f32 %v1217, %v943
    %v1219 = vadd.f32 %v1218, %v957
    %v1220 = vsel %vm425, %v971, 0.0
    %v1221 = vadd.f32 %v1219, %v1220
    %v1222 = vrot.slane %v1221, 4
    %v1223 = vadd.f32 %v1221, %v1222
    %v1224 = vrot.slane %v1223, 2
    %v1225 = vadd.f32 %v1223, %v1224
    %v1226 = vrot.slane %v1225, 1
    %v1227 = vadd.f32 %v1225, %v1226
    %v1228 = vadd.f32 %v888, %v902
    %v1229 = vadd.f32 %v1228, %v916
    %v1230 = vadd.f32 %v1229, %v930
    %v1231 = vadd.f32 %v1230, %v944
    %v1232 = vadd.f32 %v1231, %v958
    %v1233 = vsel %vm425, %v972, 0.0
    %v1234 = vadd.f32 %v1232, %v1233
    %v1235 = vrot.slane %v1234, 4
    %v1236 = vadd.f32 %v1234, %v1235
    %v1237 = vrot.slane %v1236, 2
    %v1238 = vadd.f32 %v1236, %v1237
    %v1239 = vrot.slane %v1238, 1
    %v1240 = vadd.f32 %v1238, %v1239
    %v1241 = vadd.f32 %v889, %v903
    %v1242 = vadd.f32 %v1241, %v917
    %v1243 = vadd.f32 %v1242, %v931
    %v1244 = vadd.f32 %v1243, %v945
    %v1245 = vadd.f32 %v1244, %v959
    %v1246 = vsel %vm425, %v973, 0.0
    %v1247 = vadd.f32 %v1245, %v1246
    %v1248 = vrot.slane %v1247, 4
    %v1249 = vadd.f32 %v1247, %v1248
    %v1250 = vrot.slane %v1249, 2
    %v1251 = vadd.f32 %v1249, %v1250
    %v1252 = vrot.slane %v1251, 1
    %v1253 = vadd.f32 %v1251, %v1252
    %v1254 = vadd.f32 %v890, %v904
    %v1255 = vadd.f32 %v1254, %v918
    %v1256 = vadd.f32 %v1255, %v932
    %v1257 = vadd.f32 %v1256, %v946
    %v1258 = vadd.f32 %v1257, %v960
    %v1259 = vsel %vm425, %v974, 0.0
    %v1260 = vadd.f32 %v1258, %v1259
    %v1261 = vrot.slane %v1260, 4
    %v1262 = vadd.f32 %v1260, %v1261
    %v1263 = vrot.slane %v1262, 2
    %v1264 = vadd.f32 %v1262, %v1263
    %v1265 = vrot.slane %v1264, 1
    %v1266 = vadd.f32 %v1264, %v1265
    %v1267 = vadd.f32 %v891, %v905
    %v1268 = vadd.f32 %v1267, %v919
    %v1269 = vadd.f32 %v1268, %v933
    %v1270 = vadd.f32 %v1269, %v947
    %v1271 = vadd.f32 %v1270, %v961
    %v1272 = vsel %vm425, %v975, 0.0
    %v1273 = vadd.f32 %v1271, %v1272
    %v1274 = vrot.slane %v1273, 4
    %v1275 = vadd.f32 %v1273, %v1274
    %v1276 = vrot.slane %v1275, 2
    %v1277 = vadd.f32 %v1275, %v1276
    %v1278 = vrot.slane %v1277, 1
    %v1279 = vadd.f32 %v1277, %v1278
    %v1280 = vadd.f32 %v892, %v906
    %v1281 = vadd.f32 %v1280, %v920
    %v1282 = vadd.f32 %v1281, %v934
    %v1283 = vadd.f32 %v1282, %v948
    %v1284 = vadd.f32 %v1283, %v962
    %v1285 = vsel %vm425, %v976, 0.0
    %v1286 = vadd.f32 %v1284, %v1285
    %v1287 = vrot.slane %v1286, 4
    %v1288 = vadd.f32 %v1286, %v1287
    %v1289 = vrot.slane %v1288, 2
    %v1290 = vadd.f32 %v1288, %v1289
    %v1291 = vrot.slane %v1290, 1
    %v1292 = vadd.f32 %v1290, %v1291
    %v1293 = vadd.f32 %v893, %v907
    %v1294 = vadd.f32 %v1293, %v921
    %v1295 = vadd.f32 %v1294, %v935
    %v1296 = vadd.f32 %v1295, %v949
    %v1297 = vadd.f32 %v1296, %v963
    %v1298 = vsel %vm425, %v977, 0.0
    %v1299 = vadd.f32 %v1297, %v1298
    %v1300 = vrot.slane %v1299, 4
    %v1301 = vadd.f32 %v1299, %v1300
    %v1302 = vrot.slane %v1301, 2
    %v1303 = vadd.f32 %v1301, %v1302
    %v1304 = vrot.slane %v1303, 1
    %v1305 = vadd.f32 %v1303, %v1304
    %v1306 = vadd.f32 %v894, %v908
    %v1307 = vadd.f32 %v1306, %v922
    %v1308 = vadd.f32 %v1307, %v936
    %v1309 = vadd.f32 %v1308, %v950
    %v1310 = vadd.f32 %v1309, %v964
    %v1311 = vsel %vm425, %v978, 0.0
    %v1312 = vadd.f32 %v1310, %v1311
    %v1313 = vrot.slane %v1312, 4
    %v1314 = vadd.f32 %v1312, %v1313
    %v1315 = vrot.slane %v1314, 2
    %v1316 = vadd.f32 %v1314, %v1315
    %v1317 = vrot.slane %v1316, 1
    %v1318 = vadd.f32 %v1316, %v1317
    %v1319 = vadd.f32 %v895, %v909
    %v1320 = vadd.f32 %v1319, %v923
    %v1321 = vadd.f32 %v1320, %v937
    %v1322 = vadd.f32 %v1321, %v951
    %v1323 = vadd.f32 %v1322, %v965
    %v1324 = vsel %vm425, %v979, 0.0
    %v1325 = vadd.f32 %v1323, %v1324
    %v1326 = vrot.slane %v1325, 4
    %v1327 = vadd.f32 %v1325, %v1326
    %v1328 = vrot.slane %v1327, 2
    %v1329 = vadd.f32 %v1327, %v1328
    %v1330 = vrot.slane %v1329, 1
    %v1331 = vadd.f32 %v1329, %v1330
    %v1332 = vadd.f32 %v896, %v910
    %v1333 = vadd.f32 %v1332, %v924
    %v1334 = vadd.f32 %v1333, %v938
    %v1335 = vadd.f32 %v1334, %v952
    %v1336 = vadd.f32 %v1335, %v966
    %v1337 = vsel %vm425, %v980, 0.0
    %v1338 = vadd.f32 %v1336, %v1337
    %v1339 = vrot.slane %v1338, 4
    %v1340 = vadd.f32 %v1338, %v1339
    %v1341 = vrot.slane %v1340, 2
    %v1342 = vadd.f32 %v1340, %v1341
    %v1343 = vrot.slane %v1342, 1
    %v1344 = vadd.f32 %v1342, %v1343
    %vm1373 = vcmask 1041409
    %v1374 = vsel %vm1373, %v615, %v433
    %v1375 = vsel %vm1373, %v628, %v446
    %v1376 = vsel %vm1373, %v641, %v459
    %v1377 = vsel %vm1373, %v654, %v472
    %v1378 = vsel %vm1373, %v667, %v485
    %v1379 = vsel %vm1373, %v680, %v498
    %v1380 = vsel %vm1373, %v693, %v511
    %v1381 = vsel %vm1373, %v706, %v524
    %v1382 = vsel %vm1373, %v719, %v537
    %v1383 = vsel %vm1373, %v732, %v550
    %v1384 = vsel %vm1373, %v745, %v563
    %v1385 = vsel %vm1373, %v758, %v576
    %v1386 = vsel %vm1373, %v771, %v589
    %v1387 = vsel %vm1373, %v784, %v602
    %vm1402 = vcmask 1041408
    %v1403 = vsel %vm1402, %v1374, 0.0
    %v1404 = vsel %vm1402, %v1375, 0.0
    %v1405 = vadd.f32 %v1403, %v1404
    %v1406 = vsel %vm1402, %v1376, 0.0
    %v1407 = vadd.f32 %v1405, %v1406
    %v1408 = vsel %vm1402, %v1377, 0.0
    %v1409 = vadd.f32 %v1407, %v1408
    %v1410 = vsel %vm1402, %v1378, 0.0
    %v1411 = vadd.f32 %v1409, %v1410
    %v1412 = vsel %vm1402, %v1379, 0.0
    %v1413 = vadd.f32 %v1411, %v1412
    %v1414 = vsel %vm1402, %v1380, 0.0
    %v1415 = vadd.f32 %v1413, %v1414
    %v1416 = vsel %vm1402, %v1381, 0.0
    %v1417 = vadd.f32 %v1415, %v1416
    %v1418 = vsel %vm1402, %v1382, 0.0
    %v1419 = vadd.f32 %v1417, %v1418
    %v1420 = vsel %vm1402, %v1383, 0.0
    %v1421 = vadd.f32 %v1419, %v1420
    %v1422 = vsel %vm1402, %v1384, 0.0
    %v1423 = vadd.f32 %v1421, %v1422
    %v1424 = vsel %vm1402, %v1385, 0.0
    %v1425 = vadd.f32 %v1423, %v1424
    %v1426 = vsel %vm1402, %v1386, 0.0
    %v1427 = vadd.f32 %v1425, %v1426
    %v1428 = vsel %vm1402, %v1387, 0.0
    %v1429 = vadd.f32 %v1427, %v1428
    %1430 = vadd.xlane.f32.xlu0 %v1429
    %v1431 = vpop.xlane.xlu0 %1430
    %v1432 = vmul.f32 %v1431, 1.1388484e-05
    %v1461 = vsel %vm1373, %v1175, %v993
    %v1462 = vsel %vm1373, %v1188, %v1006
    %v1463 = vsel %vm1373, %v1201, %v1019
    %v1464 = vsel %vm1373, %v1214, %v1032
    %v1465 = vsel %vm1373, %v1227, %v1045
    %v1466 = vsel %vm1373, %v1240, %v1058
    %v1467 = vsel %vm1373, %v1253, %v1071
    %v1468 = vsel %vm1373, %v1266, %v1084
    %v1469 = vsel %vm1373, %v1279, %v1097
    %v1470 = vsel %vm1373, %v1292, %v1110
    %v1471 = vsel %vm1373, %v1305, %v1123
    %v1472 = vsel %vm1373, %v1318, %v1136
    %v1473 = vsel %vm1373, %v1331, %v1149
    %v1474 = vsel %vm1373, %v1344, %v1162
    %v1489 = vsel %vm1402, %v1461, 0.0
    %v1490 = vsel %vm1402, %v1462, 0.0
    %v1491 = vadd.f32 %v1489, %v1490
    %v1492 = vsel %vm1402, %v1463, 0.0
    %v1493 = vadd.f32 %v1491, %v1492
    %v1494 = vsel %vm1402, %v1464, 0.0
    %v1495 = vadd.f32 %v1493, %v1494
    %v1496 = vsel %vm1402, %v1465, 0.0
    %v1497 = vadd.f32 %v1495, %v1496
    %v1498 = vsel %vm1402, %v1466, 0.0
    %v1499 = vadd.f32 %v1497, %v1498
    %v1500 = vsel %vm1402, %v1467, 0.0
    %v1501 = vadd.f32 %v1499, %v1500
    %v1502 = vsel %vm1402, %v1468, 0.0
    %v1503 = vadd.f32 %v1501, %v1502
    %v1504 = vsel %vm1402, %v1469, 0.0
    %v1505 = vadd.f32 %v1503, %v1504
    %v1506 = vsel %vm1402, %v1470, 0.0
    %v1507 = vadd.f32 %v1505, %v1506
    %v1508 = vsel %vm1402, %v1471, 0.0
    %v1509 = vadd.f32 %v1507, %v1508
    %v1510 = vsel %vm1402, %v1472, 0.0
    %v1511 = vadd.f32 %v1509, %v1510
    %v1512 = vsel %vm1402, %v1473, 0.0
    %v1513 = vadd.f32 %v1511, %v1512
    %v1514 = vsel %vm1402, %v1474, 0.0
    %v1515 = vadd.f32 %v1513, %v1514
    %1516 = vadd.xlane.f32.xlu0 %v1515
    %v1517 = vpop.xlane.xlu0 %1516
    %v1518 = vmul.f32 %v1517, 1.1388484e-05
    %v1519 = vmul.f32 %v1432, %v1432
    %v1520 = vsub.f32 %v1518, %v1519
    %v1521 = vmax.f32 %v1520, 0.0
    %v1522 = vadd.f32 %v1521, 1e-05
    %v1523 = vrsqrt.pop %v1522
    %v1524 = vmul.f32 %v1523, %v1522
    %v1525 = vmul.f32 %v1524, %v1523
    %v1526 = vmul.f32 0.5, %v1525
    %v1527 = vsub.f32 1.5, %v1526
    %v1528 = vmul.f32 %v1523, %v1527
    %vm1529 = vweird.f32 %v1522
    %vm1530 = vweird.f32 %v1523
    %vm1531 = vmor %vm1529, %vm1530
    %v1532 = vsel %vm1531, %v1523, %v1528
    %v1533 = vld [vmem:[#allocation5] sm:$0xff]
    %v1534 = vld [vmem:[#allocation5 + $0x8] sm:$0xff]
    %v1535 = vld [vmem:[#allocation5 + $0x10] sm:$0xff]
    %v1536 = vld [vmem:[#allocation5 + $0x18] sm:$0xff]
    %v1537 = vld [vmem:[#allocation5 + $0x20] sm:$0xff]
    %v1538 = vld [vmem:[#allocation5 + $0x28] sm:$0xff]
    %v1539 = vld [vmem:[#allocation5 + $0x30] sm:$0xff]
    %v1540 = vld [vmem:[#allocation5 + $0x38] sm:$0xff]
    %v1541 = vld [vmem:[#allocation5 + $0x40] sm:$0xff]
    %v1542 = vld [vmem:[#allocation5 + $0x48] sm:$0xff]
    %v1543 = vld [vmem:[#allocation5 + $0x50] sm:$0xff]
    %v1544 = vld [vmem:[#allocation5 + $0x58] sm:$0xff]
    %v1545 = vld [vmem:[#allocation5 + $0x60] sm:$0xff]
    %v1546 = vld [vmem:[#allocation5 + $0x68] sm:$0xff]
    %v1547 = vld [vmem:[#allocation5 + $0x70] sm:$0xff]
    %v1548 = vld [vmem:[#allocation5 + $0x78] sm:$0xff]
    %v1549 = vld [vmem:[#allocation5 + $0x80] sm:$0xff]
    %v1550 = vld [vmem:[#allocation5 + $0x88] sm:$0xff]
    %v1551 = vld [vmem:[#allocation5 + $0x90] sm:$0xff]
    %v1552 = vld [vmem:[#allocation5 + $0x98] sm:$0xff]
    %v1553 = vld [vmem:[#allocation5 + $0xa0] sm:$0xff]
    %v1554 = vld [vmem:[#allocation5 + $0xa8] sm:$0xff]
    %v1555 = vld [vmem:[#allocation5 + $0xb0] sm:$0xff]
    %v1556 = vld [vmem:[#allocation5 + $0xb8] sm:$0xff]
    %v1557 = vld [vmem:[#allocation5 + $0xc0] sm:$0xff]
    %v1558 = vld [vmem:[#allocation5 + $0xc8] sm:$0xff]
    %v1559 = vld [vmem:[#allocation5 + $0xd0] sm:$0xff]
    %v1560 = vld [vmem:[#allocation5 + $0xd8] sm:$0xff]
    %v1561 = vld [vmem:[#allocation5 + $0xe0] sm:$0xff]
    %v1562 = vld [vmem:[#allocation5 + $0xe8] sm:$0xff]
    %v1563 = vld [vmem:[#allocation5 + $0xf0] sm:$0xff]
    %v1564 = vld [vmem:[#allocation5 + $0xf8] sm:$0xff]
    %v1565 = vld [vmem:[#allocation5 + $0x100] sm:$0xff]
    %v1566 = vld [vmem:[#allocation5 + $0x108] sm:$0xff]
    %v1567 = vld [vmem:[#allocation5 + $0x110] sm:$0xff]
    %v1568 = vld [vmem:[#allocation5 + $0x118] sm:$0xff]
    %v1569 = vld [vmem:[#allocation5 + $0x120] sm:$0xff]
    %v1570 = vld [vmem:[#allocation5 + $0x128] sm:$0xff]
    %v1571 = vld [vmem:[#allocation5 + $0x130] sm:$0xff]
    %v1572 = vld [vmem:[#allocation5 + $0x138] sm:$0xff]
    %v1573 = vld [vmem:[#allocation5 + $0x140] sm:$0xff]
    %v1574 = vld [vmem:[#allocation5 + $0x148] sm:$0xff]
    %v1575 = vld [vmem:[#allocation5 + $0x150] sm:$0xff]
    %v1576 = vld [vmem:[#allocation5 + $0x158] sm:$0xff]
    %v1577 = vld [vmem:[#allocation5 + $0x160] sm:$0xff]
    %v1578 = vld [vmem:[#allocation5 + $0x168] sm:$0xff]
    %v1579 = vld [vmem:[#allocation5 + $0x170] sm:$0xff]
    %v1580 = vld [vmem:[#allocation5 + $0x178] sm:$0xff]
    %v1581 = vld [vmem:[#allocation5 + $0x180] sm:$0xff]
    %v1582 = vld [vmem:[#allocation5 + $0x188] sm:$0xff]
    %v1583 = vld [vmem:[#allocation5 + $0x190] sm:$0xff]
    %v1584 = vld [vmem:[#allocation5 + $0x198] sm:$0xff]
    %v1585 = vld [vmem:[#allocation5 + $0x1a0] sm:$0xff]
    %v1586 = vld [vmem:[#allocation5 + $0x1a8] sm:$0xff]
    %v1587 = vld [vmem:[#allocation5 + $0x1b0] sm:$0xff]
    %v1588 = vld [vmem:[#allocation5 + $0x1b8] sm:$0xff]
    %v1589 = vld [vmem:[#allocation5 + $0x1c0] sm:$0xff]
    %v1590 = vld [vmem:[#allocation5 + $0x1c8] sm:$0xff]
    %v1591 = vld [vmem:[#allocation5 + $0x1d0] sm:$0xff]
    %v1592 = vld [vmem:[#allocation5 + $0x1d8] sm:$0xff]
    %v1593 = vld [vmem:[#allocation5 + $0x1e0] sm:$0xff]
    %v1594 = vld [vmem:[#allocation5 + $0x1e8] sm:$0xff]
    %v1595 = vld [vmem:[#allocation5 + $0x1f0] sm:$0xff]
    %v1596 = vld [vmem:[#allocation5 + $0x1f8] sm:$0xff]
    %v1597 = vld [vmem:[#allocation5 + $0x200] sm:$0xff]
    %v1598 = vld [vmem:[#allocation5 + $0x208] sm:$0xff]
    %v1599 = vld [vmem:[#allocation5 + $0x210] sm:$0xff]
    %v1600 = vld [vmem:[#allocation5 + $0x218] sm:$0xff]
    %v1601 = vld [vmem:[#allocation5 + $0x220] sm:$0xff]
    %v1602 = vld [vmem:[#allocation5 + $0x228] sm:$0xff]
    %v1603 = vld [vmem:[#allocation5 + $0x230] sm:$0xff]
    %v1604 = vld [vmem:[#allocation5 + $0x238] sm:$0xff]
    %v1605 = vld [vmem:[#allocation5 + $0x240] sm:$0xff]
    %v1606 = vld [vmem:[#allocation5 + $0x248] sm:$0xff]
    %v1607 = vld [vmem:[#allocation5 + $0x250] sm:$0xff]
    %v1608 = vld [vmem:[#allocation5 + $0x258] sm:$0xff]
    %v1609 = vld [vmem:[#allocation5 + $0x260] sm:$0xff]
    %v1610 = vld [vmem:[#allocation5 + $0x268] sm:$0xff]
    %v1611 = vld [vmem:[#allocation5 + $0x270] sm:$0xff]
    %v1612 = vld [vmem:[#allocation5 + $0x278] sm:$0xff]
    %v1613 = vld [vmem:[#allocation5 + $0x280] sm:$0xff]
    %v1614 = vld [vmem:[#allocation5 + $0x288] sm:$0xff]
    %v1615 = vld [vmem:[#allocation5 + $0x290] sm:$0xff]
    %v1616 = vld [vmem:[#allocation5 + $0x298] sm:$0xff]
    %v1617 = vld [vmem:[#allocation5 + $0x2a0] sm:$0x1]
    %v1618 = vld [vmem:[#allocation5 + $0x2a8] sm:$0x1]
    %v1619 = vld [vmem:[#allocation5 + $0x2b0] sm:$0x1]
    %v1620 = vld [vmem:[#allocation5 + $0x2b8] sm:$0x1]
    %v1621 = vld [vmem:[#allocation5 + $0x2c0] sm:$0x1]
    %v1622 = vld [vmem:[#allocation5 + $0x2c8] sm:$0x1]
    %v1623 = vld [vmem:[#allocation5 + $0x2d0] sm:$0x1]
    %v1624 = vld [vmem:[#allocation5 + $0x2d8] sm:$0x1]
    %v1625 = vld [vmem:[#allocation5 + $0x2e0] sm:$0x1]
    %v1626 = vld [vmem:[#allocation5 + $0x2e8] sm:$0x1]
    %v1627 = vld [vmem:[#allocation5 + $0x2f0] sm:$0x1]
    %v1628 = vld [vmem:[#allocation5 + $0x2f8] sm:$0x1]
    %v1629 = vld [vmem:[#allocation5 + $0x300] sm:$0x1]
    %v1630 = vld [vmem:[#allocation5 + $0x308] sm:$0x1]
    %v1631 = vmul.f32 %v224, %v1533
    %v1632 = vmul.f32 %v225, %v1534
    %v1633 = vmul.f32 %v226, %v1535
    %v1634 = vmul.f32 %v227, %v1536
    %v1635 = vmul.f32 %v228, %v1537
    %v1636 = vmul.f32 %v229, %v1538
    %v1637 = vmul.f32 %v230, %v1539
    %v1638 = vmul.f32 %v231, %v1540
    %v1639 = vmul.f32 %v232, %v1541
    %v1640 = vmul.f32 %v233, %v1542
    %v1641 = vmul.f32 %v234, %v1543
    %v1642 = vmul.f32 %v235, %v1544
    %v1643 = vmul.f32 %v236, %v1545
    %v1644 = vmul.f32 %v237, %v1546
    %v1645 = vmul.f32 %v238, %v1547
    %v1646 = vmul.f32 %v239, %v1548
    %v1647 = vmul.f32 %v240, %v1549
    %v1648 = vmul.f32 %v241, %v1550
    %v1649 = vmul.f32 %v242, %v1551
    %v1650 = vmul.f32 %v243, %v1552
    %v1651 = vmul.f32 %v244, %v1553
    %v1652 = vmul.f32 %v245, %v1554
    %v1653 = vmul.f32 %v246, %v1555
    %v1654 = vmul.f32 %v247, %v1556
    %v1655 = vmul.f32 %v248, %v1557
    %v1656 = vmul.f32 %v249, %v1558
    %v1657 = vmul.f32 %v250, %v1559
    %v1658 = vmul.f32 %v251, %v1560
    %v1659 = vmul.f32 %v252, %v1561
    %v1660 = vmul.f32 %v253, %v1562
    %v1661 = vmul.f32 %v254, %v1563
    %v1662 = vmul.f32 %v255, %v1564
    %v1663 = vmul.f32 %v256, %v1565
    %v1664 = vmul.f32 %v257, %v1566
    %v1665 = vmul.f32 %v258, %v1567
    %v1666 = vmul.f32 %v259, %v1568
    %v1667 = vmul.f32 %v260, %v1569
    %v1668 = vmul.f32 %v261, %v1570
    %v1669 = vmul.f32 %v262, %v1571
    %v1670 = vmul.f32 %v263, %v1572
    %v1671 = vmul.f32 %v264, %v1573
    %v1672 = vmul.f32 %v265, %v1574
    %v1673 = vmul.f32 %v266, %v1575
    %v1674 = vmul.f32 %v267, %v1576
    %v1675 = vmul.f32 %v268, %v1577
    %v1676 = vmul.f32 %v269, %v1578
    %v1677 = vmul.f32 %v270, %v1579
    %v1678 = vmul.f32 %v271, %v1580
    %v1679 = vmul.f32 %v272, %v1581
    %v1680 = vmul.f32 %v273, %v1582
    %v1681 = vmul.f32 %v274, %v1583
    %v1682 = vmul.f32 %v275, %v1584
    %v1683 = vmul.f32 %v276, %v1585
    %v1684 = vmul.f32 %v277, %v1586
    %v1685 = vmul.f32 %v278, %v1587
    %v1686 = vmul.f32 %v279, %v1588
    %v1687 = vmul.f32 %v280, %v1589
    %v1688 = vmul.f32 %v281, %v1590
    %v1689 = vmul.f32 %v282, %v1591
    %v1690 = vmul.f32 %v283, %v1592
    %v1691 = vmul.f32 %v284, %v1593
    %v1692 = vmul.f32 %v285, %v1594
    %v1693 = vmul.f32 %v286, %v1595
    %v1694 = vmul.f32 %v287, %v1596
    %v1695 = vmul.f32 %v288, %v1597
    %v1696 = vmul.f32 %v289, %v1598
    %v1697 = vmul.f32 %v290, %v1599
    %v1698 = vmul.f32 %v291, %v1600
    %v1699 = vmul.f32 %v292, %v1601
    %v1700 = vmul.f32 %v293, %v1602
    %v1701 = vmul.f32 %v294, %v1603
    %v1702 = vmul.f32 %v295, %v1604
    %v1703 = vmul.f32 %v296, %v1605
    %v1704 = vmul.f32 %v297, %v1606
    %v1705 = vmul.f32 %v298, %v1607
    %v1706 = vmul.f32 %v299, %v1608
    %v1707 = vmul.f32 %v300, %v1609
    %v1708 = vmul.f32 %v301, %v1610
    %v1709 = vmul.f32 %v302, %v1611
    %v1710 = vmul.f32 %v303, %v1612
    %v1711 = vmul.f32 %v304, %v1613
    %v1712 = vmul.f32 %v305, %v1614
    %v1713 = vmul.f32 %v306, %v1615
    %v1714 = vmul.f32 %v307, %v1616
    %v1715 = vmul.f32 %v308, %v1617
    %v1716 = vmul.f32 %v309, %v1618
    %v1717 = vmul.f32 %v310, %v1619
    %v1718 = vmul.f32 %v311, %v1620
    %v1719 = vmul.f32 %v312, %v1621
    %v1720 = vmul.f32 %v313, %v1622
    %v1721 = vmul.f32 %v314, %v1623
    %v1722 = vmul.f32 %v315, %v1624
    %v1723 = vmul.f32 %v316, %v1625
    %v1724 = vmul.f32 %v317, %v1626
    %v1725 = vmul.f32 %v318, %v1627
    %v1726 = vmul.f32 %v319, %v1628
    %v1727 = vmul.f32 %v320, %v1629
    %v1728 = vmul.f32 %v321, %v1630
    %v1729 = vmul.f32 %v322, %v1533
    %v1730 = vmul.f32 %v323, %v1534
    %v1731 = vmul.f32 %v324, %v1535
    %v1732 = vmul.f32 %v325, %v1536
    %v1733 = vmul.f32 %v326, %v1537
    %v1734 = vmul.f32 %v327, %v1538
    %v1735 = vmul.f32 %v328, %v1539
    %v1736 = vmul.f32 %v329, %v1540
    %v1737 = vmul.f32 %v330, %v1541
    %v1738 = vmul.f32 %v331, %v1542
    %v1739 = vmul.f32 %v332, %v1543
    %v1740 = vmul.f32 %v333, %v1544
    %v1741 = vmul.f32 %v334, %v1545
    %v1742 = vmul.f32 %v335, %v1546
    %v1743 = vmul.f32 %v336, %v1547
    %v1744 = vmul.f32 %v337, %v1548
    %v1745 = vmul.f32 %v338, %v1549
    %v1746 = vmul.f32 %v339, %v1550
    %v1747 = vmul.f32 %v340, %v1551
    %v1748 = vmul.f32 %v341, %v1552
    %v1749 = vmul.f32 %v342, %v1553
    %v1750 = vmul.f32 %v343, %v1554
    %v1751 = vmul.f32 %v344, %v1555
    %v1752 = vmul.f32 %v345, %v1556
    %v1753 = vmul.f32 %v346, %v1557
    %v1754 = vmul.f32 %v347, %v1558
    %v1755 = vmul.f32 %v348, %v1559
    %v1756 = vmul.f32 %v349, %v1560
    %v1757 = vmul.f32 %v350, %v1561
    %v1758 = vmul.f32 %v351, %v1562
    %v1759 = vmul.f32 %v352, %v1563
    %v1760 = vmul.f32 %v353, %v1564
    %v1761 = vmul.f32 %v354, %v1565
    %v1762 = vmul.f32 %v355, %v1566
    %v1763 = vmul.f32 %v356, %v1567
    %v1764 = vmul.f32 %v357, %v1568
    %v1765 = vmul.f32 %v358, %v1569
    %v1766 = vmul.f32 %v359, %v1570
    %v1767 = vmul.f32 %v360, %v1571
    %v1768 = vmul.f32 %v361, %v1572
    %v1769 = vmul.f32 %v362, %v1573
    %v1770 = vmul.f32 %v363, %v1574
    %v1771 = vmul.f32 %v364, %v1575
    %v1772 = vmul.f32 %v365, %v1576
    %v1773 = vmul.f32 %v366, %v1577
    %v1774 = vmul.f32 %v367, %v1578
    %v1775 = vmul.f32 %v368, %v1579
    %v1776 = vmul.f32 %v369, %v1580
    %v1777 = vmul.f32 %v370, %v1581
    %v1778 = vmul.f32 %v371, %v1582
    %v1779 = vmul.f32 %v372, %v1583
    %v1780 = vmul.f32 %v373, %v1584
    %v1781 = vmul.f32 %v374, %v1585
    %v1782 = vmul.f32 %v375, %v1586
    %v1783 = vmul.f32 %v376, %v1587
    %v1784 = vmul.f32 %v377, %v1588
    %v1785 = vmul.f32 %v378, %v1589
    %v1786 = vmul.f32 %v379, %v1590
    %v1787 = vmul.f32 %v380, %v1591
    %v1788 = vmul.f32 %v381, %v1592
    %v1789 = vmul.f32 %v382, %v1593
    %v1790 = vmul.f32 %v383, %v1594
    %v1791 = vmul.f32 %v384, %v1595
    %v1792 = vmul.f32 %v385, %v1596
    %v1793 = vmul.f32 %v386, %v1597
    %v1794 = vmul.f32 %v387, %v1598
    %v1795 = vmul.f32 %v388, %v1599
    %v1796 = vmul.f32 %v389, %v1600
    %v1797 = vmul.f32 %v390, %v1601
    %v1798 = vmul.f32 %v391, %v1602
    %v1799 = vmul.f32 %v392, %v1603
    %v1800 = vmul.f32 %v393, %v1604
    %v1801 = vmul.f32 %v394, %v1605
    %v1802 = vmul.f32 %v395, %v1606
    %v1803 = vmul.f32 %v396, %v1607
    %v1804 = vmul.f32 %v397, %v1608
    %v1805 = vmul.f32 %v398, %v1609
    %v1806 = vmul.f32 %v399, %v1610
    %v1807 = vmul.f32 %v400, %v1611
    %v1808 = vmul.f32 %v401, %v1612
    %v1809 = vmul.f32 %v402, %v1613
    %v1810 = vmul.f32 %v403, %v1614
    %v1811 = vmul.f32 %v404, %v1615
    %v1812 = vmul.f32 %v405, %v1616
    %v1813 = vmul.f32 %v406, %v1617
    %v1814 = vmul.f32 %v407, %v1618
    %v1815 = vmul.f32 %v408, %v1619
    %v1816 = vmul.f32 %v409, %v1620
    %v1817 = vmul.f32 %v410, %v1621
    %v1818 = vmul.f32 %v411, %v1622
    %v1819 = vmul.f32 %v412, %v1623
    %v1820 = vmul.f32 %v413, %v1624
    %v1821 = vmul.f32 %v414, %v1625
    %v1822 = vmul.f32 %v415, %v1626
    %v1823 = vmul.f32 %v416, %v1627
    %v1824 = vmul.f32 %v417, %v1628
    %v1825 = vmul.f32 %v418, %v1629
    %v1826 = vmul.f32 %v419, %v1630
    %v1827 = vadd.f32 %v1631, %v1645
    %v1828 = vadd.f32 %v1827, %v1659
    %v1829 = vadd.f32 %v1828, %v1673
    %v1830 = vadd.f32 %v1829, %v1687
    %v1831 = vadd.f32 %v1830, %v1701
    %v1832 = vsel %vm425, %v1715, 0.0
    %v1833 = vadd.f32 %v1831, %v1832
    %v1834 = vrot.slane %v1833, 4
    %v1835 = vadd.f32 %v1833, %v1834
    %v1836 = vrot.slane %v1835, 2
    %v1837 = vadd.f32 %v1835, %v1836
    %v1838 = vrot.slane %v1837, 1
    %v1839 = vadd.f32 %v1837, %v1838
    %v1840 = vadd.f32 %v1632, %v1646
    %v1841 = vadd.f32 %v1840, %v1660
    %v1842 = vadd.f32 %v1841, %v1674
    %v1843 = vadd.f32 %v1842, %v1688
    %v1844 = vadd.f32 %v1843, %v1702
    %v1845 = vsel %vm425, %v1716, 0.0
    %v1846 = vadd.f32 %v1844, %v1845
    %v1847 = vrot.slane %v1846, 4
    %v1848 = vadd.f32 %v1846, %v1847
    %v1849 = vrot.slane %v1848, 2
    %v1850 = vadd.f32 %v1848, %v1849
    %v1851 = vrot.slane %v1850, 1
    %v1852 = vadd.f32 %v1850, %v1851
    %v1853 = vadd.f32 %v1633, %v1647
    %v1854 = vadd.f32 %v1853, %v1661
    %v1855 = vadd.f32 %v1854, %v1675
    %v1856 = vadd.f32 %v1855, %v1689
    %v1857 = vadd.f32 %v1856, %v1703
    %v1858 = vsel %vm425, %v1717, 0.0
    %v1859 = vadd.f32 %v1857, %v1858
    %v1860 = vrot.slane %v1859, 4
    %v1861 = vadd.f32 %v1859, %v1860
    %v1862 = vrot.slane %v1861, 2
    %v1863 = vadd.f32 %v1861, %v1862
    %v1864 = vrot.slane %v1863, 1
    %v1865 = vadd.f32 %v1863, %v1864
    %v1866 = vadd.f32 %v1634, %v1648
    %v1867 = vadd.f32 %v1866, %v1662
    %v1868 = vadd.f32 %v1867, %v1676
    %v1869 = vadd.f32 %v1868, %v1690
    %v1870 = vadd.f32 %v1869, %v1704
    %v1871 = vsel %vm425, %v1718, 0.0
    %v1872 = vadd.f32 %v1870, %v1871
    %v1873 = vrot.slane %v1872, 4
    %v1874 = vadd.f32 %v1872, %v1873
    %v1875 = vrot.slane %v1874, 2
    %v1876 = vadd.f32 %v1874, %v1875
    %v1877 = vrot.slane %v1876, 1
    %v1878 = vadd.f32 %v1876, %v1877
    %v1879 = vadd.f32 %v1635, %v1649
    %v1880 = vadd.f32 %v1879, %v1663
    %v1881 = vadd.f32 %v1880, %v1677
    %v1882 = vadd.f32 %v1881, %v1691
    %v1883 = vadd.f32 %v1882, %v1705
    %v1884 = vsel %vm425, %v1719, 0.0
    %v1885 = vadd.f32 %v1883, %v1884
    %v1886 = vrot.slane %v1885, 4
    %v1887 = vadd.f32 %v1885, %v1886
    %v1888 = vrot.slane %v1887, 2
    %v1889 = vadd.f32 %v1887, %v1888
    %v1890 = vrot.slane %v1889, 1
    %v1891 = vadd.f32 %v1889, %v1890
    %v1892 = vadd.f32 %v1636, %v1650
    %v1893 = vadd.f32 %v1892, %v1664
    %v1894 = vadd.f32 %v1893, %v1678
    %v1895 = vadd.f32 %v1894, %v1692
    %v1896 = vadd.f32 %v1895, %v1706
    %v1897 = vsel %vm425, %v1720, 0.0
    %v1898 = vadd.f32 %v1896, %v1897
    %v1899 = vrot.slane %v1898, 4
    %v1900 = vadd.f32 %v1898, %v1899
    %v1901 = vrot.slane %v1900, 2
    %v1902 = vadd.f32 %v1900, %v1901
    %v1903 = vrot.slane %v1902, 1
    %v1904 = vadd.f32 %v1902, %v1903
    %v1905 = vadd.f32 %v1637, %v1651
    %v1906 = vadd.f32 %v1905, %v1665
    %v1907 = vadd.f32 %v1906, %v1679
    %v1908 = vadd.f32 %v1907, %v1693
    %v1909 = vadd.f32 %v1908, %v1707
    %v1910 = vsel %vm425, %v1721, 0.0
    %v1911 = vadd.f32 %v1909, %v1910
    %v1912 = vrot.slane %v1911, 4
    %v1913 = vadd.f32 %v1911, %v1912
    %v1914 = vrot.slane %v1913, 2
    %v1915 = vadd.f32 %v1913, %v1914
    %v1916 = vrot.slane %v1915, 1
    %v1917 = vadd.f32 %v1915, %v1916
    %v1918 = vadd.f32 %v1638, %v1652
    %v1919 = vadd.f32 %v1918, %v1666
    %v1920 = vadd.f32 %v1919, %v1680
    %v1921 = vadd.f32 %v1920, %v1694
    %v1922 = vadd.f32 %v1921, %v1708
    %v1923 = vsel %vm425, %v1722, 0.0
    %v1924 = vadd.f32 %v1922, %v1923
    %v1925 = vrot.slane %v1924, 4
    %v1926 = vadd.f32 %v1924, %v1925
    %v1927 = vrot.slane %v1926, 2
    %v1928 = vadd.f32 %v1926, %v1927
    %v1929 = vrot.slane %v1928, 1
    %v1930 = vadd.f32 %v1928, %v1929
    %v1931 = vadd.f32 %v1639, %v1653
    %v1932 = vadd.f32 %v1931, %v1667
    %v1933 = vadd.f32 %v1932, %v1681
    %v1934 = vadd.f32 %v1933, %v1695
    %v1935 = vadd.f32 %v1934, %v1709
    %v1936 = vsel %vm425, %v1723, 0.0
    %v1937 = vadd.f32 %v1935, %v1936
    %v1938 = vrot.slane %v1937, 4
    %v1939 = vadd.f32 %v1937, %v1938
    %v1940 = vrot.slane %v1939, 2
    %v1941 = vadd.f32 %v1939, %v1940
    %v1942 = vrot.slane %v1941, 1
    %v1943 = vadd.f32 %v1941, %v1942
    %v1944 = vadd.f32 %v1640, %v1654
    %v1945 = vadd.f32 %v1944, %v1668
    %v1946 = vadd.f32 %v1945, %v1682
    %v1947 = vadd.f32 %v1946, %v1696
    %v1948 = vadd.f32 %v1947, %v1710
    %v1949 = vsel %vm425, %v1724, 0.0
    %v1950 = vadd.f32 %v1948, %v1949
    %v1951 = vrot.slane %v1950, 4
    %v1952 = vadd.f32 %v1950, %v1951
    %v1953 = vrot.slane %v1952, 2
    %v1954 = vadd.f32 %v1952, %v1953
    %v1955 = vrot.slane %v1954, 1
    %v1956 = vadd.f32 %v1954, %v1955
    %v1957 = vadd.f32 %v1641, %v1655
    %v1958 = vadd.f32 %v1957, %v1669
    %v1959 = vadd.f32 %v1958, %v1683
    %v1960 = vadd.f32 %v1959, %v1697
    %v1961 = vadd.f32 %v1960, %v1711
    %v1962 = vsel %vm425, %v1725, 0.0
    %v1963 = vadd.f32 %v1961, %v1962
    %v1964 = vrot.slane %v1963, 4
    %v1965 = vadd.f32 %v1963, %v1964
    %v1966 = vrot.slane %v1965, 2
    %v1967 = vadd.f32 %v1965, %v1966
    %v1968 = vrot.slane %v1967, 1
    %v1969 = vadd.f32 %v1967, %v1968
    %v1970 = vadd.f32 %v1642, %v1656
    %v1971 = vadd.f32 %v1970, %v1670
    %v1972 = vadd.f32 %v1971, %v1684
    %v1973 = vadd.f32 %v1972, %v1698
    %v1974 = vadd.f32 %v1973, %v1712
    %v1975 = vsel %vm425, %v1726, 0.0
    %v1976 = vadd.f32 %v1974, %v1975
    %v1977 = vrot.slane %v1976, 4
    %v1978 = vadd.f32 %v1976, %v1977
    %v1979 = vrot.slane %v1978, 2
    %v1980 = vadd.f32 %v1978, %v1979
    %v1981 = vrot.slane %v1980, 1
    %v1982 = vadd.f32 %v1980, %v1981
    %v1983 = vadd.f32 %v1643, %v1657
    %v1984 = vadd.f32 %v1983, %v1671
    %v1985 = vadd.f32 %v1984, %v1685
    %v1986 = vadd.f32 %v1985, %v1699
    %v1987 = vadd.f32 %v1986, %v1713
    %v1988 = vsel %vm425, %v1727, 0.0
    %v1989 = vadd.f32 %v1987, %v1988
    %v1990 = vrot.slane %v1989, 4
    %v1991 = vadd.f32 %v1989, %v1990
    %v1992 = vrot.slane %v1991, 2
    %v1993 = vadd.f32 %v1991, %v1992
    %v1994 = vrot.slane %v1993, 1
    %v1995 = vadd.f32 %v1993, %v1994
    %v1996 = vadd.f32 %v1644, %v1658
    %v1997 = vadd.f32 %v1996, %v1672
    %v1998 = vadd.f32 %v1997, %v1686
    %v1999 = vadd.f32 %v1998, %v1700
    %v2000 = vadd.f32 %v1999, %v1714
    %v2001 = vsel %vm425, %v1728, 0.0
    %v2002 = vadd.f32 %v2000, %v2001
    %v2003 = vrot.slane %v2002, 4
    %v2004 = vadd.f32 %v2002, %v2003
    %v2005 = vrot.slane %v2004, 2
    %v2006 = vadd.f32 %v2004, %v2005
    %v2007 = vrot.slane %v2006, 1
    %v2008 = vadd.f32 %v2006, %v2007
    %v2009 = vadd.f32 %v1729, %v1743
    %v2010 = vadd.f32 %v2009, %v1757
    %v2011 = vadd.f32 %v2010, %v1771
    %v2012 = vadd.f32 %v2011, %v1785
    %v2013 = vadd.f32 %v2012, %v1799
    %v2014 = vsel %vm425, %v1813, 0.0
    %v2015 = vadd.f32 %v2013, %v2014
    %v2016 = vrot.slane %v2015, 4
    %v2017 = vadd.f32 %v2015, %v2016
    %v2018 = vrot.slane %v2017, 2
    %v2019 = vadd.f32 %v2017, %v2018
    %v2020 = vrot.slane %v2019, 1
    %v2021 = vadd.f32 %v2019, %v2020
    %v2022 = vadd.f32 %v1730, %v1744
    %v2023 = vadd.f32 %v2022, %v1758
    %v2024 = vadd.f32 %v2023, %v1772
    %v2025 = vadd.f32 %v2024, %v1786
    %v2026 = vadd.f32 %v2025, %v1800
    %v2027 = vsel %vm425, %v1814, 0.0
    %v2028 = vadd.f32 %v2026, %v2027
    %v2029 = vrot.slane %v2028, 4
    %v2030 = vadd.f32 %v2028, %v2029
    %v2031 = vrot.slane %v2030, 2
    %v2032 = vadd.f32 %v2030, %v2031
    %v2033 = vrot.slane %v2032, 1
    %v2034 = vadd.f32 %v2032, %v2033
    %v2035 = vadd.f32 %v1731, %v1745
    %v2036 = vadd.f32 %v2035, %v1759
    %v2037 = vadd.f32 %v2036, %v1773
    %v2038 = vadd.f32 %v2037, %v1787
    %v2039 = vadd.f32 %v2038, %v1801
    %v2040 = vsel %vm425, %v1815, 0.0
    %v2041 = vadd.f32 %v2039, %v2040
    %v2042 = vrot.slane %v2041, 4
    %v2043 = vadd.f32 %v2041, %v2042
    %v2044 = vrot.slane %v2043, 2
    %v2045 = vadd.f32 %v2043, %v2044
    %v2046 = vrot.slane %v2045, 1
    %v2047 = vadd.f32 %v2045, %v2046
    %v2048 = vadd.f32 %v1732, %v1746
    %v2049 = vadd.f32 %v2048, %v1760
    %v2050 = vadd.f32 %v2049, %v1774
    %v2051 = vadd.f32 %v2050, %v1788
    %v2052 = vadd.f32 %v2051, %v1802
    %v2053 = vsel %vm425, %v1816, 0.0
    %v2054 = vadd.f32 %v2052, %v2053
    %v2055 = vrot.slane %v2054, 4
    %v2056 = vadd.f32 %v2054, %v2055
    %v2057 = vrot.slane %v2056, 2
    %v2058 = vadd.f32 %v2056, %v2057
    %v2059 = vrot.slane %v2058, 1
    %v2060 = vadd.f32 %v2058, %v2059
    %v2061 = vadd.f32 %v1733, %v1747
    %v2062 = vadd.f32 %v2061, %v1761
    %v2063 = vadd.f32 %v2062, %v1775
    %v2064 = vadd.f32 %v2063, %v1789
    %v2065 = vadd.f32 %v2064, %v1803
    %v2066 = vsel %vm425, %v1817, 0.0
    %v2067 = vadd.f32 %v2065, %v2066
    %v2068 = vrot.slane %v2067, 4
    %v2069 = vadd.f32 %v2067, %v2068
    %v2070 = vrot.slane %v2069, 2
    %v2071 = vadd.f32 %v2069, %v2070
    %v2072 = vrot.slane %v2071, 1
    %v2073 = vadd.f32 %v2071, %v2072
    %v2074 = vadd.f32 %v1734, %v1748
    %v2075 = vadd.f32 %v2074, %v1762
    %v2076 = vadd.f32 %v2075, %v1776
    %v2077 = vadd.f32 %v2076, %v1790
    %v2078 = vadd.f32 %v2077, %v1804
    %v2079 = vsel %vm425, %v1818, 0.0
    %v2080 = vadd.f32 %v2078, %v2079
    %v2081 = vrot.slane %v2080, 4
    %v2082 = vadd.f32 %v2080, %v2081
    %v2083 = vrot.slane %v2082, 2
    %v2084 = vadd.f32 %v2082, %v2083
    %v2085 = vrot.slane %v2084, 1
    %v2086 = vadd.f32 %v2084, %v2085
    %v2087 = vadd.f32 %v1735, %v1749
    %v2088 = vadd.f32 %v2087, %v1763
    %v2089 = vadd.f32 %v2088, %v1777
    %v2090 = vadd.f32 %v2089, %v1791
    %v2091 = vadd.f32 %v2090, %v1805
    %v2092 = vsel %vm425, %v1819, 0.0
    %v2093 = vadd.f32 %v2091, %v2092
    %v2094 = vrot.slane %v2093, 4
    %v2095 = vadd.f32 %v2093, %v2094
    %v2096 = vrot.slane %v2095, 2
    %v2097 = vadd.f32 %v2095, %v2096
    %v2098 = vrot.slane %v2097, 1
    %v2099 = vadd.f32 %v2097, %v2098
    %v2100 = vadd.f32 %v1736, %v1750
    %v2101 = vadd.f32 %v2100, %v1764
    %v2102 = vadd.f32 %v2101, %v1778
    %v2103 = vadd.f32 %v2102, %v1792
    %v2104 = vadd.f32 %v2103, %v1806
    %v2105 = vsel %vm425, %v1820, 0.0
    %v2106 = vadd.f32 %v2104, %v2105
    %v2107 = vrot.slane %v2106, 4
    %v2108 = vadd.f32 %v2106, %v2107
    %v2109 = vrot.slane %v2108, 2
    %v2110 = vadd.f32 %v2108, %v2109
    %v2111 = vrot.slane %v2110, 1
    %v2112 = vadd.f32 %v2110, %v2111
    %v2113 = vadd.f32 %v1737, %v1751
    %v2114 = vadd.f32 %v2113, %v1765
    %v2115 = vadd.f32 %v2114, %v1779
    %v2116 = vadd.f32 %v2115, %v1793
    %v2117 = vadd.f32 %v2116, %v1807
    %v2118 = vsel %vm425, %v1821, 0.0
    %v2119 = vadd.f32 %v2117, %v2118
    %v2120 = vrot.slane %v2119, 4
    %v2121 = vadd.f32 %v2119, %v2120
    %v2122 = vrot.slane %v2121, 2
    %v2123 = vadd.f32 %v2121, %v2122
    %v2124 = vrot.slane %v2123, 1
    %v2125 = vadd.f32 %v2123, %v2124
    %v2126 = vadd.f32 %v1738, %v1752
    %v2127 = vadd.f32 %v2126, %v1766
    %v2128 = vadd.f32 %v2127, %v1780
    %v2129 = vadd.f32 %v2128, %v1794
    %v2130 = vadd.f32 %v2129, %v1808
    %v2131 = vsel %vm425, %v1822, 0.0
    %v2132 = vadd.f32 %v2130, %v2131
    %v2133 = vrot.slane %v2132, 4
    %v2134 = vadd.f32 %v2132, %v2133
    %v2135 = vrot.slane %v2134, 2
    %v2136 = vadd.f32 %v2134, %v2135
    %v2137 = vrot.slane %v2136, 1
    %v2138 = vadd.f32 %v2136, %v2137
    %v2139 = vadd.f32 %v1739, %v1753
    %v2140 = vadd.f32 %v2139, %v1767
    %v2141 = vadd.f32 %v2140, %v1781
    %v2142 = vadd.f32 %v2141, %v1795
    %v2143 = vadd.f32 %v2142, %v1809
    %v2144 = vsel %vm425, %v1823, 0.0
    %v2145 = vadd.f32 %v2143, %v2144
    %v2146 = vrot.slane %v2145, 4
    %v2147 = vadd.f32 %v2145, %v2146
    %v2148 = vrot.slane %v2147, 2
    %v2149 = vadd.f32 %v2147, %v2148
    %v2150 = vrot.slane %v2149, 1
    %v2151 = vadd.f32 %v2149, %v2150
    %v2152 = vadd.f32 %v1740, %v1754
    %v2153 = vadd.f32 %v2152, %v1768
    %v2154 = vadd.f32 %v2153, %v1782
    %v2155 = vadd.f32 %v2154, %v1796
    %v2156 = vadd.f32 %v2155, %v1810
    %v2157 = vsel %vm425, %v1824, 0.0
    %v2158 = vadd.f32 %v2156, %v2157
    %v2159 = vrot.slane %v2158, 4
    %v2160 = vadd.f32 %v2158, %v2159
    %v2161 = vrot.slane %v2160, 2
    %v2162 = vadd.f32 %v2160, %v2161
    %v2163 = vrot.slane %v2162, 1
    %v2164 = vadd.f32 %v2162, %v2163
    %v2165 = vadd.f32 %v1741, %v1755
    %v2166 = vadd.f32 %v2165, %v1769
    %v2167 = vadd.f32 %v2166, %v1783
    %v2168 = vadd.f32 %v2167, %v1797
    %v2169 = vadd.f32 %v2168, %v1811
    %v2170 = vsel %vm425, %v1825, 0.0
    %v2171 = vadd.f32 %v2169, %v2170
    %v2172 = vrot.slane %v2171, 4
    %v2173 = vadd.f32 %v2171, %v2172
    %v2174 = vrot.slane %v2173, 2
    %v2175 = vadd.f32 %v2173, %v2174
    %v2176 = vrot.slane %v2175, 1
    %v2177 = vadd.f32 %v2175, %v2176
    %v2178 = vadd.f32 %v1742, %v1756
    %v2179 = vadd.f32 %v2178, %v1770
    %v2180 = vadd.f32 %v2179, %v1784
    %v2181 = vadd.f32 %v2180, %v1798
    %v2182 = vadd.f32 %v2181, %v1812
    %v2183 = vsel %vm425, %v1826, 0.0
    %v2184 = vadd.f32 %v2182, %v2183
    %v2185 = vrot.slane %v2184, 4
    %v2186 = vadd.f32 %v2184, %v2185
    %v2187 = vrot.slane %v2186, 2
    %v2188 = vadd.f32 %v2186, %v2187
    %v2189 = vrot.slane %v2188, 1
    %v2190 = vadd.f32 %v2188, %v2189
    %v2191 = vld [vmem:[#allocation2] sm:$0x3]
    %v2192 = vld [vmem:[#allocation8] sm:$0xff]
    %v2193 = vld [vmem:[#allocation8 + $0x8] sm:$0xff]
    %v2194 = vld [vmem:[#allocation10] sm:$0x1]
    %v2196 = vperm.slane %v2194, 0
    %vm2198 = vcmask 130048
    %v2200 = vsel %vm2198, %v2191, 0
    %2202 = vmatpush.msra.mxu0 0.0
    %2203 = vmatpush.msra.mxu0 0.0
    %2204 = vmatpush.msra.mxu0 0.0
    %2205 = vmatpush.msra.mxu0 0.0
    %2206 = vmatpush.msra.mxu0 0.0
    %2207 = vmatpush.msra.mxu0 0.0
    %2208 = vmatpush.msra.mxu0 0.0
    %2209 = vmatpush.msra.mxu0 0.0
    %2210 = vmatpush.msra.mxu0 0.0
    %2211 = vmatpush.msra.mxu0 0.0
    %2212 = vmatpush.msra.mxu0 0.0
    %2213 = vmatpush.msra.mxu0 0.0
    %2214 = vmatpush.msra.mxu0 0.0
    %2215 = vmatpush.msra.mxu0 0.0
    %2216 = vmatpush.msra.mxu0 %v2193
    %2217 = vmatpush.msra.mxu0 %v2192
    %2218 = vmatmul.f32.gmra.mxu0 %v2200
    %v2219 = vpop.f32.mrf.mxu0
    %v2220 = vadd.f32 %v2196, %v2219
    %2221 = vdwg.mxu0
    %vm2222 = vcmp.gt.f32.partialorder %v2220, 0.0
    %v2223 = vmul.f32 %v2220, 0.01
    %v2224 = vsel %vm2222, %v2220, %v2223
    %v2225 = vld [vmem:[#allocation11] sm:$0xff]
    %v2226 = vld [vmem:[#allocation11 + $0x8] sm:$0xff]
    %v2227 = vld [vmem:[#allocation11 + $0x10] sm:$0xff]
    %v2228 = vld [vmem:[#allocation11 + $0x18] sm:$0xff]
    %v2229 = vld [vmem:[#allocation11 + $0x20] sm:$0xff]
    %v2230 = vld [vmem:[#allocation11 + $0x28] sm:$0xff]
    %v2231 = vld [vmem:[#allocation11 + $0x30] sm:$0xff]
    %v2232 = vld [vmem:[#allocation11 + $0x38] sm:$0xff]
    %v2233 = vld [vmem:[#allocation13] sm:$0x1]
    %v2235 = vperm.slane %v2233, 0
    %vm2237 = vcmask 523264
    %v2239 = vsel %vm2237, %v2224, 0
    %2241 = vmatpush.msra.mxu0 0.0
    %2242 = vmatpush.msra.mxu0 0.0
    %2243 = vmatpush.msra.mxu0 0.0
    %2244 = vmatpush.msra.mxu0 0.0
    %2245 = vmatpush.msra.mxu0 0.0
    %2246 = vmatpush.msra.mxu0 0.0
    %2247 = vmatpush.msra.mxu0 0.0
    %2248 = vmatpush.msra.mxu0 0.0
    %2249 = vmatpush.msra.mxu0 %v2232
    %2250 = vmatpush.msra.mxu0 %v2231
    %2251 = vmatpush.msra.mxu0 %v2230
    %2252 = vmatpush.msra.mxu0 %v2229
    %2253 = vmatpush.msra.mxu0 %v2228
    %2254 = vmatpush.msra.mxu0 %v2227
    %2255 = vmatpush.msra.mxu0 %v2226
    %2256 = vmatpush.msra.mxu0 %v2225
    %2257 = vmatmul.f32.gmra.mxu0 %v2239
    %v2258 = vpop.f32.mrf.mxu0
    %v2259 = vadd.f32 %v2235, %v2258
    %2260 = vdwg.mxu0
    %vm2261 = vcmp.gt.f32.partialorder %v2259, 0.0
    %v2262 = vmul.f32 %v2259, 0.01
    %v2263 = vsel %vm2261, %v2259, %v2262
    %v2264 = vld [vmem:[#allocation14] sm:$0xff]
    %v2265 = vld [vmem:[#allocation14 + $0x8] sm:$0xff]
    %v2266 = vld [vmem:[#allocation14 + $0x10] sm:$0xff]
    %v2267 = vld [vmem:[#allocation14 + $0x18] sm:$0xff]
    %v2268 = vld [vmem:[#allocation14 + $0x20] sm:$0xff]
    %v2269 = vld [vmem:[#allocation14 + $0x28] sm:$0xff]
    %v2270 = vld [vmem:[#allocation14 + $0x30] sm:$0xff]
    %v2271 = vld [vmem:[#allocation14 + $0x38] sm:$0xff]
    %v2272 = vld [vmem:[#allocation14 + $0x40] sm:$0xff]
    %v2273 = vld [vmem:[#allocation14 + $0x48] sm:$0xff]
    %v2274 = vld [vmem:[#allocation14 + $0x50] sm:$0xff]
    %v2275 = vld [vmem:[#allocation14 + $0x58] sm:$0xff]
    %v2276 = vld [vmem:[#allocation14 + $0x60] sm:$0xff]
    %v2277 = vld [vmem:[#allocation14 + $0x68] sm:$0xff]
    %v2278 = vld [vmem:[#allocation14 + $0x70] sm:$0xff]
    %v2279 = vld [vmem:[#allocation14 + $0x78] sm:$0xff]
    %v2280 = vld [vmem:[#allocation14 + $0x80] sm:$0xff]
    %v2281 = vld [vmem:[#allocation14 + $0x88] sm:$0xff]
    %v2282 = vld [vmem:[#allocation14 + $0x90] sm:$0xff]
    %v2283 = vld [vmem:[#allocation14 + $0x98] sm:$0xff]
    %v2284 = vld [vmem:[#allocation14 + $0xa0] sm:$0xff]
    %v2285 = vld [vmem:[#allocation14 + $0xa8] sm:$0xff]
    %v2286 = vld [vmem:[#allocation14 + $0xb0] sm:$0xff]
    %v2287 = vld [vmem:[#allocation14 + $0xb8] sm:$0xff]
    %v2288 = vld [vmem:[#allocation14 + $0xc0] sm:$0xff]
    %v2289 = vld [vmem:[#allocation14 + $0xc8] sm:$0xff]
    %v2290 = vld [vmem:[#allocation14 + $0xd0] sm:$0xff]
    %v2291 = vld [vmem:[#allocation14 + $0xd8] sm:$0xff]
    %v2292 = vld [vmem:[#allocation14 + $0xe0] sm:$0xff]
    %v2293 = vld [vmem:[#allocation14 + $0xe8] sm:$0xff]
    %v2294 = vld [vmem:[#allocation14 + $0xf0] sm:$0xff]
    %v2295 = vld [vmem:[#allocation14 + $0xf8] sm:$0xff]
    %v2296 = vld [vmem:[#allocation14 + $0x100] sm:$0xff]
    %v2297 = vld [vmem:[#allocation14 + $0x108] sm:$0xff]
    %v2298 = vld [vmem:[#allocation14 + $0x110] sm:$0xff]
    %v2299 = vld [vmem:[#allocation14 + $0x118] sm:$0xff]
    %v2300 = vld [vmem:[#allocation14 + $0x120] sm:$0xff]
    %v2301 = vld [vmem:[#allocation14 + $0x128] sm:$0xff]
    %v2302 = vld [vmem:[#allocation14 + $0x130] sm:$0xff]
    %v2303 = vld [vmem:[#allocation14 + $0x138] sm:$0xff]
    %v2304 = vld [vmem:[#allocation14 + $0x140] sm:$0xff]
    %v2305 = vld [vmem:[#allocation14 + $0x148] sm:$0xff]
    %v2306 = vld [vmem:[#allocation14 + $0x150] sm:$0xff]
    %v2307 = vld [vmem:[#allocation14 + $0x158] sm:$0xff]
    %v2308 = vld [vmem:[#allocation14 + $0x160] sm:$0xff]
    %v2309 = vld [vmem:[#allocation14 + $0x168] sm:$0xff]
    %v2310 = vld [vmem:[#allocation14 + $0x170] sm:$0xff]
    %v2311 = vld [vmem:[#allocation14 + $0x178] sm:$0xff]
    %v2312 = vld [vmem:[#allocation14 + $0x180] sm:$0xff]
    %v2313 = vld [vmem:[#allocation14 + $0x188] sm:$0xff]
    %v2314 = vld [vmem:[#allocation14 + $0x190] sm:$0xff]
    %v2315 = vld [vmem:[#allocation14 + $0x198] sm:$0xff]
    %v2316 = vld [vmem:[#allocation14 + $0x1a0] sm:$0xff]
    %v2317 = vld [vmem:[#allocation14 + $0x1a8] sm:$0xff]
    %v2318 = vld [vmem:[#allocation14 + $0x1b0] sm:$0xff]
    %v2319 = vld [vmem:[#allocation14 + $0x1b8] sm:$0xff]
    %v2320 = vld [vmem:[#allocation14 + $0x1c0] sm:$0xff]
    %v2321 = vld [vmem:[#allocation14 + $0x1c8] sm:$0xff]
    %v2322 = vld [vmem:[#allocation14 + $0x1d0] sm:$0xff]
    %v2323 = vld [vmem:[#allocation14 + $0x1d8] sm:$0xff]
    %v2324 = vld [vmem:[#allocation14 + $0x1e0] sm:$0xff]
    %v2325 = vld [vmem:[#allocation14 + $0x1e8] sm:$0xff]
    %v2326 = vld [vmem:[#allocation14 + $0x1f0] sm:$0xff]
    %v2327 = vld [vmem:[#allocation14 + $0x1f8] sm:$0xff]
    %v2328 = vld [vmem:[#allocation14 + $0x200] sm:$0xff]
    %v2329 = vld [vmem:[#allocation14 + $0x208] sm:$0xff]
    %v2330 = vld [vmem:[#allocation14 + $0x210] sm:$0xff]
    %v2331 = vld [vmem:[#allocation14 + $0x218] sm:$0xff]
    %v2332 = vld [vmem:[#allocation14 + $0x220] sm:$0xff]
    %v2333 = vld [vmem:[#allocation14 + $0x228] sm:$0xff]
    %v2334 = vld [vmem:[#allocation14 + $0x230] sm:$0xff]
    %v2335 = vld [vmem:[#allocation14 + $0x238] sm:$0xff]
    %v2336 = vld [vmem:[#allocation14 + $0x240] sm:$0xff]
    %v2337 = vld [vmem:[#allocation14 + $0x248] sm:$0xff]
    %v2338 = vld [vmem:[#allocation14 + $0x250] sm:$0xff]
    %v2339 = vld [vmem:[#allocation14 + $0x258] sm:$0xff]
    %v2340 = vld [vmem:[#allocation14 + $0x260] sm:$0xff]
    %v2341 = vld [vmem:[#allocation14 + $0x268] sm:$0xff]
    %v2342 = vld [vmem:[#allocation14 + $0x270] sm:$0xff]
    %v2343 = vld [vmem:[#allocation14 + $0x278] sm:$0xff]
    %v2344 = vld [vmem:[#allocation14 + $0x280] sm:$0xff]
    %v2345 = vld [vmem:[#allocation14 + $0x288] sm:$0xff]
    %v2346 = vld [vmem:[#allocation14 + $0x290] sm:$0xff]
    %v2347 = vld [vmem:[#allocation14 + $0x298] sm:$0xff]
    %v2348 = vld [vmem:[#allocation14 + $0x2a0] sm:$0xff]
    %v2349 = vld [vmem:[#allocation14 + $0x2a8] sm:$0xff]
    %v2350 = vld [vmem:[#allocation14 + $0x2b0] sm:$0xff]
    %v2351 = vld [vmem:[#allocation14 + $0x2b8] sm:$0xff]
    %v2352 = vld [vmem:[#allocation14 + $0x2c0] sm:$0xff]
    %v2353 = vld [vmem:[#allocation14 + $0x2c8] sm:$0xff]
    %v2354 = vld [vmem:[#allocation14 + $0x2d0] sm:$0xff]
    %v2355 = vld [vmem:[#allocation14 + $0x2d8] sm:$0xff]
    %v2356 = vld [vmem:[#allocation14 + $0x2e0] sm:$0xff]
    %v2357 = vld [vmem:[#allocation14 + $0x2e8] sm:$0xff]
    %v2358 = vld [vmem:[#allocation14 + $0x2f0] sm:$0xff]
    %v2359 = vld [vmem:[#allocation14 + $0x2f8] sm:$0xff]
    %v2360 = vld [vmem:[#allocation14 + $0x300] sm:$0xff]
    %v2361 = vld [vmem:[#allocation14 + $0x308] sm:$0xff]
    %v2362 = vld [vmem:[#allocation14 + $0x310] sm:$0xff]
    %v2363 = vld [vmem:[#allocation14 + $0x318] sm:$0xff]
    %v2364 = vld [vmem:[#allocation14 + $0x320] sm:$0xff]
    %v2365 = vld [vmem:[#allocation14 + $0x328] sm:$0xff]
    %v2366 = vld [vmem:[#allocation14 + $0x330] sm:$0xff]
    %v2367 = vld [vmem:[#allocation14 + $0x338] sm:$0xff]
    %v2368 = vld [vmem:[#allocation14 + $0x340] sm:$0xff]
    %v2369 = vld [vmem:[#allocation14 + $0x348] sm:$0xff]
    %v2370 = vld [vmem:[#allocation14 + $0x350] sm:$0xff]
    %v2371 = vld [vmem:[#allocation14 + $0x358] sm:$0xff]
    %v2372 = vld [vmem:[#allocation14 + $0x360] sm:$0xff]
    %v2373 = vld [vmem:[#allocation14 + $0x368] sm:$0xff]
    %v2374 = vld [vmem:[#allocation14 + $0x370] sm:$0xff]
    %v2375 = vld [vmem:[#allocation14 + $0x378] sm:$0xff]
    %v2376 = vld [vmem:[#allocation14 + $0x380] sm:$0xff]
    %v2377 = vld [vmem:[#allocation14 + $0x388] sm:$0xff]
    %v2378 = vld [vmem:[#allocation14 + $0x390] sm:$0xff]
    %v2379 = vld [vmem:[#allocation14 + $0x398] sm:$0xff]
    %v2380 = vld [vmem:[#allocation14 + $0x3a0] sm:$0xff]
    %v2381 = vld [vmem:[#allocation14 + $0x3a8] sm:$0xff]
    %v2382 = vld [vmem:[#allocation14 + $0x3b0] sm:$0xff]
    %v2383 = vld [vmem:[#allocation14 + $0x3b8] sm:$0xff]
    %v2384 = vld [vmem:[#allocation14 + $0x3c0] sm:$0xff]
    %v2385 = vld [vmem:[#allocation14 + $0x3c8] sm:$0xff]
    %v2386 = vld [vmem:[#allocation14 + $0x3d0] sm:$0xff]
    %v2387 = vld [vmem:[#allocation14 + $0x3d8] sm:$0xff]
    %v2388 = vld [vmem:[#allocation14 + $0x3e0] sm:$0xff]
    %v2389 = vld [vmem:[#allocation14 + $0x3e8] sm:$0xff]
    %v2390 = vld [vmem:[#allocation14 + $0x3f0] sm:$0xff]
    %v2391 = vld [vmem:[#allocation14 + $0x3f8] sm:$0xff]
    %v2392 = vld [vmem:[#allocation14 + $0x400] sm:$0xff]
    %v2393 = vld [vmem:[#allocation14 + $0x408] sm:$0xff]
    %v2394 = vld [vmem:[#allocation14 + $0x410] sm:$0xff]
    %v2395 = vld [vmem:[#allocation14 + $0x418] sm:$0xff]
    %v2396 = vld [vmem:[#allocation14 + $0x420] sm:$0xff]
    %v2397 = vld [vmem:[#allocation14 + $0x428] sm:$0xff]
    %v2398 = vld [vmem:[#allocation14 + $0x430] sm:$0xff]
    %v2399 = vld [vmem:[#allocation14 + $0x438] sm:$0xff]
    %v2400 = vld [vmem:[#allocation14 + $0x440] sm:$0xff]
    %v2401 = vld [vmem:[#allocation14 + $0x448] sm:$0xff]
    %v2402 = vld [vmem:[#allocation14 + $0x450] sm:$0xff]
    %v2403 = vld [vmem:[#allocation14 + $0x458] sm:$0xff]
    %v2404 = vld [vmem:[#allocation14 + $0x460] sm:$0xff]
    %v2405 = vld [vmem:[#allocation14 + $0x468] sm:$0xff]
    %v2406 = vld [vmem:[#allocation14 + $0x470] sm:$0xff]
    %v2407 = vld [vmem:[#allocation14 + $0x478] sm:$0xff]
    %v2408 = vld [vmem:[#allocation14 + $0x480] sm:$0xff]
    %v2409 = vld [vmem:[#allocation14 + $0x488] sm:$0xff]
    %v2410 = vld [vmem:[#allocation14 + $0x490] sm:$0xff]
    %v2411 = vld [vmem:[#allocation14 + $0x498] sm:$0xff]
    %v2412 = vld [vmem:[#allocation14 + $0x4a0] sm:$0xff]
    %v2413 = vld [vmem:[#allocation14 + $0x4a8] sm:$0xff]
    %v2414 = vld [vmem:[#allocation14 + $0x4b0] sm:$0xff]
    %v2415 = vld [vmem:[#allocation14 + $0x4b8] sm:$0xff]
    %v2416 = vld [vmem:[#allocation14 + $0x4c0] sm:$0xff]
    %v2417 = vld [vmem:[#allocation14 + $0x4c8] sm:$0xff]
    %v2418 = vld [vmem:[#allocation14 + $0x4d0] sm:$0xff]
    %v2419 = vld [vmem:[#allocation14 + $0x4d8] sm:$0xff]
    %v2420 = vld [vmem:[#allocation14 + $0x4e0] sm:$0xff]
    %v2421 = vld [vmem:[#allocation14 + $0x4e8] sm:$0xff]
    %v2422 = vld [vmem:[#allocation14 + $0x4f0] sm:$0xff]
    %v2423 = vld [vmem:[#allocation14 + $0x4f8] sm:$0xff]
    %v2424 = vld [vmem:[#allocation14 + $0x500] sm:$0xff]
    %v2425 = vld [vmem:[#allocation14 + $0x508] sm:$0xff]
    %v2426 = vld [vmem:[#allocation14 + $0x510] sm:$0xff]
    %v2427 = vld [vmem:[#allocation14 + $0x518] sm:$0xff]
    %v2428 = vld [vmem:[#allocation14 + $0x520] sm:$0xff]
    %v2429 = vld [vmem:[#allocation14 + $0x528] sm:$0xff]
    %v2430 = vld [vmem:[#allocation14 + $0x530] sm:$0xff]
    %v2431 = vld [vmem:[#allocation14 + $0x538] sm:$0xff]
    %v2432 = vld [vmem:[#allocation14 + $0x540] sm:$0xff]
    %v2433 = vld [vmem:[#allocation14 + $0x548] sm:$0xff]
    %v2434 = vld [vmem:[#allocation14 + $0x550] sm:$0xff]
    %v2435 = vld [vmem:[#allocation14 + $0x558] sm:$0xff]
    %v2436 = vld [vmem:[#allocation14 + $0x560] sm:$0xff]
    %v2437 = vld [vmem:[#allocation14 + $0x568] sm:$0xff]
    %v2438 = vld [vmem:[#allocation14 + $0x570] sm:$0xff]
    %v2439 = vld [vmem:[#allocation14 + $0x578] sm:$0xff]
    %v2440 = vld [vmem:[#allocation14 + $0x580] sm:$0xff]
    %v2441 = vld [vmem:[#allocation14 + $0x588] sm:$0xff]
    %v2442 = vld [vmem:[#allocation14 + $0x590] sm:$0xff]
    %v2443 = vld [vmem:[#allocation14 + $0x598] sm:$0xff]
    %v2444 = vld [vmem:[#allocation14 + $0x5a0] sm:$0xff]
    %v2445 = vld [vmem:[#allocation14 + $0x5a8] sm:$0xff]
    %v2446 = vld [vmem:[#allocation14 + $0x5b0] sm:$0xff]
    %v2447 = vld [vmem:[#allocation14 + $0x5b8] sm:$0xff]
    %v2448 = vld [vmem:[#allocation14 + $0x5c0] sm:$0xff]
    %v2449 = vld [vmem:[#allocation14 + $0x5c8] sm:$0xff]
    %v2450 = vld [vmem:[#allocation14 + $0x5d0] sm:$0xff]
    %v2451 = vld [vmem:[#allocation14 + $0x5d8] sm:$0xff]
    %v2452 = vld [vmem:[#allocation14 + $0x5e0] sm:$0xff]
    %v2453 = vld [vmem:[#allocation14 + $0x5e8] sm:$0xff]
    %v2454 = vld [vmem:[#allocation14 + $0x5f0] sm:$0xff]
    %v2455 = vld [vmem:[#allocation14 + $0x5f8] sm:$0xff]
    %v2456 = vld [vmem:[#allocation14 + $0x600] sm:$0xff]
    %v2457 = vld [vmem:[#allocation14 + $0x608] sm:$0xff]
    %v2458 = vld [vmem:[#allocation14 + $0x610] sm:$0xff]
    %v2459 = vld [vmem:[#allocation14 + $0x618] sm:$0xff]
    %v2460 = vld [vmem:[#allocation14 + $0x620] sm:$0xff]
    %v2461 = vld [vmem:[#allocation14 + $0x628] sm:$0xff]
    %v2462 = vld [vmem:[#allocation14 + $0x630] sm:$0xff]
    %v2463 = vld [vmem:[#allocation14 + $0x638] sm:$0xff]
    %v2464 = vld [vmem:[#allocation14 + $0x640] sm:$0xff]
    %v2465 = vld [vmem:[#allocation14 + $0x648] sm:$0xff]
    %v2466 = vld [vmem:[#allocation14 + $0x650] sm:$0xff]
    %v2467 = vld [vmem:[#allocation14 + $0x658] sm:$0xff]
    %v2468 = vld [vmem:[#allocation14 + $0x660] sm:$0xff]
    %v2469 = vld [vmem:[#allocation14 + $0x668] sm:$0xff]
    %v2470 = vld [vmem:[#allocation14 + $0x670] sm:$0xff]
    %v2471 = vld [vmem:[#allocation14 + $0x678] sm:$0xff]
    %v2472 = vld [vmem:[#allocation14 + $0x680] sm:$0xff]
    %v2473 = vld [vmem:[#allocation14 + $0x688] sm:$0xff]
    %v2474 = vld [vmem:[#allocation14 + $0x690] sm:$0xff]
    %v2475 = vld [vmem:[#allocation14 + $0x698] sm:$0xff]
    %v2476 = vld [vmem:[#allocation14 + $0x6a0] sm:$0xff]
    %v2477 = vld [vmem:[#allocation14 + $0x6a8] sm:$0xff]
    %v2478 = vld [vmem:[#allocation14 + $0x6b0] sm:$0xff]
    %v2479 = vld [vmem:[#allocation14 + $0x6b8] sm:$0xff]
    %v2480 = vld [vmem:[#allocation14 + $0x6c0] sm:$0xff]
    %v2481 = vld [vmem:[#allocation14 + $0x6c8] sm:$0xff]
    %v2482 = vld [vmem:[#allocation14 + $0x6d0] sm:$0xff]
    %v2483 = vld [vmem:[#allocation14 + $0x6d8] sm:$0xff]
    %v2484 = vld [vmem:[#allocation14 + $0x6e0] sm:$0xff]
    %v2485 = vld [vmem:[#allocation14 + $0x6e8] sm:$0xff]
    %v2486 = vld [vmem:[#allocation14 + $0x6f0] sm:$0xff]
    %v2487 = vld [vmem:[#allocation14 + $0x6f8] sm:$0xff]
    %v2488 = vld [vmem:[#allocation14 + $0x700] sm:$0xff]
    %v2489 = vld [vmem:[#allocation14 + $0x708] sm:$0xff]
    %v2490 = vld [vmem:[#allocation14 + $0x710] sm:$0xff]
    %v2491 = vld [vmem:[#allocation14 + $0x718] sm:$0xff]
    %v2492 = vld [vmem:[#allocation14 + $0x720] sm:$0xff]
    %v2493 = vld [vmem:[#allocation14 + $0x728] sm:$0xff]
    %v2494 = vld [vmem:[#allocation14 + $0x730] sm:$0xff]
    %v2495 = vld [vmem:[#allocation14 + $0x738] sm:$0xff]
    %v2496 = vld [vmem:[#allocation14 + $0x740] sm:$0xff]
    %v2497 = vld [vmem:[#allocation14 + $0x748] sm:$0xff]
    %v2498 = vld [vmem:[#allocation14 + $0x750] sm:$0xff]
    %v2499 = vld [vmem:[#allocation14 + $0x758] sm:$0xff]
    %v2500 = vld [vmem:[#allocation14 + $0x760] sm:$0xff]
    %v2501 = vld [vmem:[#allocation14 + $0x768] sm:$0xff]
    %v2502 = vld [vmem:[#allocation14 + $0x770] sm:$0xff]
    %v2503 = vld [vmem:[#allocation14 + $0x778] sm:$0xff]
    %v2504 = vld [vmem:[#allocation14 + $0x780] sm:$0xff]
    %v2505 = vld [vmem:[#allocation14 + $0x788] sm:$0xff]
    %v2506 = vld [vmem:[#allocation14 + $0x790] sm:$0xff]
    %v2507 = vld [vmem:[#allocation14 + $0x798] sm:$0xff]
    %v2508 = vld [vmem:[#allocation14 + $0x7a0] sm:$0xff]
    %v2509 = vld [vmem:[#allocation14 + $0x7a8] sm:$0xff]
    %v2510 = vld [vmem:[#allocation14 + $0x7b0] sm:$0xff]
    %v2511 = vld [vmem:[#allocation14 + $0x7b8] sm:$0xff]
    %v2512 = vld [vmem:[#allocation14 + $0x7c0] sm:$0xff]
    %v2513 = vld [vmem:[#allocation14 + $0x7c8] sm:$0xff]
    %v2514 = vld [vmem:[#allocation14 + $0x7d0] sm:$0xff]
    %v2515 = vld [vmem:[#allocation14 + $0x7d8] sm:$0xff]
    %v2516 = vld [vmem:[#allocation14 + $0x7e0] sm:$0xff]
    %v2517 = vld [vmem:[#allocation14 + $0x7e8] sm:$0xff]
    %v2518 = vld [vmem:[#allocation14 + $0x7f0] sm:$0xff]
    %v2519 = vld [vmem:[#allocation14 + $0x7f8] sm:$0xff]
    %v2520 = vld [vmem:[#allocation14 + $0x800] sm:$0xff]
    %v2521 = vld [vmem:[#allocation14 + $0x808] sm:$0xff]
    %v2522 = vld [vmem:[#allocation14 + $0x810] sm:$0xff]
    %v2523 = vld [vmem:[#allocation14 + $0x818] sm:$0xff]
    %v2524 = vld [vmem:[#allocation14 + $0x820] sm:$0xff]
    %v2525 = vld [vmem:[#allocation14 + $0x828] sm:$0xff]
    %v2526 = vld [vmem:[#allocation14 + $0x830] sm:$0xff]
    %v2527 = vld [vmem:[#allocation14 + $0x838] sm:$0xff]
    %v2528 = vld [vmem:[#allocation14 + $0x840] sm:$0xff]
    %v2529 = vld [vmem:[#allocation14 + $0x848] sm:$0xff]
    %v2530 = vld [vmem:[#allocation14 + $0x850] sm:$0xff]
    %v2531 = vld [vmem:[#allocation14 + $0x858] sm:$0xff]
    %v2532 = vld [vmem:[#allocation14 + $0x860] sm:$0xff]
    %v2533 = vld [vmem:[#allocation14 + $0x868] sm:$0xff]
    %v2534 = vld [vmem:[#allocation14 + $0x870] sm:$0xff]
    %v2535 = vld [vmem:[#allocation14 + $0x878] sm:$0xff]
    %v2536 = vld [vmem:[#allocation14 + $0x880] sm:$0xff]
    %v2537 = vld [vmem:[#allocation14 + $0x888] sm:$0xff]
    %v2538 = vld [vmem:[#allocation14 + $0x890] sm:$0xff]
    %v2539 = vld [vmem:[#allocation14 + $0x898] sm:$0xff]
    %v2540 = vld [vmem:[#allocation14 + $0x8a0] sm:$0xff]
    %v2541 = vld [vmem:[#allocation14 + $0x8a8] sm:$0xff]
    %v2542 = vld [vmem:[#allocation14 + $0x8b0] sm:$0xff]
    %v2543 = vld [vmem:[#allocation14 + $0x8b8] sm:$0xff]
    %v2544 = vld [vmem:[#allocation14 + $0x8c0] sm:$0xff]
    %v2545 = vld [vmem:[#allocation14 + $0x8c8] sm:$0xff]
    %v2546 = vld [vmem:[#allocation14 + $0x8d0] sm:$0xff]
    %v2547 = vld [vmem:[#allocation14 + $0x8d8] sm:$0xff]
    %v2548 = vld [vmem:[#allocation14 + $0x8e0] sm:$0xff]
    %v2549 = vld [vmem:[#allocation14 + $0x8e8] sm:$0xff]
    %v2550 = vld [vmem:[#allocation14 + $0x8f0] sm:$0xff]
    %v2551 = vld [vmem:[#allocation14 + $0x8f8] sm:$0xff]
    %v2552 = vld [vmem:[#allocation14 + $0x900] sm:$0xff]
    %v2553 = vld [vmem:[#allocation14 + $0x908] sm:$0xff]
    %v2554 = vld [vmem:[#allocation14 + $0x910] sm:$0xff]
    %v2555 = vld [vmem:[#allocation14 + $0x918] sm:$0xff]
    %v2556 = vld [vmem:[#allocation14 + $0x920] sm:$0xff]
    %v2557 = vld [vmem:[#allocation14 + $0x928] sm:$0xff]
    %v2558 = vld [vmem:[#allocation14 + $0x930] sm:$0xff]
    %v2559 = vld [vmem:[#allocation14 + $0x938] sm:$0xff]
    %v2560 = vld [vmem:[#allocation14 + $0x940] sm:$0xff]
    %v2561 = vld [vmem:[#allocation14 + $0x948] sm:$0xff]
    %v2562 = vld [vmem:[#allocation14 + $0x950] sm:$0xff]
    %v2563 = vld [vmem:[#allocation14 + $0x958] sm:$0xff]
    %v2564 = vld [vmem:[#allocation14 + $0x960] sm:$0xff]
    %v2565 = vld [vmem:[#allocation14 + $0x968] sm:$0xff]
    %v2566 = vld [vmem:[#allocation14 + $0x970] sm:$0xff]
    %v2567 = vld [vmem:[#allocation14 + $0x978] sm:$0xff]
    %v2568 = vld [vmem:[#allocation14 + $0x980] sm:$0xff]
    %v2569 = vld [vmem:[#allocation14 + $0x988] sm:$0xff]
    %v2570 = vld [vmem:[#allocation14 + $0x990] sm:$0xff]
    %v2571 = vld [vmem:[#allocation14 + $0x998] sm:$0xff]
    %v2572 = vld [vmem:[#allocation14 + $0x9a0] sm:$0xff]
    %v2573 = vld [vmem:[#allocation14 + $0x9a8] sm:$0xff]
    %v2574 = vld [vmem:[#allocation14 + $0x9b0] sm:$0xff]
    %v2575 = vld [vmem:[#allocation14 + $0x9b8] sm:$0xff]
    %v2576 = vld [vmem:[#allocation14 + $0x9c0] sm:$0xff]
    %v2577 = vld [vmem:[#allocation14 + $0x9c8] sm:$0xff]
    %v2578 = vld [vmem:[#allocation14 + $0x9d0] sm:$0xff]
    %v2579 = vld [vmem:[#allocation14 + $0x9d8] sm:$0xff]
    %v2580 = vld [vmem:[#allocation14 + $0x9e0] sm:$0xff]
    %v2581 = vld [vmem:[#allocation14 + $0x9e8] sm:$0xff]
    %v2582 = vld [vmem:[#allocation14 + $0x9f0] sm:$0xff]
    %v2583 = vld [vmem:[#allocation14 + $0x9f8] sm:$0xff]
    %v2584 = vld [vmem:[#allocation14 + $0xa00] sm:$0xff]
    %v2585 = vld [vmem:[#allocation14 + $0xa08] sm:$0xff]
    %v2586 = vld [vmem:[#allocation14 + $0xa10] sm:$0xff]
    %v2587 = vld [vmem:[#allocation14 + $0xa18] sm:$0xff]
    %v2588 = vld [vmem:[#allocation14 + $0xa20] sm:$0xff]
    %v2589 = vld [vmem:[#allocation14 + $0xa28] sm:$0xff]
    %v2590 = vld [vmem:[#allocation14 + $0xa30] sm:$0xff]
    %v2591 = vld [vmem:[#allocation14 + $0xa38] sm:$0xff]
    %v2592 = vld [vmem:[#allocation14 + $0xa40] sm:$0xff]
    %v2593 = vld [vmem:[#allocation14 + $0xa48] sm:$0xff]
    %v2594 = vld [vmem:[#allocation14 + $0xa50] sm:$0xff]
    %v2595 = vld [vmem:[#allocation14 + $0xa58] sm:$0xff]
    %v2596 = vld [vmem:[#allocation14 + $0xa60] sm:$0xff]
    %v2597 = vld [vmem:[#allocation14 + $0xa68] sm:$0xff]
    %v2598 = vld [vmem:[#allocation14 + $0xa70] sm:$0xff]
    %v2599 = vld [vmem:[#allocation14 + $0xa78] sm:$0xff]
    %v2600 = vld [vmem:[#allocation14 + $0xa80] sm:$0xff]
    %v2601 = vld [vmem:[#allocation14 + $0xa88] sm:$0xff]
    %v2602 = vld [vmem:[#allocation14 + $0xa90] sm:$0xff]
    %v2603 = vld [vmem:[#allocation14 + $0xa98] sm:$0xff]
    %v2604 = vld [vmem:[#allocation14 + $0xaa0] sm:$0xff]
    %v2605 = vld [vmem:[#allocation14 + $0xaa8] sm:$0xff]
    %v2606 = vld [vmem:[#allocation14 + $0xab0] sm:$0xff]
    %v2607 = vld [vmem:[#allocation14 + $0xab8] sm:$0xff]
    %v2608 = vld [vmem:[#allocation14 + $0xac0] sm:$0xff]
    %v2609 = vld [vmem:[#allocation14 + $0xac8] sm:$0xff]
    %v2610 = vld [vmem:[#allocation14 + $0xad0] sm:$0xff]
    %v2611 = vld [vmem:[#allocation14 + $0xad8] sm:$0xff]
    %v2612 = vld [vmem:[#allocation14 + $0xae0] sm:$0xff]
    %v2613 = vld [vmem:[#allocation14 + $0xae8] sm:$0xff]
    %v2614 = vld [vmem:[#allocation14 + $0xaf0] sm:$0xff]
    %v2615 = vld [vmem:[#allocation14 + $0xaf8] sm:$0xff]
    %v2616 = vld [vmem:[#allocation14 + $0xb00] sm:$0xff]
    %v2617 = vld [vmem:[#allocation14 + $0xb08] sm:$0xff]
    %v2618 = vld [vmem:[#allocation14 + $0xb10] sm:$0xff]
    %v2619 = vld [vmem:[#allocation14 + $0xb18] sm:$0xff]
    %v2620 = vld [vmem:[#allocation14 + $0xb20] sm:$0xff]
    %v2621 = vld [vmem:[#allocation14 + $0xb28] sm:$0xff]
    %v2622 = vld [vmem:[#allocation14 + $0xb30] sm:$0xff]
    %v2623 = vld [vmem:[#allocation14 + $0xb38] sm:$0xff]
    %v2624 = vld [vmem:[#allocation14 + $0xb40] sm:$0xff]
    %v2625 = vld [vmem:[#allocation14 + $0xb48] sm:$0xff]
    %v2626 = vld [vmem:[#allocation14 + $0xb50] sm:$0xff]
    %v2627 = vld [vmem:[#allocation14 + $0xb58] sm:$0xff]
    %v2628 = vld [vmem:[#allocation14 + $0xb60] sm:$0xff]
    %v2629 = vld [vmem:[#allocation14 + $0xb68] sm:$0xff]
    %v2630 = vld [vmem:[#allocation14 + $0xb70] sm:$0xff]
    %v2631 = vld [vmem:[#allocation14 + $0xb78] sm:$0xff]
    %v2632 = vld [vmem:[#allocation14 + $0xb80] sm:$0xff]
    %v2633 = vld [vmem:[#allocation14 + $0xb88] sm:$0xff]
    %v2634 = vld [vmem:[#allocation14 + $0xb90] sm:$0xff]
    %v2635 = vld [vmem:[#allocation14 + $0xb98] sm:$0xff]
    %v2636 = vld [vmem:[#allocation14 + $0xba0] sm:$0xff]
    %v2637 = vld [vmem:[#allocation14 + $0xba8] sm:$0xff]
    %v2638 = vld [vmem:[#allocation14 + $0xbb0] sm:$0xff]
    %v2639 = vld [vmem:[#allocation14 + $0xbb8] sm:$0xff]
    %v2640 = vld [vmem:[#allocation14 + $0xbc0] sm:$0xff]
    %v2641 = vld [vmem:[#allocation14 + $0xbc8] sm:$0xff]
    %v2642 = vld [vmem:[#allocation14 + $0xbd0] sm:$0xff]
    %v2643 = vld [vmem:[#allocation14 + $0xbd8] sm:$0xff]
    %v2644 = vld [vmem:[#allocation14 + $0xbe0] sm:$0xff]
    %v2645 = vld [vmem:[#allocation14 + $0xbe8] sm:$0xff]
    %v2646 = vld [vmem:[#allocation14 + $0xbf0] sm:$0xff]
    %v2647 = vld [vmem:[#allocation14 + $0xbf8] sm:$0xff]
    %v2648 = vld [vmem:[#allocation14 + $0xc00] sm:$0xff]
    %v2649 = vld [vmem:[#allocation14 + $0xc08] sm:$0xff]
    %v2650 = vld [vmem:[#allocation14 + $0xc10] sm:$0xff]
    %v2651 = vld [vmem:[#allocation14 + $0xc18] sm:$0xff]
    %v2652 = vld [vmem:[#allocation14 + $0xc20] sm:$0xff]
    %v2653 = vld [vmem:[#allocation14 + $0xc28] sm:$0xff]
    %v2654 = vld [vmem:[#allocation14 + $0xc30] sm:$0xff]
    %v2655 = vld [vmem:[#allocation14 + $0xc38] sm:$0xff]
    %v2656 = vld [vmem:[#allocation14 + $0xc40] sm:$0xff]
    %v2657 = vld [vmem:[#allocation14 + $0xc48] sm:$0xff]
    %v2658 = vld [vmem:[#allocation14 + $0xc50] sm:$0xff]
    %v2659 = vld [vmem:[#allocation14 + $0xc58] sm:$0xff]
    %v2660 = vld [vmem:[#allocation14 + $0xc60] sm:$0xff]
    %v2661 = vld [vmem:[#allocation14 + $0xc68] sm:$0xff]
    %v2662 = vld [vmem:[#allocation14 + $0xc70] sm:$0xff]
    %v2663 = vld [vmem:[#allocation14 + $0xc78] sm:$0xff]
    %v2664 = vld [vmem:[#allocation14 + $0xc80] sm:$0xff]
    %v2665 = vld [vmem:[#allocation14 + $0xc88] sm:$0xff]
    %v2666 = vld [vmem:[#allocation14 + $0xc90] sm:$0xff]
    %v2667 = vld [vmem:[#allocation14 + $0xc98] sm:$0xff]
    %v2668 = vld [vmem:[#allocation14 + $0xca0] sm:$0xff]
    %v2669 = vld [vmem:[#allocation14 + $0xca8] sm:$0xff]
    %v2670 = vld [vmem:[#allocation14 + $0xcb0] sm:$0xff]
    %v2671 = vld [vmem:[#allocation14 + $0xcb8] sm:$0xff]
    %v2672 = vld [vmem:[#allocation14 + $0xcc0] sm:$0xff]
    %v2673 = vld [vmem:[#allocation14 + $0xcc8] sm:$0xff]
    %v2674 = vld [vmem:[#allocation14 + $0xcd0] sm:$0xff]
    %v2675 = vld [vmem:[#allocation14 + $0xcd8] sm:$0xff]
    %v2676 = vld [vmem:[#allocation14 + $0xce0] sm:$0xff]
    %v2677 = vld [vmem:[#allocation14 + $0xce8] sm:$0xff]
    %v2678 = vld [vmem:[#allocation14 + $0xcf0] sm:$0xff]
    %v2679 = vld [vmem:[#allocation14 + $0xcf8] sm:$0xff]
    %v2680 = vld [vmem:[#allocation14 + $0xd00] sm:$0xff]
    %v2681 = vld [vmem:[#allocation14 + $0xd08] sm:$0xff]
    %v2682 = vld [vmem:[#allocation14 + $0xd10] sm:$0xff]
    %v2683 = vld [vmem:[#allocation14 + $0xd18] sm:$0xff]
    %v2684 = vld [vmem:[#allocation14 + $0xd20] sm:$0xff]
    %v2685 = vld [vmem:[#allocation14 + $0xd28] sm:$0xff]
    %v2686 = vld [vmem:[#allocation14 + $0xd30] sm:$0xff]
    %v2687 = vld [vmem:[#allocation14 + $0xd38] sm:$0xff]
    %v2688 = vld [vmem:[#allocation14 + $0xd40] sm:$0xff]
    %v2689 = vld [vmem:[#allocation14 + $0xd48] sm:$0xff]
    %v2690 = vld [vmem:[#allocation14 + $0xd50] sm:$0xff]
    %v2691 = vld [vmem:[#allocation14 + $0xd58] sm:$0xff]
    %v2692 = vld [vmem:[#allocation14 + $0xd60] sm:$0xff]
    %v2693 = vld [vmem:[#allocation14 + $0xd68] sm:$0xff]
    %v2694 = vld [vmem:[#allocation14 + $0xd70] sm:$0xff]
    %v2695 = vld [vmem:[#allocation14 + $0xd78] sm:$0xff]
    %v2696 = vld [vmem:[#allocation14 + $0xd80] sm:$0xff]
    %v2697 = vld [vmem:[#allocation14 + $0xd88] sm:$0xff]
    %v2698 = vld [vmem:[#allocation14 + $0xd90] sm:$0xff]
    %v2699 = vld [vmem:[#allocation14 + $0xd98] sm:$0xff]
    %v2700 = vld [vmem:[#allocation14 + $0xda0] sm:$0xff]
    %v2701 = vld [vmem:[#allocation14 + $0xda8] sm:$0xff]
    %v2702 = vld [vmem:[#allocation14 + $0xdb0] sm:$0xff]
    %v2703 = vld [vmem:[#allocation14 + $0xdb8] sm:$0xff]
    %v2704 = vld [vmem:[#allocation14 + $0xdc0] sm:$0xff]
    %v2705 = vld [vmem:[#allocation14 + $0xdc8] sm:$0xff]
    %v2706 = vld [vmem:[#allocation14 + $0xdd0] sm:$0xff]
    %v2707 = vld [vmem:[#allocation14 + $0xdd8] sm:$0xff]
    %v2708 = vld [vmem:[#allocation14 + $0xde0] sm:$0xff]
    %v2709 = vld [vmem:[#allocation14 + $0xde8] sm:$0xff]
    %v2710 = vld [vmem:[#allocation14 + $0xdf0] sm:$0xff]
    %v2711 = vld [vmem:[#allocation14 + $0xdf8] sm:$0xff]
    %v2740 = vsel %vm1373, %v2021, %v1839
    %v2741 = vsel %vm1373, %v2034, %v1852
    %v2742 = vsel %vm1373, %v2047, %v1865
    %v2743 = vsel %vm1373, %v2060, %v1878
    %v2744 = vsel %vm1373, %v2073, %v1891
    %v2745 = vsel %vm1373, %v2086, %v1904
    %v2746 = vsel %vm1373, %v2099, %v1917
    %v2747 = vsel %vm1373, %v2112, %v1930
    %v2748 = vsel %vm1373, %v2125, %v1943
    %v2749 = vsel %vm1373, %v2138, %v1956
    %v2750 = vsel %vm1373, %v2151, %v1969
    %v2751 = vsel %vm1373, %v2164, %v1982
    %v2752 = vsel %vm1373, %v2177, %v1995
    %v2753 = vsel %vm1373, %v2190, %v2008
    %2768 = vmatpush.msra.mxu0 %v2294
    %2769 = vmatpush.msra.mxu0 %v2292
    %2770 = vmatpush.msra.mxu0 %v2290
    %2771 = vmatpush.msra.mxu0 %v2288
    %2772 = vmatpush.msra.mxu0 %v2286
    %2773 = vmatpush.msra.mxu0 %v2284
    %2774 = vmatpush.msra.mxu0 %v2282
    %2775 = vmatpush.msra.mxu0 %v2280
    %2776 = vmatpush.msra.mxu0 %v2278
    %2777 = vmatpush.msra.mxu0 %v2276
    %2778 = vmatpush.msra.mxu0 %v2274
    %2779 = vmatpush.msra.mxu0 %v2272
    %2780 = vmatpush.msra.mxu0 %v2270
    %2781 = vmatpush.msra.mxu0 %v2268
    %2782 = vmatpush.msra.mxu0 %v2266
    %2783 = vmatpush.msra.mxu0 %v2264
    %2784 = vmatmul.f32.gmra.mxu0 %v2740
    %v2785 = vpop.f32.mrf.mxu0
    %v2786 = vadd.f32 0.0, %v2785
    %2787 = vdwg.mxu0
    %2788 = vmatpush.msra.mxu0 %v2326
    %2789 = vmatpush.msra.mxu0 %v2324
    %2790 = vmatpush.msra.mxu0 %v2322
    %2791 = vmatpush.msra.mxu0 %v2320
    %2792 = vmatpush.msra.mxu0 %v2318
    %2793 = vmatpush.msra.mxu0 %v2316
    %2794 = vmatpush.msra.mxu0 %v2314
    %2795 = vmatpush.msra.mxu0 %v2312
    %2796 = vmatpush.msra.mxu0 %v2310
    %2797 = vmatpush.msra.mxu0 %v2308
    %2798 = vmatpush.msra.mxu0 %v2306
    %2799 = vmatpush.msra.mxu0 %v2304
    %2800 = vmatpush.msra.mxu0 %v2302
    %2801 = vmatpush.msra.mxu0 %v2300
    %2802 = vmatpush.msra.mxu0 %v2298
    %2803 = vmatpush.msra.mxu0 %v2296
    %2804 = vmatmul.f32.gmra.mxu0 %v2741
    %v2805 = vpop.f32.mrf.mxu0
    %v2806 = vadd.f32 %v2786, %v2805
    %2807 = vdwg.mxu0
    %2808 = vmatpush.msra.mxu0 %v2358
    %2809 = vmatpush.msra.mxu0 %v2356
    %2810 = vmatpush.msra.mxu0 %v2354
    %2811 = vmatpush.msra.mxu0 %v2352
    %2812 = vmatpush.msra.mxu0 %v2350
    %2813 = vmatpush.msra.mxu0 %v2348
    %2814 = vmatpush.msra.mxu0 %v2346
    %2815 = vmatpush.msra.mxu0 %v2344
    %2816 = vmatpush.msra.mxu0 %v2342
    %2817 = vmatpush.msra.mxu0 %v2340
    %2818 = vmatpush.msra.mxu0 %v2338
    %2819 = vmatpush.msra.mxu0 %v2336
    %2820 = vmatpush.msra.mxu0 %v2334
    %2821 = vmatpush.msra.mxu0 %v2332
    %2822 = vmatpush.msra.mxu0 %v2330
    %2823 = vmatpush.msra.mxu0 %v2328
    %2824 = vmatmul.f32.gmra.mxu0 %v2742
    %v2825 = vpop.f32.mrf.mxu0
    %v2826 = vadd.f32 %v2806, %v2825
    %2827 = vdwg.mxu0
    %2828 = vmatpush.msra.mxu0 %v2390
    %2829 = vmatpush.msra.mxu0 %v2388
    %2830 = vmatpush.msra.mxu0 %v2386
    %2831 = vmatpush.msra.mxu0 %v2384
    %2832 = vmatpush.msra.mxu0 %v2382
    %2833 = vmatpush.msra.mxu0 %v2380
    %2834 = vmatpush.msra.mxu0 %v2378
    %2835 = vmatpush.msra.mxu0 %v2376
    %2836 = vmatpush.msra.mxu0 %v2374
    %2837 = vmatpush.msra.mxu0 %v2372
    %2838 = vmatpush.msra.mxu0 %v2370
    %2839 = vmatpush.msra.mxu0 %v2368
    %2840 = vmatpush.msra.mxu0 %v2366
    %2841 = vmatpush.msra.mxu0 %v2364
    %2842 = vmatpush.msra.mxu0 %v2362
    %2843 = vmatpush.msra.mxu0 %v2360
    %2844 = vmatmul.f32.gmra.mxu0 %v2743
    %v2845 = vpop.f32.mrf.mxu0
    %v2846 = vadd.f32 %v2826, %v2845
    %2847 = vdwg.mxu0
    %2848 = vmatpush.msra.mxu0 %v2422
    %2849 = vmatpush.msra.mxu0 %v2420
    %2850 = vmatpush.msra.mxu0 %v2418
    %2851 = vmatpush.msra.mxu0 %v2416
    %2852 = vmatpush.msra.mxu0 %v2414
    %2853 = vmatpush.msra.mxu0 %v2412
    %2854 = vmatpush.msra.mxu0 %v2410
    %2855 = vmatpush.msra.mxu0 %v2408
    %2856 = vmatpush.msra.mxu0 %v2406
    %2857 = vmatpush.msra.mxu0 %v2404
    %2858 = vmatpush.msra.mxu0 %v2402
    %2859 = vmatpush.msra.mxu0 %v2400
    %2860 = vmatpush.msra.mxu0 %v2398
    %2861 = vmatpush.msra.mxu0 %v2396
    %2862 = vmatpush.msra.mxu0 %v2394
    %2863 = vmatpush.msra.mxu0 %v2392
    %2864 = vmatmul.f32.gmra.mxu0 %v2744
    %v2865 = vpop.f32.mrf.mxu0
    %v2866 = vadd.f32 %v2846, %v2865
    %2867 = vdwg.mxu0
    %2868 = vmatpush.msra.mxu0 %v2454
    %2869 = vmatpush.msra.mxu0 %v2452
    %2870 = vmatpush.msra.mxu0 %v2450
    %2871 = vmatpush.msra.mxu0 %v2448
    %2872 = vmatpush.msra.mxu0 %v2446
    %2873 = vmatpush.msra.mxu0 %v2444
    %2874 = vmatpush.msra.mxu0 %v2442
    %2875 = vmatpush.msra.mxu0 %v2440
    %2876 = vmatpush.msra.mxu0 %v2438
    %2877 = vmatpush.msra.mxu0 %v2436
    %2878 = vmatpush.msra.mxu0 %v2434
    %2879 = vmatpush.msra.mxu0 %v2432
    %2880 = vmatpush.msra.mxu0 %v2430
    %2881 = vmatpush.msra.mxu0 %v2428
    %2882 = vmatpush.msra.mxu0 %v2426
    %2883 = vmatpush.msra.mxu0 %v2424
    %2884 = vmatmul.f32.gmra.mxu0 %v2745
    %v2885 = vpop.f32.mrf.mxu0
    %v2886 = vadd.f32 %v2866, %v2885
    %2887 = vdwg.mxu0
    %2888 = vmatpush.msra.mxu0 %v2486
    %2889 = vmatpush.msra.mxu0 %v2484
    %2890 = vmatpush.msra.mxu0 %v2482
    %2891 = vmatpush.msra.mxu0 %v2480
    %2892 = vmatpush.msra.mxu0 %v2478
    %2893 = vmatpush.msra.mxu0 %v2476
    %2894 = vmatpush.msra.mxu0 %v2474
    %2895 = vmatpush.msra.mxu0 %v2472
    %2896 = vmatpush.msra.mxu0 %v2470
    %2897 = vmatpush.msra.mxu0 %v2468
    %2898 = vmatpush.msra.mxu0 %v2466
    %2899 = vmatpush.msra.mxu0 %v2464
    %2900 = vmatpush.msra.mxu0 %v2462
    %2901 = vmatpush.msra.mxu0 %v2460
    %2902 = vmatpush.msra.mxu0 %v2458
    %2903 = vmatpush.msra.mxu0 %v2456
    %2904 = vmatmul.f32.gmra.mxu0 %v2746
    %v2905 = vpop.f32.mrf.mxu0
    %v2906 = vadd.f32 %v2886, %v2905
    %2907 = vdwg.mxu0
    %2908 = vmatpush.msra.mxu0 %v2518
    %2909 = vmatpush.msra.mxu0 %v2516
    %2910 = vmatpush.msra.mxu0 %v2514
    %2911 = vmatpush.msra.mxu0 %v2512
    %2912 = vmatpush.msra.mxu0 %v2510
    %2913 = vmatpush.msra.mxu0 %v2508
    %2914 = vmatpush.msra.mxu0 %v2506
    %2915 = vmatpush.msra.mxu0 %v2504
    %2916 = vmatpush.msra.mxu0 %v2502
    %2917 = vmatpush.msra.mxu0 %v2500
    %2918 = vmatpush.msra.mxu0 %v2498
    %2919 = vmatpush.msra.mxu0 %v2496
    %2920 = vmatpush.msra.mxu0 %v2494
    %2921 = vmatpush.msra.mxu0 %v2492
    %2922 = vmatpush.msra.mxu0 %v2490
    %2923 = vmatpush.msra.mxu0 %v2488
    %2924 = vmatmul.f32.gmra.mxu0 %v2747
    %v2925 = vpop.f32.mrf.mxu0
    %v2926 = vadd.f32 %v2906, %v2925
    %2927 = vdwg.mxu0
    %2928 = vmatpush.msra.mxu0 %v2550
    %2929 = vmatpush.msra.mxu0 %v2548
    %2930 = vmatpush.msra.mxu0 %v2546
    %2931 = vmatpush.msra.mxu0 %v2544
    %2932 = vmatpush.msra.mxu0 %v2542
    %2933 = vmatpush.msra.mxu0 %v2540
    %2934 = vmatpush.msra.mxu0 %v2538
    %2935 = vmatpush.msra.mxu0 %v2536
    %2936 = vmatpush.msra.mxu0 %v2534
    %2937 = vmatpush.msra.mxu0 %v2532
    %2938 = vmatpush.msra.mxu0 %v2530
    %2939 = vmatpush.msra.mxu0 %v2528
    %2940 = vmatpush.msra.mxu0 %v2526
    %2941 = vmatpush.msra.mxu0 %v2524
    %2942 = vmatpush.msra.mxu0 %v2522
    %2943 = vmatpush.msra.mxu0 %v2520
    %2944 = vmatmul.f32.gmra.mxu0 %v2748
    %v2945 = vpop.f32.mrf.mxu0
    %v2946 = vadd.f32 %v2926, %v2945
    %2947 = vdwg.mxu0
    %2948 = vmatpush.msra.mxu0 %v2582
    %2949 = vmatpush.msra.mxu0 %v2580
    %2950 = vmatpush.msra.mxu0 %v2578
    %2951 = vmatpush.msra.mxu0 %v2576
    %2952 = vmatpush.msra.mxu0 %v2574
    %2953 = vmatpush.msra.mxu0 %v2572
    %2954 = vmatpush.msra.mxu0 %v2570
    %2955 = vmatpush.msra.mxu0 %v2568
    %2956 = vmatpush.msra.mxu0 %v2566
    %2957 = vmatpush.msra.mxu0 %v2564
    %2958 = vmatpush.msra.mxu0 %v2562
    %2959 = vmatpush.msra.mxu0 %v2560
    %2960 = vmatpush.msra.mxu0 %v2558
    %2961 = vmatpush.msra.mxu0 %v2556
    %2962 = vmatpush.msra.mxu0 %v2554
    %2963 = vmatpush.msra.mxu0 %v2552
    %2964 = vmatmul.f32.gmra.mxu0 %v2749
    %v2965 = vpop.f32.mrf.mxu0
    %v2966 = vadd.f32 %v2946, %v2965
    %2967 = vdwg.mxu0
    %2968 = vmatpush.msra.mxu0 %v2614
    %2969 = vmatpush.msra.mxu0 %v2612
    %2970 = vmatpush.msra.mxu0 %v2610
    %2971 = vmatpush.msra.mxu0 %v2608
    %2972 = vmatpush.msra.mxu0 %v2606
    %2973 = vmatpush.msra.mxu0 %v2604
    %2974 = vmatpush.msra.mxu0 %v2602
    %2975 = vmatpush.msra.mxu0 %v2600
    %2976 = vmatpush.msra.mxu0 %v2598
    %2977 = vmatpush.msra.mxu0 %v2596
    %2978 = vmatpush.msra.mxu0 %v2594
    %2979 = vmatpush.msra.mxu0 %v2592
    %2980 = vmatpush.msra.mxu0 %v2590
    %2981 = vmatpush.msra.mxu0 %v2588
    %2982 = vmatpush.msra.mxu0 %v2586
    %2983 = vmatpush.msra.mxu0 %v2584
    %2984 = vmatmul.f32.gmra.mxu0 %v2750
    %v2985 = vpop.f32.mrf.mxu0
    %v2986 = vadd.f32 %v2966, %v2985
    %2987 = vdwg.mxu0
    %2988 = vmatpush.msra.mxu0 %v2646
    %2989 = vmatpush.msra.mxu0 %v2644
    %2990 = vmatpush.msra.mxu0 %v2642
    %2991 = vmatpush.msra.mxu0 %v2640
    %2992 = vmatpush.msra.mxu0 %v2638
    %2993 = vmatpush.msra.mxu0 %v2636
    %2994 = vmatpush.msra.mxu0 %v2634
    %2995 = vmatpush.msra.mxu0 %v2632
    %2996 = vmatpush.msra.mxu0 %v2630
    %2997 = vmatpush.msra.mxu0 %v2628
    %2998 = vmatpush.msra.mxu0 %v2626
    %2999 = vmatpush.msra.mxu0 %v2624
    %3000 = vmatpush.msra.mxu0 %v2622
    %3001 = vmatpush.msra.mxu0 %v2620
    %3002 = vmatpush.msra.mxu0 %v2618
    %3003 = vmatpush.msra.mxu0 %v2616
    %3004 = vmatmul.f32.gmra.mxu0 %v2751
    %v3005 = vpop.f32.mrf.mxu0
    %v3006 = vadd.f32 %v2986, %v3005
    %3007 = vdwg.mxu0
    %3008 = vmatpush.msra.mxu0 %v2678
    %3009 = vmatpush.msra.mxu0 %v2676
    %3010 = vmatpush.msra.mxu0 %v2674
    %3011 = vmatpush.msra.mxu0 %v2672
    %3012 = vmatpush.msra.mxu0 %v2670
    %3013 = vmatpush.msra.mxu0 %v2668
    %3014 = vmatpush.msra.mxu0 %v2666
    %3015 = vmatpush.msra.mxu0 %v2664
    %3016 = vmatpush.msra.mxu0 %v2662
    %3017 = vmatpush.msra.mxu0 %v2660
    %3018 = vmatpush.msra.mxu0 %v2658
    %3019 = vmatpush.msra.mxu0 %v2656
    %3020 = vmatpush.msra.mxu0 %v2654
    %3021 = vmatpush.msra.mxu0 %v2652
    %3022 = vmatpush.msra.mxu0 %v2650
    %3023 = vmatpush.msra.mxu0 %v2648
    %3024 = vmatmul.f32.gmra.mxu0 %v2752
    %v3025 = vpop.f32.mrf.mxu0
    %v3026 = vadd.f32 %v3006, %v3025
    %3027 = vdwg.mxu0
    %3028 = vmatpush.msra.mxu0 %v2710
    %3029 = vmatpush.msra.mxu0 %v2708
    %3030 = vmatpush.msra.mxu0 %v2706
    %3031 = vmatpush.msra.mxu0 %v2704
    %3032 = vmatpush.msra.mxu0 %v2702
    %3033 = vmatpush.msra.mxu0 %v2700
    %3034 = vmatpush.msra.mxu0 %v2698
    %3035 = vmatpush.msra.mxu0 %v2696
    %3036 = vmatpush.msra.mxu0 %v2694
    %3037 = vmatpush.msra.mxu0 %v2692
    %3038 = vmatpush.msra.mxu0 %v2690
    %3039 = vmatpush.msra.mxu0 %v2688
    %3040 = vmatpush.msra.mxu0 %v2686
    %3041 = vmatpush.msra.mxu0 %v2684
    %3042 = vmatpush.msra.mxu0 %v2682
    %3043 = vmatpush.msra.mxu0 %v2680
    %3044 = vmatmul.f32.gmra.mxu0 %v2753
    %v3045 = vpop.f32.mrf.mxu0
    %v3046 = vadd.f32 %v3026, %v3045
    %3047 = vdwg.mxu0
    %3048 = vmatpush.msra.mxu0 %v2295
    %3049 = vmatpush.msra.mxu0 %v2293
    %3050 = vmatpush.msra.mxu0 %v2291
    %3051 = vmatpush.msra.mxu0 %v2289
    %3052 = vmatpush.msra.mxu0 %v2287
    %3053 = vmatpush.msra.mxu0 %v2285
    %3054 = vmatpush.msra.mxu0 %v2283
    %3055 = vmatpush.msra.mxu0 %v2281
    %3056 = vmatpush.msra.mxu0 %v2279
    %3057 = vmatpush.msra.mxu0 %v2277
    %3058 = vmatpush.msra.mxu0 %v2275
    %3059 = vmatpush.msra.mxu0 %v2273
    %3060 = vmatpush.msra.mxu0 %v2271
    %3061 = vmatpush.msra.mxu0 %v2269
    %3062 = vmatpush.msra.mxu0 %v2267
    %3063 = vmatpush.msra.mxu0 %v2265
    %3064 = vmatmul.f32.gmra.mxu0 %v2740
    %v3065 = vpop.f32.mrf.mxu0
    %v3066 = vadd.f32 0.0, %v3065
    %3067 = vdwg.mxu0
    %3068 = vmatpush.msra.mxu0 %v2327
    %3069 = vmatpush.msra.mxu0 %v2325
    %3070 = vmatpush.msra.mxu0 %v2323
    %3071 = vmatpush.msra.mxu0 %v2321
    %3072 = vmatpush.msra.mxu0 %v2319
    %3073 = vmatpush.msra.mxu0 %v2317
    %3074 = vmatpush.msra.mxu0 %v2315
    %3075 = vmatpush.msra.mxu0 %v2313
    %3076 = vmatpush.msra.mxu0 %v2311
    %3077 = vmatpush.msra.mxu0 %v2309
    %3078 = vmatpush.msra.mxu0 %v2307
    %3079 = vmatpush.msra.mxu0 %v2305
    %3080 = vmatpush.msra.mxu0 %v2303
    %3081 = vmatpush.msra.mxu0 %v2301
    %3082 = vmatpush.msra.mxu0 %v2299
    %3083 = vmatpush.msra.mxu0 %v2297
    %3084 = vmatmul.f32.gmra.mxu0 %v2741
    %v3085 = vpop.f32.mrf.mxu0
    %v3086 = vadd.f32 %v3066, %v3085
    %3087 = vdwg.mxu0
    %3088 = vmatpush.msra.mxu0 %v2359
    %3089 = vmatpush.msra.mxu0 %v2357
    %3090 = vmatpush.msra.mxu0 %v2355
    %3091 = vmatpush.msra.mxu0 %v2353
    %3092 = vmatpush.msra.mxu0 %v2351
    %3093 = vmatpush.msra.mxu0 %v2349
    %3094 = vmatpush.msra.mxu0 %v2347
    %3095 = vmatpush.msra.mxu0 %v2345
    %3096 = vmatpush.msra.mxu0 %v2343
    %3097 = vmatpush.msra.mxu0 %v2341
    %3098 = vmatpush.msra.mxu0 %v2339
    %3099 = vmatpush.msra.mxu0 %v2337
    %3100 = vmatpush.msra.mxu0 %v2335
    %3101 = vmatpush.msra.mxu0 %v2333
    %3102 = vmatpush.msra.mxu0 %v2331
    %3103 = vmatpush.msra.mxu0 %v2329
    %3104 = vmatmul.f32.gmra.mxu0 %v2742
    %v3105 = vpop.f32.mrf.mxu0
    %v3106 = vadd.f32 %v3086, %v3105
    %3107 = vdwg.mxu0
    %3108 = vmatpush.msra.mxu0 %v2391
    %3109 = vmatpush.msra.mxu0 %v2389
    %3110 = vmatpush.msra.mxu0 %v2387
    %3111 = vmatpush.msra.mxu0 %v2385
    %3112 = vmatpush.msra.mxu0 %v2383
    %3113 = vmatpush.msra.mxu0 %v2381
    %3114 = vmatpush.msra.mxu0 %v2379
    %3115 = vmatpush.msra.mxu0 %v2377
    %3116 = vmatpush.msra.mxu0 %v2375
    %3117 = vmatpush.msra.mxu0 %v2373
    %3118 = vmatpush.msra.mxu0 %v2371
    %3119 = vmatpush.msra.mxu0 %v2369
    %3120 = vmatpush.msra.mxu0 %v2367
    %3121 = vmatpush.msra.mxu0 %v2365
    %3122 = vmatpush.msra.mxu0 %v2363
    %3123 = vmatpush.msra.mxu0 %v2361
    %3124 = vmatmul.f32.gmra.mxu0 %v2743
    %v3125 = vpop.f32.mrf.mxu0
    %v3126 = vadd.f32 %v3106, %v3125
    %3127 = vdwg.mxu0
    %3128 = vmatpush.msra.mxu0 %v2423
    %3129 = vmatpush.msra.mxu0 %v2421
    %3130 = vmatpush.msra.mxu0 %v2419
    %3131 = vmatpush.msra.mxu0 %v2417
    %3132 = vmatpush.msra.mxu0 %v2415
    %3133 = vmatpush.msra.mxu0 %v2413
    %3134 = vmatpush.msra.mxu0 %v2411
    %3135 = vmatpush.msra.mxu0 %v2409
    %3136 = vmatpush.msra.mxu0 %v2407
    %3137 = vmatpush.msra.mxu0 %v2405
    %3138 = vmatpush.msra.mxu0 %v2403
    %3139 = vmatpush.msra.mxu0 %v2401
    %3140 = vmatpush.msra.mxu0 %v2399
    %3141 = vmatpush.msra.mxu0 %v2397
    %3142 = vmatpush.msra.mxu0 %v2395
    %3143 = vmatpush.msra.mxu0 %v2393
    %3144 = vmatmul.f32.gmra.mxu0 %v2744
    %v3145 = vpop.f32.mrf.mxu0
    %v3146 = vadd.f32 %v3126, %v3145
    %3147 = vdwg.mxu0
    %3148 = vmatpush.msra.mxu0 %v2455
    %3149 = vmatpush.msra.mxu0 %v2453
    %3150 = vmatpush.msra.mxu0 %v2451
    %3151 = vmatpush.msra.mxu0 %v2449
    %3152 = vmatpush.msra.mxu0 %v2447
    %3153 = vmatpush.msra.mxu0 %v2445
    %3154 = vmatpush.msra.mxu0 %v2443
    %3155 = vmatpush.msra.mxu0 %v2441
    %3156 = vmatpush.msra.mxu0 %v2439
    %3157 = vmatpush.msra.mxu0 %v2437
    %3158 = vmatpush.msra.mxu0 %v2435
    %3159 = vmatpush.msra.mxu0 %v2433
    %3160 = vmatpush.msra.mxu0 %v2431
    %3161 = vmatpush.msra.mxu0 %v2429
    %3162 = vmatpush.msra.mxu0 %v2427
    %3163 = vmatpush.msra.mxu0 %v2425
    %3164 = vmatmul.f32.gmra.mxu0 %v2745
    %v3165 = vpop.f32.mrf.mxu0
    %v3166 = vadd.f32 %v3146, %v3165
    %3167 = vdwg.mxu0
    %3168 = vmatpush.msra.mxu0 %v2487
    %3169 = vmatpush.msra.mxu0 %v2485
    %3170 = vmatpush.msra.mxu0 %v2483
    %3171 = vmatpush.msra.mxu0 %v2481
    %3172 = vmatpush.msra.mxu0 %v2479
    %3173 = vmatpush.msra.mxu0 %v2477
    %3174 = vmatpush.msra.mxu0 %v2475
    %3175 = vmatpush.msra.mxu0 %v2473
    %3176 = vmatpush.msra.mxu0 %v2471
    %3177 = vmatpush.msra.mxu0 %v2469
    %3178 = vmatpush.msra.mxu0 %v2467
    %3179 = vmatpush.msra.mxu0 %v2465
    %3180 = vmatpush.msra.mxu0 %v2463
    %3181 = vmatpush.msra.mxu0 %v2461
    %3182 = vmatpush.msra.mxu0 %v2459
    %3183 = vmatpush.msra.mxu0 %v2457
    %3184 = vmatmul.f32.gmra.mxu0 %v2746
    %v3185 = vpop.f32.mrf.mxu0
    %v3186 = vadd.f32 %v3166, %v3185
    %3187 = vdwg.mxu0
    %3188 = vmatpush.msra.mxu0 %v2519
    %3189 = vmatpush.msra.mxu0 %v2517
    %3190 = vmatpush.msra.mxu0 %v2515
    %3191 = vmatpush.msra.mxu0 %v2513
    %3192 = vmatpush.msra.mxu0 %v2511
    %3193 = vmatpush.msra.mxu0 %v2509
    %3194 = vmatpush.msra.mxu0 %v2507
    %3195 = vmatpush.msra.mxu0 %v2505
    %3196 = vmatpush.msra.mxu0 %v2503
    %3197 = vmatpush.msra.mxu0 %v2501
    %3198 = vmatpush.msra.mxu0 %v2499
    %3199 = vmatpush.msra.mxu0 %v2497
    %3200 = vmatpush.msra.mxu0 %v2495
    %3201 = vmatpush.msra.mxu0 %v2493
    %3202 = vmatpush.msra.mxu0 %v2491
    %3203 = vmatpush.msra.mxu0 %v2489
    %3204 = vmatmul.f32.gmra.mxu0 %v2747
    %v3205 = vpop.f32.mrf.mxu0
    %v3206 = vadd.f32 %v3186, %v3205
    %3207 = vdwg.mxu0
    %3208 = vmatpush.msra.mxu0 %v2551
    %3209 = vmatpush.msra.mxu0 %v2549
    %3210 = vmatpush.msra.mxu0 %v2547
    %3211 = vmatpush.msra.mxu0 %v2545
    %3212 = vmatpush.msra.mxu0 %v2543
    %3213 = vmatpush.msra.mxu0 %v2541
    %3214 = vmatpush.msra.mxu0 %v2539
    %3215 = vmatpush.msra.mxu0 %v2537
    %3216 = vmatpush.msra.mxu0 %v2535
    %3217 = vmatpush.msra.mxu0 %v2533
    %3218 = vmatpush.msra.mxu0 %v2531
    %3219 = vmatpush.msra.mxu0 %v2529
    %3220 = vmatpush.msra.mxu0 %v2527
    %3221 = vmatpush.msra.mxu0 %v2525
    %3222 = vmatpush.msra.mxu0 %v2523
    %3223 = vmatpush.msra.mxu0 %v2521
    %3224 = vmatmul.f32.gmra.mxu0 %v2748
    %v3225 = vpop.f32.mrf.mxu0
    %v3226 = vadd.f32 %v3206, %v3225
    %3227 = vdwg.mxu0
    %3228 = vmatpush.msra.mxu0 %v2583
    %3229 = vmatpush.msra.mxu0 %v2581
    %3230 = vmatpush.msra.mxu0 %v2579
    %3231 = vmatpush.msra.mxu0 %v2577
    %3232 = vmatpush.msra.mxu0 %v2575
    %3233 = vmatpush.msra.mxu0 %v2573
    %3234 = vmatpush.msra.mxu0 %v2571
    %3235 = vmatpush.msra.mxu0 %v2569
    %3236 = vmatpush.msra.mxu0 %v2567
    %3237 = vmatpush.msra.mxu0 %v2565
    %3238 = vmatpush.msra.mxu0 %v2563
    %3239 = vmatpush.msra.mxu0 %v2561
    %3240 = vmatpush.msra.mxu0 %v2559
    %3241 = vmatpush.msra.mxu0 %v2557
    %3242 = vmatpush.msra.mxu0 %v2555
    %3243 = vmatpush.msra.mxu0 %v2553
    %3244 = vmatmul.f32.gmra.mxu0 %v2749
    %v3245 = vpop.f32.mrf.mxu0
    %v3246 = vadd.f32 %v3226, %v3245
    %3247 = vdwg.mxu0
    %3248 = vmatpush.msra.mxu0 %v2615
    %3249 = vmatpush.msra.mxu0 %v2613
    %3250 = vmatpush.msra.mxu0 %v2611
    %3251 = vmatpush.msra.mxu0 %v2609
    %3252 = vmatpush.msra.mxu0 %v2607
    %3253 = vmatpush.msra.mxu0 %v2605
    %3254 = vmatpush.msra.mxu0 %v2603
    %3255 = vmatpush.msra.mxu0 %v2601
    %3256 = vmatpush.msra.mxu0 %v2599
    %3257 = vmatpush.msra.mxu0 %v2597
    %3258 = vmatpush.msra.mxu0 %v2595
    %3259 = vmatpush.msra.mxu0 %v2593
    %3260 = vmatpush.msra.mxu0 %v2591
    %3261 = vmatpush.msra.mxu0 %v2589
    %3262 = vmatpush.msra.mxu0 %v2587
    %3263 = vmatpush.msra.mxu0 %v2585
    %3264 = vmatmul.f32.gmra.mxu0 %v2750
    %v3265 = vpop.f32.mrf.mxu0
    %v3266 = vadd.f32 %v3246, %v3265
    %3267 = vdwg.mxu0
    %3268 = vmatpush.msra.mxu0 %v2647
    %3269 = vmatpush.msra.mxu0 %v2645
    %3270 = vmatpush.msra.mxu0 %v2643
    %3271 = vmatpush.msra.mxu0 %v2641
    %3272 = vmatpush.msra.mxu0 %v2639
    %3273 = vmatpush.msra.mxu0 %v2637
    %3274 = vmatpush.msra.mxu0 %v2635
    %3275 = vmatpush.msra.mxu0 %v2633
    %3276 = vmatpush.msra.mxu0 %v2631
    %3277 = vmatpush.msra.mxu0 %v2629
    %3278 = vmatpush.msra.mxu0 %v2627
    %3279 = vmatpush.msra.mxu0 %v2625
    %3280 = vmatpush.msra.mxu0 %v2623
    %3281 = vmatpush.msra.mxu0 %v2621
    %3282 = vmatpush.msra.mxu0 %v2619
    %3283 = vmatpush.msra.mxu0 %v2617
    %3284 = vmatmul.f32.gmra.mxu0 %v2751
    %v3285 = vpop.f32.mrf.mxu0
    %v3286 = vadd.f32 %v3266, %v3285
    %3287 = vdwg.mxu0
    %3288 = vmatpush.msra.mxu0 %v2679
    %3289 = vmatpush.msra.mxu0 %v2677
    %3290 = vmatpush.msra.mxu0 %v2675
    %3291 = vmatpush.msra.mxu0 %v2673
    %3292 = vmatpush.msra.mxu0 %v2671
    %3293 = vmatpush.msra.mxu0 %v2669
    %3294 = vmatpush.msra.mxu0 %v2667
    %3295 = vmatpush.msra.mxu0 %v2665
    %3296 = vmatpush.msra.mxu0 %v2663
    %3297 = vmatpush.msra.mxu0 %v2661
    %3298 = vmatpush.msra.mxu0 %v2659
    %3299 = vmatpush.msra.mxu0 %v2657
    %3300 = vmatpush.msra.mxu0 %v2655
    %3301 = vmatpush.msra.mxu0 %v2653
    %3302 = vmatpush.msra.mxu0 %v2651
    %3303 = vmatpush.msra.mxu0 %v2649
    %3304 = vmatmul.f32.gmra.mxu0 %v2752
    %v3305 = vpop.f32.mrf.mxu0
    %v3306 = vadd.f32 %v3286, %v3305
    %3307 = vdwg.mxu0
    %3308 = vmatpush.msra.mxu0 %v2711
    %3309 = vmatpush.msra.mxu0 %v2709
    %3310 = vmatpush.msra.mxu0 %v2707
    %3311 = vmatpush.msra.mxu0 %v2705
    %3312 = vmatpush.msra.mxu0 %v2703
    %3313 = vmatpush.msra.mxu0 %v2701
    %3314 = vmatpush.msra.mxu0 %v2699
    %3315 = vmatpush.msra.mxu0 %v2697
    %3316 = vmatpush.msra.mxu0 %v2695
    %3317 = vmatpush.msra.mxu0 %v2693
    %3318 = vmatpush.msra.mxu0 %v2691
    %3319 = vmatpush.msra.mxu0 %v2689
    %3320 = vmatpush.msra.mxu0 %v2687
    %3321 = vmatpush.msra.mxu0 %v2685
    %3322 = vmatpush.msra.mxu0 %v2683
    %3323 = vmatpush.msra.mxu0 %v2681
    %3324 = vmatmul.f32.gmra.mxu0 %v2753
    %v3325 = vpop.f32.mrf.mxu0
    %v3326 = vadd.f32 %v3306, %v3325
    %3327 = vdwg.mxu0
    %v3328 = vld [vmem:[#allocation7] sm:$0x3]
    %v3330 = vperm.slane %v3328, 0
    %v3331 = vperm.slane %v3328, 1
    %v3334 = vmul.f32 %v1432, %v3330
    %v3335 = vmul.f32 %v1432, %v3331
    %v3336 = vsub.f32 %v3046, %v3334
    %v3337 = vsub.f32 %v3326, %v3335
    %v3338 = vmul.f32 %v1532, %v3336
    %v3339 = vmul.f32 %v1532, %v3337
    %v3340 = vld [vmem:[#allocation16] sm:$0xff]
    %v3341 = vld [vmem:[#allocation16 + $0x8] sm:$0xff]
    %v3342 = vld [vmem:[#allocation16 + $0x10] sm:$0xff]
    %v3343 = vld [vmem:[#allocation16 + $0x18] sm:$0xff]
    %v3344 = vld [vmem:[#allocation16 + $0x20] sm:$0xff]
    %v3345 = vld [vmem:[#allocation16 + $0x28] sm:$0xff]
    %v3346 = vld [vmem:[#allocation16 + $0x30] sm:$0xff]
    %v3347 = vld [vmem:[#allocation16 + $0x38] sm:$0xff]
    %v3348 = vld [vmem:[#allocation16 + $0x40] sm:$0xff]
    %v3349 = vld [vmem:[#allocation16 + $0x48] sm:$0xff]
    %v3350 = vld [vmem:[#allocation16 + $0x50] sm:$0xff]
    %v3351 = vld [vmem:[#allocation16 + $0x58] sm:$0xff]
    %v3352 = vld [vmem:[#allocation16 + $0x60] sm:$0xff]
    %v3353 = vld [vmem:[#allocation16 + $0x68] sm:$0xff]
    %v3354 = vld [vmem:[#allocation16 + $0x70] sm:$0xff]
    %v3355 = vld [vmem:[#allocation16 + $0x78] sm:$0xff]
    %v3356 = vld [vmem:[#allocation16 + $0x80] sm:$0xff]
    %v3357 = vld [vmem:[#allocation16 + $0x88] sm:$0xff]
    %v3358 = vld [vmem:[#allocation16 + $0x90] sm:$0xff]
    %v3359 = vld [vmem:[#allocation16 + $0x98] sm:$0xff]
    %v3360 = vld [vmem:[#allocation16 + $0xa0] sm:$0xff]
    %v3361 = vld [vmem:[#allocation16 + $0xa8] sm:$0xff]
    %v3362 = vld [vmem:[#allocation16 + $0xb0] sm:$0xff]
    %v3363 = vld [vmem:[#allocation16 + $0xb8] sm:$0xff]
    %v3364 = vld [vmem:[#allocation16 + $0xc0] sm:$0xff]
    %v3365 = vld [vmem:[#allocation16 + $0xc8] sm:$0xff]
    %v3366 = vld [vmem:[#allocation16 + $0xd0] sm:$0xff]
    %v3367 = vld [vmem:[#allocation16 + $0xd8] sm:$0xff]
    %v3368 = vld [vmem:[#allocation16 + $0xe0] sm:$0xff]
    %v3369 = vld [vmem:[#allocation16 + $0xe8] sm:$0xff]
    %v3370 = vld [vmem:[#allocation16 + $0xf0] sm:$0xff]
    %v3371 = vld [vmem:[#allocation16 + $0xf8] sm:$0xff]
    %3372 = vmatpush.msra.mxu0 %v3370
    %3373 = vmatpush.msra.mxu0 %v3368
    %3374 = vmatpush.msra.mxu0 %v3366
    %3375 = vmatpush.msra.mxu0 %v3364
    %3376 = vmatpush.msra.mxu0 %v3362
    %3377 = vmatpush.msra.mxu0 %v3360
    %3378 = vmatpush.msra.mxu0 %v3358
    %3379 = vmatpush.msra.mxu0 %v3356
    %3380 = vmatpush.msra.mxu0 %v3354
    %3381 = vmatpush.msra.mxu0 %v3352
    %3382 = vmatpush.msra.mxu0 %v3350
    %3383 = vmatpush.msra.mxu0 %v3348
    %3384 = vmatpush.msra.mxu0 %v3346
    %3385 = vmatpush.msra.mxu0 %v3344
    %3386 = vmatpush.msra.mxu0 %v3342
    %3387 = vmatpush.msra.mxu0 %v3340
    %3388 = vmatmul.f32.gmra.mxu0 %v2263
    %v3389 = vpop.f32.mrf.mxu0
    %v3390 = vadd.f32 0.0, %v3389
    %3391 = vdwg.mxu0
    %3392 = vmatpush.msra.mxu0 %v3371
    %3393 = vmatpush.msra.mxu0 %v3369
    %3394 = vmatpush.msra.mxu0 %v3367
    %3395 = vmatpush.msra.mxu0 %v3365
    %3396 = vmatpush.msra.mxu0 %v3363
    %3397 = vmatpush.msra.mxu0 %v3361
    %3398 = vmatpush.msra.mxu0 %v3359
    %3399 = vmatpush.msra.mxu0 %v3357
    %3400 = vmatpush.msra.mxu0 %v3355
    %3401 = vmatpush.msra.mxu0 %v3353
    %3402 = vmatpush.msra.mxu0 %v3351
    %3403 = vmatpush.msra.mxu0 %v3349
    %3404 = vmatpush.msra.mxu0 %v3347
    %3405 = vmatpush.msra.mxu0 %v3345
    %3406 = vmatpush.msra.mxu0 %v3343
    %3407 = vmatpush.msra.mxu0 %v3341
    %3408 = vmatmul.f32.gmra.mxu0 %v2263
    %v3409 = vpop.f32.mrf.mxu0
    %v3410 = vadd.f32 0.0, %v3409
    %3411 = vdwg.mxu0
    %v3412 = vadd.f32 %v3338, %v3390
    %v3413 = vadd.f32 %v3339, %v3410
    %v3414 = vld [vmem:[#allocation17] sm:$0x3]
    %v3416 = vperm.slane %v3414, 0
    %v3417 = vperm.slane %v3414, 1
    %v3420 = vadd.f32 %v3412, %v3416
    %v3421 = vadd.f32 %v3413, %v3417
    %v3422 = vmax.f32 %v3420, 0.0
    %v3423 = vmax.f32 %v3421, 0.0
    %v3424 = vld [vmem:[%s11] sm:$0xff]
    %v3425 = vld [vmem:[%s11 + $0x8] sm:$0xff]
    %v3426 = vld [vmem:[%s11 + $0x10] sm:$0xff]
    %v3427 = vld [vmem:[%s11 + $0x18] sm:$0xff]
    %v3428 = vld [vmem:[%s11 + $0x20] sm:$0xff]
    %v3429 = vld [vmem:[%s11 + $0x28] sm:$0xff]
    %v3430 = vld [vmem:[%s11 + $0x30] sm:$0xff]
    %v3431 = vld [vmem:[%s11 + $0x38] sm:$0xff]
    %v3432 = vld [vmem:[%s11 + $0x40] sm:$0xff]
    %v3433 = vld [vmem:[%s11 + $0x48] sm:$0xff]
    %v3434 = vld [vmem:[%s11 + $0x50] sm:$0xff]
    %v3435 = vld [vmem:[%s11 + $0x58] sm:$0xff]
    %v3436 = vld [vmem:[%s11 + $0x60] sm:$0xff]
    %v3437 = vld [vmem:[%s11 + $0x68] sm:$0xff]
    %v3438 = vld [vmem:[%s11 + $0x70] sm:$0xff]
    %v3439 = vld [vmem:[%s11 + $0x78] sm:$0xff]
    %v3440 = vld [vmem:[%s11 + $0x80] sm:$0xff]
    %v3441 = vld [vmem:[%s11 + $0x88] sm:$0xff]
    %v3442 = vld [vmem:[%s11 + $0x90] sm:$0xff]
    %v3443 = vld [vmem:[%s11 + $0x98] sm:$0xff]
    %v3444 = vld [vmem:[%s11 + $0xa0] sm:$0xff]
    %v3445 = vld [vmem:[%s11 + $0xa8] sm:$0xff]
    %v3446 = vld [vmem:[%s11 + $0xb0] sm:$0xff]
    %v3447 = vld [vmem:[%s11 + $0xb8] sm:$0xff]
    %v3448 = vld [vmem:[%s11 + $0xc0] sm:$0xff]
    %v3449 = vld [vmem:[%s11 + $0xc8] sm:$0xff]
    %v3450 = vld [vmem:[%s11 + $0xd0] sm:$0xff]
    %v3451 = vld [vmem:[%s11 + $0xd8] sm:$0xff]
    %v3452 = vld [vmem:[%s11 + $0xe0] sm:$0xff]
    %v3453 = vld [vmem:[%s11 + $0xe8] sm:$0xff]
    %v3454 = vld [vmem:[%s11 + $0xf0] sm:$0xff]
    %v3455 = vld [vmem:[%s11 + $0xf8] sm:$0xff]
    %v3456 = vld [vmem:[#allocation19] sm:$0x1]
    %v3458 = vperm.slane %v3456, 0
    %3460 = vmatpush.msra.mxu0 %v3439
    %3461 = vmatpush.msra.mxu0 %v3438
    %3462 = vmatpush.msra.mxu0 %v3437
    %3463 = vmatpush.msra.mxu0 %v3436
    %3464 = vmatpush.msra.mxu0 %v3435
    %3465 = vmatpush.msra.mxu0 %v3434
    %3466 = vmatpush.msra.mxu0 %v3433
    %3467 = vmatpush.msra.mxu0 %v3432
    %3468 = vmatpush.msra.mxu0 %v3431
    %3469 = vmatpush.msra.mxu0 %v3430
    %3470 = vmatpush.msra.mxu0 %v3429
    %3471 = vmatpush.msra.mxu0 %v3428
    %3472 = vmatpush.msra.mxu0 %v3427
    %3473 = vmatpush.msra.mxu0 %v3426
    %3474 = vmatpush.msra.mxu0 %v3425
    %3475 = vmatpush.msra.mxu0 %v3424
    %3476 = vmatmul.f32.gmra.mxu0 %v3422
    %v3477 = vpop.f32.mrf.mxu0
    %v3478 = vadd.f32 %v3458, %v3477
    %3479 = vdwg.mxu0
    %3480 = vmatpush.msra.mxu0 %v3455
    %3481 = vmatpush.msra.mxu0 %v3454
    %3482 = vmatpush.msra.mxu0 %v3453
    %3483 = vmatpush.msra.mxu0 %v3452
    %3484 = vmatpush.msra.mxu0 %v3451
    %3485 = vmatpush.msra.mxu0 %v3450
    %3486 = vmatpush.msra.mxu0 %v3449
    %3487 = vmatpush.msra.mxu0 %v3448
    %3488 = vmatpush.msra.mxu0 %v3447
    %3489 = vmatpush.msra.mxu0 %v3446
    %3490 = vmatpush.msra.mxu0 %v3445
    %3491 = vmatpush.msra.mxu0 %v3444
    %3492 = vmatpush.msra.mxu0 %v3443
    %3493 = vmatpush.msra.mxu0 %v3442
    %3494 = vmatpush.msra.mxu0 %v3441
    %3495 = vmatpush.msra.mxu0 %v3440
    %3496 = vmatmul.f32.gmra.mxu0 %v3423
    %v3497 = vpop.f32.mrf.mxu0
    %v3498 = vadd.f32 %v3478, %v3497
    %3499 = vdwg.mxu0
    %v3500 = vmax.f32 %v3498, 0.0
    %v3501 = vld [vmem:[%s13] sm:$0xff]
    %v3502 = vld [vmem:[%s13 + $0x8] sm:$0xff]
    %v3503 = vld [vmem:[%s13 + $0x10] sm:$0xff]
    %v3504 = vld [vmem:[%s13 + $0x18] sm:$0xff]
    %v3505 = vld [vmem:[%s13 + $0x20] sm:$0xff]
    %v3506 = vld [vmem:[%s13 + $0x28] sm:$0xff]
    %v3507 = vld [vmem:[%s13 + $0x30] sm:$0xff]
    %v3508 = vld [vmem:[%s13 + $0x38] sm:$0xff]
    %v3509 = vld [vmem:[#allocation20] sm:$0x1]
    %v3511 = vperm.slane %v3509, 0
    %v3514 = vsel %vm2237, %v3500, 0
    %3516 = vmatpush.msra.mxu0 0.0
    %3517 = vmatpush.msra.mxu0 0.0
    %3518 = vmatpush.msra.mxu0 0.0
    %3519 = vmatpush.msra.mxu0 0.0
    %3520 = vmatpush.msra.mxu0 0.0
    %3521 = vmatpush.msra.mxu0 0.0
    %3522 = vmatpush.msra.mxu0 0.0
    %3523 = vmatpush.msra.mxu0 0.0
    %3524 = vmatpush.msra.mxu0 %v3508
    %3525 = vmatpush.msra.mxu0 %v3507
    %3526 = vmatpush.msra.mxu0 %v3506
    %3527 = vmatpush.msra.mxu0 %v3505
    %3528 = vmatpush.msra.mxu0 %v3504
    %3529 = vmatpush.msra.mxu0 %v3503
    %3530 = vmatpush.msra.mxu0 %v3502
    %3531 = vmatpush.msra.mxu0 %v3501
    %3532 = vmatmul.f32.gmra.mxu0 %v3514
    %v3533 = vpop.f32.mrf.mxu0
    %v3534 = vadd.f32 %v3511, %v3533
    %3535 = vdwg.mxu0
    %vm3536 = vcmask 17408
    %3537 = vst.msk [vmem:[#allocation22] sm:$0x3] %vm3536, %v3534
    // Predicated region
    $region110: #{tpu_custom_call.1} parent=1 // pred_check
      _
    $region111: #{tpu_custom_call.1} parent=1 // pred_check_branch
      %3539 = sbr.rel (0) target = $region113
    $region112: #{tpu_custom_call.1} parent=1 // pred_region
      %3541 = vsyncadd [#allocation4], 0
      %s3543 = sshll.u32 [#allocation22], 4
      %s3544 = int_to_ptr.vmem [resolvable:$true] %s3543
      %s3545 = sshll.u32 %s15, 4
      %s3546 = int_to_ptr.hbm [resolvable:$true] %s3545
      %3548 = dma.vmem_to_hbm [thread:$0]  %s3544, 32, %s3546, [#allocation4]
    $region113: #{tpu_custom_call.1} parent=1 // pred_fallthru
      _
    // Predicated region
    $region114: #{tpu_custom_call.1} parent=1 // pred_check
      _
    $region115: #{tpu_custom_call.1} parent=1 // pred_check_branch
      %3550 = sbr.rel (0) target = $region117
    $region116: #{tpu_custom_call.1} parent=1 // pred_region
      %3552 = dma.done [#allocation4], 32
    $region117: #{tpu_custom_call.1} parent=1 // pred_fallthru
      _
    %3553 = vsyncpa [#allocation3], 1
    %3554 = vsyncpa [#allocation6], 1
    %3555 = vsyncpa [#allocation9], 1
    %3556 = vsyncpa [#allocation12], 1
    %3557 = vsyncpa [#allocation15], 1
    %3558 = vsyncpa [#allocation18], 1
    %3559 = vsyncpa [#allocation21], 1
    %3560 = vsyncpa [#allocation4], 1

</llo_original>
